<compile_context>
chip_gen: v7x
topology: tpu7x:2x2x1
jax: 0.10.0
libtpu: 0.0.40
codegen_flags: <defaults>
</compile_context>

<pallas_src>
import jax
import jax.numpy as jnp
from jax.experimental import pallas as pl
from jax.experimental.pallas import tpu as pltpu


def _round_up(n: int, m: int) -> int:
    return ((n + m - 1) // m) * m


def _device_kind() -> str:
    try:
        return jax.devices()[0].device_kind.lower()
    except Exception:
        return ""


def _is_v7() -> bool:
    kind = _device_kind()
    return ("v7" in kind) or ("7x" in kind)


def _vmem_budget_bytes() -> int:
    """Per-generation VMEM budget (physical capacity minus headroom)."""
    if _is_v7():
        return 56 * 1024 * 1024          # v7x: 64 MiB physical per TC
    kind = _device_kind()
    if ("v5" in kind) or ("v6" in kind):
        return 100 * 1024 * 1024         # v5e / v6e: 128 MiB physical
    return 64 * 1024 * 1024              # unknown generation: conservative


def _default_batch_tile() -> int:
    # Smaller tile on v7x: 64 MiB VMEM and two TCs sharing the batch axis.
    return 256 if _is_v7() else 512


def _choose_h_tile(H, E, C_pad, batch_tile, cbytes, budget) -> int:
    """Largest H tile whose streamed weights + f32 intermediates fit in VMEM."""
    candidates = [H] + [t for t in (1024, 512, 256, 128) if t < H and H % t == 0]
    for t in candidates:
        need = (
            2 * 2 * E * t * cbytes           # wg + wv tiles (double-buffered)
            + 2 * t * C_pad * cbytes         # w2 tile (double-buffered)
            + 3 * batch_tile * t * 4         # g, v, h f32 intermediates
            + 2 * batch_tile * E * 4         # x tile (f32, double-buffered)
            + 3 * batch_tile * C_pad * 4     # out tile + f32 accumulator
        )
        if need <= 0.7 * budget:
            return t
    return candidates[-1]


def _make_kernel(approx_silu: bool):
    """Fused forward: gate/value matmuls -> SwiGLU -> accumulated output matmul."""

    def kernel(x_ref, wg_ref, bg_ref, wv_ref, bv_ref, w2_ref, b2_ref,
               o_ref, acc_ref):
        h_idx = pl.program_id(1)

        @pl.when(h_idx == 0)
        def _():
            acc_ref[...] = jnp.zeros_like(acc_ref)

        # Cast x on the VPU (hidden under the matmuls) instead of in the wrapper.
        x = x_ref[...].astype(wg_ref.dtype)                   # [TB, E]

        # linear1, split into gate/value halves (matches torch chunk order).
        g = jnp.dot(x, wg_ref[...],
                    preferred_element_type=jnp.float32) + bg_ref[...]
        v = jnp.dot(x, wv_ref[...],
                    preferred_element_type=jnp.float32) + bv_ref[...]

        # SwiGLU: silu(gate) * value.  exp + reciprocal both go to the EUP slot.
        e = jnp.exp(-g)
        if approx_silu:
            sig = pl.reciprocal(1.0 + e, approx=True)
        else:
            sig = 1.0 / (1.0 + e)
        h = (g * sig) * v                                      # [TB, H_tile] f32

        # linear2: accumulate this H slice into the f32 accumulator.
        acc_ref[...] += jnp.dot(h.astype(w2_ref.dtype), w2_ref[...],
                                preferred_element_type=jnp.float32)

        @pl.when(h_idx == pl.num_programs(1) - 1)
        def _():
            o_ref[...] = (acc_ref[...] + b2_ref[...]).astype(o_ref.dtype)

    return kernel


def prepare_params(w1, b1, w2, b2, *, compute_dtype=jnp.bfloat16):
    """One-time prep of torch-Linear-layout params.

    w1: [2H, E], b1: [2H], w2: [C, H], b2: [C]  ->
    (wg_t [E,H], bg [1,H], wv_t [E,H], bv [1,H], w2_t [H,Cpad], b2 [1,Cpad], C)
    """
    two_h, _E = w1.shape
    H = two_h // 2
    C = w2.shape[0]
    C_pad = _round_up(max(C, 128), 128)

    wg_t = jnp.transpose(w1[:H, :]).astype(compute_dtype)     # gate   [E, H]
    wv_t = jnp.transpose(w1[H:, :]).astype(compute_dtype)     # value  [E, H]
    bg = b1[:H].reshape(1, H).astype(jnp.float32)
    bv = b1[H:].reshape(1, H).astype(jnp.float32)

    w2_t = jnp.zeros((H, C_pad), dtype=compute_dtype)
    w2_t = w2_t.at[:, :C].set(jnp.transpose(w2).astype(compute_dtype))
    b2_p = jnp.zeros((1, C_pad), dtype=jnp.float32)
    b2_p = b2_p.at[:, :C].set(b2.astype(jnp.float32))

    return wg_t, bg, wv_t, bv, w2_t, b2_p, C


def mlp_classifier_forward(x, wg_t, bg, wv_t, bv, w2_t, b2, num_classes,
                           *, batch_tile=None, h_tile=None, out_dtype=None):
    """x: [B, E]; params as produced by prepare_params. Returns [B, num_classes]."""
    B, E = x.shape
    H = wg_t.shape[1]
    C_pad = w2_t.shape[1]
    compute_dtype = wg_t.dtype
    cbytes = jnp.dtype(compute_dtype).itemsize
    out_dtype = x.dtype if out_dtype is None else out_dtype

    budget = _vmem_budget_bytes()
    if batch_tile is None:
        batch_tile = _default_batch_tile()
    # Keep the tile a multiple of 128 rows, but no larger than needed for B.
    batch_tile = max(128, min(batch_tile, _round_up(B, 128)))

    if h_tile is None:
        h_tile = _choose_h_tile(H, E, C_pad, batch_tile, cbytes, budget)
    h_tile = min(h_tile, H)
    assert H % h_tile == 0 and (h_tile == H or h_tile % 128 == 0), \
        "h_tile must divide H and be a multiple of 128 (or equal H)"

    num_b = pl.cdiv(B, batch_tile)
    num_h = H // h_tile
    grid = (num_b, num_h)

    xbytes = jnp.dtype(x.dtype).itemsize
    obytes = jnp.dtype(out_dtype).itemsize

    # Size the VMEM limit from the actual buffers (+ headroom), capped per gen.
    need = (2 * batch_tile * E * xbytes                 # x tile, double-buffered
            + 2 * 2 * E * h_tile * cbytes               # wg + wv tiles
            + 2 * h_tile * C_pad * cbytes               # w2 tile
            + 2 * 2 * h_tile * 4 + 2 * C_pad * 4        # biases (f32)
            + 2 * batch_tile * C_pad * obytes           # out tile
            + batch_tile * C_pad * 4                    # f32 accumulator scratch
            + 3 * batch_tile * h_tile * 4)              # g, v, h intermediates
    vmem_limit = int(min(budget, max(need + (8 << 20), 32 << 20)))

    cost = pl.CostEstimate(
        flops=2 * B * E * (2 * H) + 2 * B * H * C_pad,
        transcendentals=B * H,
        bytes_accessed=(B * E * xbytes
                        + num_b * (2 * E * H + H * C_pad) * cbytes
                        + (2 * H + C_pad) * 4
                        + B * C_pad * obytes),
    )

    kernel = _make_kernel(approx_silu=(compute_dtype != jnp.float32))

    def run(single_buffer_const):
        def spec(shape, index_map, constant):
            if constant and single_buffer_const:
                # Constant index across the whole grid -> double-buffering is
                # pure VMEM waste; single-buffer it.
                return pl.BlockSpec(shape, index_map,
                                    pipeline_mode=pl.Buffered(1))
            return pl.BlockSpec(shape, index_map)

        w_const = (num_h == 1)   # weight slices constant when H fits one tile
        in_specs = [
            pl.BlockSpec((batch_tile, E), lambda i, h: (i, 0)),     # x tile
            spec((E, h_tile), lambda i, h: (0, h), w_const),        # W1 gate^T
            spec((1, h_tile), lambda i, h: (0, h), w_const),        # b1 gate
            spec((E, h_tile), lambda i, h: (0, h), w_const),        # W1 value^T
            spec((1, h_tile), lambda i, h: (0, h), w_const),        # b1 value
            spec((h_tile, C_pad), lambda i, h: (h, 0), w_const),    # W2^T slice
            spec((1, C_pad), lambda i, h: (0, 0), True),            # b2
        ]
        return pl.pallas_call(
            kernel,
            out_shape=jax.ShapeDtypeStruct((B, C_pad), out_dtype),
            grid_spec=pltpu.PrefetchScalarGridSpec(
                num_scalar_prefetch=0,
                grid=grid,
                in_specs=in_specs,
                out_specs=pl.BlockSpec((batch_tile, C_pad), lambda i, h: (i, 0)),
                scratch_shapes=[pltpu.VMEM((batch_tile, C_pad), jnp.float32)],
            ),
            compiler_params=pltpu.CompilerParams(
                dimension_semantics=("parallel", "arbitrary"),
                vmem_limit_bytes=vmem_limit,
            ),
            cost_estimate=cost,
        )(x, wg_t, bg, wv_t, bv, w2_t, b2)

    try:
        out = run(True)
    except Exception:
        # pipeline_mode / pl.Buffered(1) unsupported on this JAX build; the
        # fallback is identical except constant weights are double-buffered.
        out = run(False)

    # Ragged last batch block rows and padded classes are sliced off here.
    return out[:B, :num_classes]


def init_params(key, embedding_dimensions, hidden_ratio, num_classes):
    """Deterministic torch.nn.Linear-style init (uniform +/- 1/sqrt(fan_in))."""
    assert hidden_ratio in {1, 2, 4}
    H = hidden_ratio * embedding_dimensions
    k1, k2, k3, k4 = jax.random.split(key, 4)

    bound1 = 1.0 / (embedding_dimensions ** 0.5)
    w1 = jax.random.uniform(k1, (2 * H, embedding_dimensions),
                            minval=-bound1, maxval=bound1, dtype=jnp.float32)
    b1 = jax.random.uniform(k2, (2 * H,), minval=-bound1, maxval=bound1,
                            dtype=jnp.float32)

    bound2 = 1.0 / (H ** 0.5)
    w2 = jax.random.uniform(k3, (num_classes, H),
                            minval=-bound2, maxval=bound2, dtype=jnp.float32)
    b2 = jax.random.uniform(k4, (num_classes,), minval=-bound2, maxval=bound2,
                            dtype=jnp.float32)
    return w1, b1, w2, b2


def reference_forward(x, w1, b1, w2, b2):
    """Pure-JAX reference matching the PyTorch semantics."""
    z = x @ w1.T + b1
    h_dim = z.shape[-1] // 2
    x1, x2 = z[..., :h_dim], z[..., h_dim:]
    h = jax.nn.silu(x1) * x2
    return h @ w2.T + b2


if __name__ == "__main__":
    # Small shapes consistent with the module's forward.
    B = 500                     # deliberately NOT a multiple of the batch tile
    E = 32                      # embedding_dimensions
    hidden_ratio = 2            # -> H = 64, 2H = 128
    C = 16                      # num_classes

    key = jax.random.PRNGKey(0)
    kx, kp = jax.random.split(key)
    x = jax.random.normal(kx, (B, E), dtype=jnp.float32)
    w1, b1, w2, b2 = init_params(kp, E, hidden_ratio, C)

    ref = reference_forward(x, w1, b1, w2, b2)

    # f32 compute path (exact sigmoid): tight numerical check.
    p32 = prepare_params(w1, b1, w2, b2, compute_dtype=jnp.float32)
    out32 = jax.block_until_ready(mlp_classifier_forward(x, *p32))
    assert out32.shape == (B, C)
    assert jnp.allclose(out32, ref, atol=5e-4, rtol=5e-4), "f32 mismatch vs reference"

    # bf16 compute + bf16 logits (default perf path on v6e/v7x): looser check.
    pbf = prepare_params(w1, b1, w2, b2, compute_dtype=jnp.bfloat16)
    outbf = jax.block_until_ready(
        mlp_classifier_forward(x, *pbf, out_dtype=jnp.bfloat16))
    assert outbf.shape == (B, C)
    assert jnp.allclose(outbf.astype(jnp.float32), ref, atol=5e-2, rtol=5e-2), \
        "bf16 mismatch vs reference"

    print("KERNEL_OK")
</pallas_src>

<mosaic_0001>
module attributes {stable_mosaic.version = 11 : i64} {
  func.func @kernel(%arg0: i32, %arg1: i32, %arg2: memref<512x32xf32, #tpu.memory_space<vmem>>, %arg3: memref<32x64xf32, #tpu.memory_space<vmem>>, %arg4: memref<1x64xf32, #tpu.memory_space<vmem>>, %arg5: memref<32x64xf32, #tpu.memory_space<vmem>>, %arg6: memref<1x64xf32, #tpu.memory_space<vmem>>, %arg7: memref<64x128xf32, #tpu.memory_space<vmem>>, %arg8: memref<1x128xf32, #tpu.memory_space<vmem>>, %arg9: memref<512x128xf32, #tpu.memory_space<vmem>>, %arg10: memref<512x128xf32, #tpu.memory_space<vmem>>) attributes {dimension_semantics = [#tpu.dimension_semantics<parallel>, #tpu.dimension_semantics<arbitrary>], iteration_bounds = array<i64: 1, 1>, scalar_prefetch = 0 : i64, scratch_operands = 1 : i64, tpu.core_type = #tpu.core_type<tc>, window_params = [{transform_indices = @transform_0, window_bounds = array<i64: 512, 32>}, {pipeline_mode = #tpu.pipeline_mode<synchronous>, transform_indices = @transform_1, window_bounds = array<i64: 32, 64>}, {pipeline_mode = #tpu.pipeline_mode<synchronous>, transform_indices = @transform_2, window_bounds = array<i64: 1, 64>}, {pipeline_mode = #tpu.pipeline_mode<synchronous>, transform_indices = @transform_3, window_bounds = array<i64: 32, 64>}, {pipeline_mode = #tpu.pipeline_mode<synchronous>, transform_indices = @transform_4, window_bounds = array<i64: 1, 64>}, {pipeline_mode = #tpu.pipeline_mode<synchronous>, transform_indices = @transform_5, window_bounds = array<i64: 64, 128>}, {pipeline_mode = #tpu.pipeline_mode<synchronous>, transform_indices = @transform_6, window_bounds = array<i64: 1, 128>}, {transform_indices = @transform_7, window_bounds = array<i64: 512, 128>}]} {
    %c0_i32 = arith.constant 0 : i32
    %0 = arith.cmpi eq, %arg1, %c0_i32 : i32
    %1 = arith.extui %0 : i1 to i32
    %c0_i32_0 = arith.constant 0 : i32
    %2 = arith.cmpi ne, %1, %c0_i32_0 : i32
    scf.if %2 {
      %cst_23 = arith.constant 0.000000e+00 : f32
      %31 = vector.broadcast %cst_23 : f32 to vector<512x128xf32>
      %c0_24 = arith.constant 0 : index
      %c0_25 = arith.constant 0 : index
      %32 = vector.load %arg10[%c0_24, %c0_25] : memref<512x128xf32, #tpu.memory_space<vmem>>, vector<512x128xf32>
      tpu.vector_store %arg10[%c0_24, %c0_25], %31 {strides = array<i32>} : memref<512x128xf32, #tpu.memory_space<vmem>>, vector<512x128xf32>,
    } else {
    }
    %c0 = arith.constant 0 : index
    %c0_1 = arith.constant 0 : index
    %3 = vector.load %arg2[%c0, %c0_1] : memref<512x32xf32, #tpu.memory_space<vmem>>, vector<512x32xf32>
    %c0_2 = arith.constant 0 : index
    %c0_3 = arith.constant 0 : index
    %4 = vector.load %arg3[%c0_2, %c0_3] : memref<32x64xf32, #tpu.memory_space<vmem>>, vector<32x64xf32>
    %cst = arith.constant dense<0.000000e+00> : vector<512x64xf32>
    %5 = tpu.matmul %3, %4, %cst {dimension_numbers = #tpu.dot_dimension_numbers<[1], [0], [0], [1], [0, 0, 1, 1], [], []>} : vector<512x32xf32>, vector<32x64xf32>, vector<512x64xf32> -> vector<512x64xf32>
    %c0_4 = arith.constant 0 : index
    %c0_5 = arith.constant 0 : index
    %6 = vector.load %arg4[%c0_4, %c0_5] : memref<1x64xf32, #tpu.memory_space<vmem>>, vector<1x64xf32>
    %7 = vector.broadcast %6 : vector<1x64xf32> to vector<512x64xf32>
    %8 = arith.addf %5, %7 : vector<512x64xf32>
    %c0_6 = arith.constant 0 : index
    %c0_7 = arith.constant 0 : index
    %9 = vector.load %arg5[%c0_6, %c0_7] : memref<32x64xf32, #tpu.memory_space<vmem>>, vector<32x64xf32>
    %cst_8 = arith.constant dense<0.000000e+00> : vector<512x64xf32>
    %10 = tpu.matmul %3, %9, %cst_8 {dimension_numbers = #tpu.dot_dimension_numbers<[1], [0], [0], [1], [0, 0, 1, 1], [], []>} : vector<512x32xf32>, vector<32x64xf32>, vector<512x64xf32> -> vector<512x64xf32>
    %c0_9 = arith.constant 0 : index
    %c0_10 = arith.constant 0 : index
    %11 = vector.load %arg6[%c0_9, %c0_10] : memref<1x64xf32, #tpu.memory_space<vmem>>, vector<1x64xf32>
    %12 = vector.broadcast %11 : vector<1x64xf32> to vector<512x64xf32>
    %13 = arith.addf %10, %12 : vector<512x64xf32>
    %cst_11 = arith.constant 0.000000e+00 : f32
    %14 = vector.broadcast %cst_11 : f32 to vector<512x64xf32>
    %15 = arith.subf %14, %8 : vector<512x64xf32>
    %16 = math.exp %15 : vector<512x64xf32>
    %cst_12 = arith.constant 1.000000e+00 : f32
    %17 = vector.broadcast %cst_12 : f32 to vector<512x64xf32>
    %18 = arith.addf %17, %16 : vector<512x64xf32>
    %cst_13 = arith.constant 1.000000e+00 : f32
    %19 = vector.broadcast %cst_13 : f32 to vector<512x64xf32>
    %20 = arith.divf %19, %18 : vector<512x64xf32>
    %21 = arith.mulf %8, %20 : vector<512x64xf32>
    %22 = arith.mulf %21, %13 : vector<512x64xf32>
    %c0_14 = arith.constant 0 : index
    %c0_15 = arith.constant 0 : index
    %23 = vector.load %arg10[%c0_14, %c0_15] : memref<512x128xf32, #tpu.memory_space<vmem>>, vector<512x128xf32>
    %c0_16 = arith.constant 0 : index
    %c0_17 = arith.constant 0 : index
    %24 = vector.load %arg7[%c0_16, %c0_17] : memref<64x128xf32, #tpu.memory_space<vmem>>, vector<64x128xf32>
    %cst_18 = arith.constant dense<0.000000e+00> : vector<512x128xf32>
    %25 = tpu.matmul %22, %24, %cst_18 {dimension_numbers = #tpu.dot_dimension_numbers<[1], [0], [0], [1], [0, 0, 1, 1], [], []>} : vector<512x64xf32>, vector<64x128xf32>, vector<512x128xf32> -> vector<512x128xf32>
    %26 = arith.addf %23, %25 : vector<512x128xf32>
    %c0_19 = arith.constant 0 : index
    %c0_20 = arith.constant 0 : index
    %27 = vector.load %arg10[%c0_19, %c0_20] : memref<512x128xf32, #tpu.memory_space<vmem>>, vector<512x128xf32>
    tpu.vector_store %arg10[%c0_19, %c0_20], %26 {strides = array<i32>} : memref<512x128xf32, #tpu.memory_space<vmem>>, vector<512x128xf32>,
    %c0_i32_21 = arith.constant 0 : i32
    %28 = arith.cmpi eq, %arg1, %c0_i32_21 : i32
    %29 = arith.extui %28 : i1 to i32
    %c0_i32_22 = arith.constant 0 : i32
    %30 = arith.cmpi ne, %29, %c0_i32_22 : i32
    scf.if %30 {
      %c0_23 = arith.constant 0 : index
      %c0_24 = arith.constant 0 : index
      %31 = vector.load %arg10[%c0_23, %c0_24] : memref<512x128xf32, #tpu.memory_space<vmem>>, vector<512x128xf32>
      %c0_25 = arith.constant 0 : index
      %c0_26 = arith.constant 0 : index
      %32 = vector.load %arg8[%c0_25, %c0_26] : memref<1x128xf32, #tpu.memory_space<vmem>>, vector<1x128xf32>
      %33 = vector.broadcast %32 : vector<1x128xf32> to vector<512x128xf32>
      %34 = arith.addf %31, %33 : vector<512x128xf32>
      %c0_27 = arith.constant 0 : index
      %c0_28 = arith.constant 0 : index
      %35 = vector.load %arg9[%c0_27, %c0_28] : memref<512x128xf32, #tpu.memory_space<vmem>>, vector<512x128xf32>
      tpu.vector_store %arg9[%c0_27, %c0_28], %34 {strides = array<i32>} : memref<512x128xf32, #tpu.memory_space<vmem>>, vector<512x128xf32>,
    } else {
    }
    return
  }
  func.func @transform_0(%arg0: i32, %arg1: i32) -> (i32, i32) {
    %c0_i32 = arith.constant 0 : i32
    %c0_i32_0 = arith.constant 0 : i32
    return %arg0, %c0_i32 : i32, i32
  }
  func.func @transform_1(%arg0: i32, %arg1: i32) -> (i32, i32) {
    %c0_i32 = arith.constant 0 : i32
    %c0_i32_0 = arith.constant 0 : i32
    return %c0_i32, %arg1 : i32, i32
  }
  func.func @transform_2(%arg0: i32, %arg1: i32) -> (i32, i32) {
    %c0_i32 = arith.constant 0 : i32
    %c0_i32_0 = arith.constant 0 : i32
    return %c0_i32, %arg1 : i32, i32
  }
  func.func @transform_3(%arg0: i32, %arg1: i32) -> (i32, i32) {
    %c0_i32 = arith.constant 0 : i32
    %c0_i32_0 = arith.constant 0 : i32
    return %c0_i32, %arg1 : i32, i32
  }
  func.func @transform_4(%arg0: i32, %arg1: i32) -> (i32, i32) {
    %c0_i32 = arith.constant 0 : i32
    %c0_i32_0 = arith.constant 0 : i32
    return %c0_i32, %arg1 : i32, i32
  }
  func.func @transform_5(%arg0: i32, %arg1: i32) -> (i32, i32) {
    %c0_i32 = arith.constant 0 : i32
    %c0_i32_0 = arith.constant 0 : i32
    return %arg1, %c0_i32 : i32, i32
  }
  func.func @transform_6(%arg0: i32, %arg1: i32) -> (i32, i32) {
    %c0_i32 = arith.constant 0 : i32
    %c0_i32_0 = arith.constant 0 : i32
    %c0_i32_1 = arith.constant 0 : i32
    return %c0_i32, %c0_i32_0 : i32, i32
  }
  func.func @transform_7(%arg0: i32, %arg1: i32) -> (i32, i32) {
    %c0_i32 = arith.constant 0 : i32
    %c0_i32_0 = arith.constant 0 : i32
    return %arg0, %c0_i32 : i32, i32
  }
}

module attributes {stable_mosaic.version = 11 : i64} {
  func.func @kernel(%arg0: i32, %arg1: i32, %arg2: memref<512x32xf32, #tpu.memory_space<vmem>>, %arg3: memref<32x64xf32, #tpu.memory_space<vmem>>, %arg4: memref<1x64xf32, #tpu.memory_space<vmem>>, %arg5: memref<32x64xf32, #tpu.memory_space<vmem>>, %arg6: memref<1x64xf32, #tpu.memory_space<vmem>>, %arg7: memref<64x128xf32, #tpu.memory_space<vmem>>, %arg8: memref<1x128xf32, #tpu.memory_space<vmem>>, %arg9: memref<512x128xf32, #tpu.memory_space<vmem>>, %arg10: memref<512x128xf32, #tpu.memory_space<vmem>>) attributes {dimension_semantics = [#tpu.dimension_semantics<parallel>, #tpu.dimension_semantics<arbitrary>], iteration_bounds = array<i64: 1, 1>, scalar_prefetch = 0 : i64, scratch_operands = 1 : i64, tpu.core_type = #tpu.core_type<tc>, window_params = [{transform_indices = @transform_0, window_bounds = array<i64: 512, 32>}, {transform_indices = @transform_1, window_bounds = array<i64: 32, 64>}, {transform_indices = @transform_2, window_bounds = array<i64: 1, 64>}, {transform_indices = @transform_3, window_bounds = array<i64: 32, 64>}, {transform_indices = @transform_4, window_bounds = array<i64: 1, 64>}, {transform_indices = @transform_5, window_bounds = array<i64: 64, 128>}, {pipeline_mode = #tpu.pipeline_mode<synchronous>, transform_indices = @transform_6, window_bounds = array<i64: 1, 128>}, {transform_indices = @transform_7, window_bounds = array<i64: 512, 128>}]} {
    %c0_i32 = arith.constant 0 : i32
    %0 = arith.cmpi eq, %arg1, %c0_i32 : i32
    %1 = arith.extui %0 : i1 to i32
    %c0_i32_0 = arith.constant 0 : i32
    %2 = arith.cmpi ne, %1, %c0_i32_0 : i32
    scf.if %2 {
      %cst_23 = arith.constant 0.000000e+00 : f32
      %31 = vector.broadcast %cst_23 : f32 to vector<512x128xf32>
      %c0_24 = arith.constant 0 : index
      %c0_25 = arith.constant 0 : index
      %32 = vector.load %arg10[%c0_24, %c0_25] : memref<512x128xf32, #tpu.memory_space<vmem>>, vector<512x128xf32>
      tpu.vector_store %arg10[%c0_24, %c0_25], %31 {strides = array<i32>} : memref<512x128xf32, #tpu.memory_space<vmem>>, vector<512x128xf32>,
    } else {
    }
    %c0 = arith.constant 0 : index
    %c0_1 = arith.constant 0 : index
    %3 = vector.load %arg2[%c0, %c0_1] : memref<512x32xf32, #tpu.memory_space<vmem>>, vector<512x32xf32>
    %c0_2 = arith.constant 0 : index
    %c0_3 = arith.constant 0 : index
    %4 = vector.load %arg3[%c0_2, %c0_3] : memref<32x64xf32, #tpu.memory_space<vmem>>, vector<32x64xf32>
    %cst = arith.constant dense<0.000000e+00> : vector<512x64xf32>
    %5 = tpu.matmul %3, %4, %cst {dimension_numbers = #tpu.dot_dimension_numbers<[1], [0], [0], [1], [0, 0, 1, 1], [], []>} : vector<512x32xf32>, vector<32x64xf32>, vector<512x64xf32> -> vector<512x64xf32>
    %c0_4 = arith.constant 0 : index
    %c0_5 = arith.constant 0 : index
    %6 = vector.load %arg4[%c0_4, %c0_5] : memref<1x64xf32, #tpu.memory_space<vmem>>, vector<1x64xf32>
    %7 = vector.broadcast %6 : vector<1x64xf32> to vector<512x64xf32>
    %8 = arith.addf %5, %7 : vector<512x64xf32>
    %c0_6 = arith.constant 0 : index
    %c0_7 = arith.constant 0 : index
    %9 = vector.load %arg5[%c0_6, %c0_7] : memref<32x64xf32, #tpu.memory_space<vmem>>, vector<32x64xf32>
    %cst_8 = arith.constant dense<0.000000e+00> : vector<512x64xf32>
    %10 = tpu.matmul %3, %9, %cst_8 {dimension_numbers = #tpu.dot_dimension_numbers<[1], [0], [0], [1], [0, 0, 1, 1], [], []>} : vector<512x32xf32>, vector<32x64xf32>, vector<512x64xf32> -> vector<512x64xf32>
    %c0_9 = arith.constant 0 : index
    %c0_10 = arith.constant 0 : index
    %11 = vector.load %arg6[%c0_9, %c0_10] : memref<1x64xf32, #tpu.memory_space<vmem>>, vector<1x64xf32>
    %12 = vector.broadcast %11 : vector<1x64xf32> to vector<512x64xf32>
    %13 = arith.addf %10, %12 : vector<512x64xf32>
    %cst_11 = arith.constant 0.000000e+00 : f32
    %14 = vector.broadcast %cst_11 : f32 to vector<512x64xf32>
    %15 = arith.subf %14, %8 : vector<512x64xf32>
    %16 = math.exp %15 : vector<512x64xf32>
    %cst_12 = arith.constant 1.000000e+00 : f32
    %17 = vector.broadcast %cst_12 : f32 to vector<512x64xf32>
    %18 = arith.addf %17, %16 : vector<512x64xf32>
    %cst_13 = arith.constant 1.000000e+00 : f32
    %19 = vector.broadcast %cst_13 : f32 to vector<512x64xf32>
    %20 = arith.divf %19, %18 : vector<512x64xf32>
    %21 = arith.mulf %8, %20 : vector<512x64xf32>
    %22 = arith.mulf %21, %13 : vector<512x64xf32>
    %c0_14 = arith.constant 0 : index
    %c0_15 = arith.constant 0 : index
    %23 = vector.load %arg10[%c0_14, %c0_15] : memref<512x128xf32, #tpu.memory_space<vmem>>, vector<512x128xf32>
    %c0_16 = arith.constant 0 : index
    %c0_17 = arith.constant 0 : index
    %24 = vector.load %arg7[%c0_16, %c0_17] : memref<64x128xf32, #tpu.memory_space<vmem>>, vector<64x128xf32>
    %cst_18 = arith.constant dense<0.000000e+00> : vector<512x128xf32>
    %25 = tpu.matmul %22, %24, %cst_18 {dimension_numbers = #tpu.dot_dimension_numbers<[1], [0], [0], [1], [0, 0, 1, 1], [], []>} : vector<512x64xf32>, vector<64x128xf32>, vector<512x128xf32> -> vector<512x128xf32>
    %26 = arith.addf %23, %25 : vector<512x128xf32>
    %c0_19 = arith.constant 0 : index
    %c0_20 = arith.constant 0 : index
    %27 = vector.load %arg10[%c0_19, %c0_20] : memref<512x128xf32, #tpu.memory_space<vmem>>, vector<512x128xf32>
    tpu.vector_store %arg10[%c0_19, %c0_20], %26 {strides = array<i32>} : memref<512x128xf32, #tpu.memory_space<vmem>>, vector<512x128xf32>,
    %c0_i32_21 = arith.constant 0 : i32
    %28 = arith.cmpi eq, %arg1, %c0_i32_21 : i32
    %29 = arith.extui %28 : i1 to i32
    %c0_i32_22 = arith.constant 0 : i32
    %30 = arith.cmpi ne, %29, %c0_i32_22 : i32
    scf.if %30 {
      %c0_23 = arith.constant 0 : index
      %c0_24 = arith.constant 0 : index
      %31 = vector.load %arg10[%c0_23, %c0_24] : memref<512x128xf32, #tpu.memory_space<vmem>>, vector<512x128xf32>
      %c0_25 = arith.constant 0 : index
      %c0_26 = arith.constant 0 : index
      %32 = vector.load %arg8[%c0_25, %c0_26] : memref<1x128xf32, #tpu.memory_space<vmem>>, vector<1x128xf32>
      %33 = vector.broadcast %32 : vector<1x128xf32> to vector<512x128xf32>
      %34 = arith.addf %31, %33 : vector<512x128xf32>
      %c0_27 = arith.constant 0 : index
      %c0_28 = arith.constant 0 : index
      %35 = vector.load %arg9[%c0_27, %c0_28] : memref<512x128xf32, #tpu.memory_space<vmem>>, vector<512x128xf32>
      tpu.vector_store %arg9[%c0_27, %c0_28], %34 {strides = array<i32>} : memref<512x128xf32, #tpu.memory_space<vmem>>, vector<512x128xf32>,
    } else {
    }
    return
  }
  func.func @transform_0(%arg0: i32, %arg1: i32) -> (i32, i32) {
    %c0_i32 = arith.constant 0 : i32
    %c0_i32_0 = arith.constant 0 : i32
    return %arg0, %c0_i32 : i32, i32
  }
  func.func @transform_1(%arg0: i32, %arg1: i32) -> (i32, i32) {
    %c0_i32 = arith.constant 0 : i32
    %c0_i32_0 = arith.constant 0 : i32
    return %c0_i32, %arg1 : i32, i32
  }
  func.func @transform_2(%arg0: i32, %arg1: i32) -> (i32, i32) {
    %c0_i32 = arith.constant 0 : i32
    %c0_i32_0 = arith.constant 0 : i32
    return %c0_i32, %arg1 : i32, i32
  }
  func.func @transform_3(%arg0: i32, %arg1: i32) -> (i32, i32) {
    %c0_i32 = arith.constant 0 : i32
    %c0_i32_0 = arith.constant 0 : i32
    return %c0_i32, %arg1 : i32, i32
  }
  func.func @transform_4(%arg0: i32, %arg1: i32) -> (i32, i32) {
    %c0_i32 = arith.constant 0 : i32
    %c0_i32_0 = arith.constant 0 : i32
    return %c0_i32, %arg1 : i32, i32
  }
  func.func @transform_5(%arg0: i32, %arg1: i32) -> (i32, i32) {
    %c0_i32 = arith.constant 0 : i32
    %c0_i32_0 = arith.constant 0 : i32
    return %arg1, %c0_i32 : i32, i32
  }
  func.func @transform_6(%arg0: i32, %arg1: i32) -> (i32, i32) {
    %c0_i32 = arith.constant 0 : i32
    %c0_i32_0 = arith.constant 0 : i32
    %c0_i32_1 = arith.constant 0 : i32
    return %c0_i32, %c0_i32_0 : i32, i32
  }
  func.func @transform_7(%arg0: i32, %arg1: i32) -> (i32, i32) {
    %c0_i32 = arith.constant 0 : i32
    %c0_i32_0 = arith.constant 0 : i32
    return %arg0, %c0_i32 : i32, i32
  }
}

</mosaic_0001>

<llo_original>
// kernel: tpu_custom_call.1
$region0: #{tpu_custom_call.1}
  #allocation0 [shape = 'u32[]', space=smem, size = 0x4, offset = 0x4, fixed_abs, tag = 'smem constant byte address 0x4 - core index']
  #allocation1 [shape = 'u32[144,128]{1,0:T(1,128)}', space=vmem, size = 0x12000, scoped, tag = 'internal scratch']
  #allocation2 [shape = 'f32[512,128]{1,0:T(8,128)}', space=vmem, size = 0x40000, scoped, tag = 'scratch operand']
  %s0 = inlined_call_operand.vmem [shape: f32[500,32], index: 0, kind: input, shape index: {}]
  %s1 = inlined_call_operand.vmem [shape: f32[32,64], index: 1, kind: input, shape index: {}]
  %s2 = inlined_call_operand.vmem [shape: f32[1,64], index: 2, kind: input, shape index: {}]
  %s3 = inlined_call_operand.vmem [shape: f32[32,64], index: 3, kind: input, shape index: {}]
  %s4 = inlined_call_operand.vmem [shape: f32[1,64], index: 4, kind: input, shape index: {}]
  %s5 = inlined_call_operand.vmem [shape: f32[64,128], index: 5, kind: input, shape index: {}]
  %s6 = inlined_call_operand.vmem [shape: f32[1,128], index: 6, kind: input, shape index: {}]
  %s7 = inlined_call_operand.hbm [shape: f32[500,128], index: 7, kind: output, shape index: {}]
  %s8 = sld [smem:[#allocation0]]
  $region46: #{tpu_custom_call.1} parent=0
    _
  %s10 = ssub.s32 1, %s8
  %s11 = scalar_select 0, %s10, %s8
  $region1: #{tpu_custom_call.1} parent=0
    #allocation3 [shape = 'u8[262144]{0}', space=vmem, size = 0x40000, scoped, tag = 'output window, operand 0, single buffered']
    #allocation4 [shape = 's32[1]{0}', space=sflag, size = 0x4, scoped, tag = 'scoped memory for tpu_custom_call.1']
    %12 = vsyncpa [#allocation4], 0
    // Predicated region
    $region2: #{tpu_custom_call.1} parent=1 // pred_check
      _
    $region3: #{tpu_custom_call.1} parent=1 // pred_check_branch
      %14 = sbr.rel (0) target = $region5
    $region4: #{tpu_custom_call.1} parent=1 // pred_region
      _
    $region5: #{tpu_custom_call.1} parent=1 // pred_fallthru
      _
    // Predicated region
    $region6: #{tpu_custom_call.1} parent=1 // pred_check
      _
    $region7: #{tpu_custom_call.1} parent=1 // pred_check_branch
      %16 = sbr.rel (0) target = $region9
    $region8: #{tpu_custom_call.1} parent=1 // pred_region
      _
    $region9: #{tpu_custom_call.1} parent=1 // pred_fallthru
      _
    // Predicated region
    $region10: #{tpu_custom_call.1} parent=1 // pred_check
      _
    $region11: #{tpu_custom_call.1} parent=1 // pred_check_branch
      %18 = sbr.rel (0) target = $region13
    $region12: #{tpu_custom_call.1} parent=1 // pred_region
      _
    $region13: #{tpu_custom_call.1} parent=1 // pred_fallthru
      _
    // Predicated region
    $region14: #{tpu_custom_call.1} parent=1 // pred_check
      _
    $region15: #{tpu_custom_call.1} parent=1 // pred_check_branch
      %20 = sbr.rel (0) target = $region17
    $region16: #{tpu_custom_call.1} parent=1 // pred_region
      _
    $region17: #{tpu_custom_call.1} parent=1 // pred_fallthru
      _
    // Predicated region
    $region18: #{tpu_custom_call.1} parent=1 // pred_check
      _
    $region19: #{tpu_custom_call.1} parent=1 // pred_check_branch
      %22 = sbr.rel (0) target = $region21
    $region20: #{tpu_custom_call.1} parent=1 // pred_region
      _
    $region21: #{tpu_custom_call.1} parent=1 // pred_fallthru
      _
    // Predicated region
    $region22: #{tpu_custom_call.1} parent=1 // pred_check
      _
    $region23: #{tpu_custom_call.1} parent=1 // pred_check_branch
      %24 = sbr.rel (0) target = $region25
    $region24: #{tpu_custom_call.1} parent=1 // pred_region
      _
    $region25: #{tpu_custom_call.1} parent=1 // pred_fallthru
      _
    // Predicated region
    $region26: #{tpu_custom_call.1} parent=1 // pred_check
      _
    $region27: #{tpu_custom_call.1} parent=1 // pred_check_branch
      %26 = sbr.rel (0) target = $region29
    $region28: #{tpu_custom_call.1} parent=1 // pred_region
      _
    $region29: #{tpu_custom_call.1} parent=1 // pred_fallthru
      _
    %p27 = scmp.eq.s32.totalorder 0, 0
    // Predicated region
    $region30: #{tpu_custom_call.1} parent=1 // pred_check
      %p28 = pneg %p27
    $region31: #{tpu_custom_call.1} parent=1 // pred_check_branch
      %30 = sbr.rel (%p28) target = $region33
    $region32: #{tpu_custom_call.1} parent=1 // pred_region
      %31 = vst [vmem:[#allocation2] sm:$0xff] 0.0
      %32 = vst [vmem:[#allocation2 + $0x8] sm:$0xff] 0.0
      %33 = vst [vmem:[#allocation2 + $0x10] sm:$0xff] 0.0
      %34 = vst [vmem:[#allocation2 + $0x18] sm:$0xff] 0.0
      %35 = vst [vmem:[#allocation2 + $0x20] sm:$0xff] 0.0
      %36 = vst [vmem:[#allocation2 + $0x28] sm:$0xff] 0.0
      %37 = vst [vmem:[#allocation2 + $0x30] sm:$0xff] 0.0
      %38 = vst [vmem:[#allocation2 + $0x38] sm:$0xff] 0.0
      %39 = vst [vmem:[#allocation2 + $0x40] sm:$0xff] 0.0
      %40 = vst [vmem:[#allocation2 + $0x48] sm:$0xff] 0.0
      %41 = vst [vmem:[#allocation2 + $0x50] sm:$0xff] 0.0
      %42 = vst [vmem:[#allocation2 + $0x58] sm:$0xff] 0.0
      %43 = vst [vmem:[#allocation2 + $0x60] sm:$0xff] 0.0
      %44 = vst [vmem:[#allocation2 + $0x68] sm:$0xff] 0.0
      %45 = vst [vmem:[#allocation2 + $0x70] sm:$0xff] 0.0
      %46 = vst [vmem:[#allocation2 + $0x78] sm:$0xff] 0.0
      %47 = vst [vmem:[#allocation2 + $0x80] sm:$0xff] 0.0
      %48 = vst [vmem:[#allocation2 + $0x88] sm:$0xff] 0.0
      %49 = vst [vmem:[#allocation2 + $0x90] sm:$0xff] 0.0
      %50 = vst [vmem:[#allocation2 + $0x98] sm:$0xff] 0.0
      %51 = vst [vmem:[#allocation2 + $0xa0] sm:$0xff] 0.0
      %52 = vst [vmem:[#allocation2 + $0xa8] sm:$0xff] 0.0
      %53 = vst [vmem:[#allocation2 + $0xb0] sm:$0xff] 0.0
      %54 = vst [vmem:[#allocation2 + $0xb8] sm:$0xff] 0.0
      %55 = vst [vmem:[#allocation2 + $0xc0] sm:$0xff] 0.0
      %56 = vst [vmem:[#allocation2 + $0xc8] sm:$0xff] 0.0
      %57 = vst [vmem:[#allocation2 + $0xd0] sm:$0xff] 0.0
      %58 = vst [vmem:[#allocation2 + $0xd8] sm:$0xff] 0.0
      %59 = vst [vmem:[#allocation2 + $0xe0] sm:$0xff] 0.0
      %60 = vst [vmem:[#allocation2 + $0xe8] sm:$0xff] 0.0
      %61 = vst [vmem:[#allocation2 + $0xf0] sm:$0xff] 0.0
      %62 = vst [vmem:[#allocation2 + $0xf8] sm:$0xff] 0.0
      %63 = vst [vmem:[#allocation2 + $0x100] sm:$0xff] 0.0
      %64 = vst [vmem:[#allocation2 + $0x108] sm:$0xff] 0.0
      %65 = vst [vmem:[#allocation2 + $0x110] sm:$0xff] 0.0
      %66 = vst [vmem:[#allocation2 + $0x118] sm:$0xff] 0.0
      %67 = vst [vmem:[#allocation2 + $0x120] sm:$0xff] 0.0
      %68 = vst [vmem:[#allocation2 + $0x128] sm:$0xff] 0.0
      %69 = vst [vmem:[#allocation2 + $0x130] sm:$0xff] 0.0
      %70 = vst [vmem:[#allocation2 + $0x138] sm:$0xff] 0.0
      %71 = vst [vmem:[#allocation2 + $0x140] sm:$0xff] 0.0
      %72 = vst [vmem:[#allocation2 + $0x148] sm:$0xff] 0.0
      %73 = vst [vmem:[#allocation2 + $0x150] sm:$0xff] 0.0
      %74 = vst [vmem:[#allocation2 + $0x158] sm:$0xff] 0.0
      %75 = vst [vmem:[#allocation2 + $0x160] sm:$0xff] 0.0
      %76 = vst [vmem:[#allocation2 + $0x168] sm:$0xff] 0.0
      %77 = vst [vmem:[#allocation2 + $0x170] sm:$0xff] 0.0
      %78 = vst [vmem:[#allocation2 + $0x178] sm:$0xff] 0.0
      %79 = vst [vmem:[#allocation2 + $0x180] sm:$0xff] 0.0
      %80 = vst [vmem:[#allocation2 + $0x188] sm:$0xff] 0.0
      %81 = vst [vmem:[#allocation2 + $0x190] sm:$0xff] 0.0
      %82 = vst [vmem:[#allocation2 + $0x198] sm:$0xff] 0.0
      %83 = vst [vmem:[#allocation2 + $0x1a0] sm:$0xff] 0.0
      %84 = vst [vmem:[#allocation2 + $0x1a8] sm:$0xff] 0.0
      %85 = vst [vmem:[#allocation2 + $0x1b0] sm:$0xff] 0.0
      %86 = vst [vmem:[#allocation2 + $0x1b8] sm:$0xff] 0.0
      %87 = vst [vmem:[#allocation2 + $0x1c0] sm:$0xff] 0.0
      %88 = vst [vmem:[#allocation2 + $0x1c8] sm:$0xff] 0.0
      %89 = vst [vmem:[#allocation2 + $0x1d0] sm:$0xff] 0.0
      %90 = vst [vmem:[#allocation2 + $0x1d8] sm:$0xff] 0.0
      %91 = vst [vmem:[#allocation2 + $0x1e0] sm:$0xff] 0.0
      %92 = vst [vmem:[#allocation2 + $0x1e8] sm:$0xff] 0.0
      %93 = vst [vmem:[#allocation2 + $0x1f0] sm:$0xff] 0.0
      %94 = vst [vmem:[#allocation2 + $0x1f8] sm:$0xff] 0.0
    $region33: #{tpu_custom_call.1} parent=1 // pred_fallthru
      _
    %v95 = vld [vmem:[%s0] sm:$0xff]
    %v96 = vld [vmem:[%s0 + $0x8] sm:$0xff]
    %v97 = vld [vmem:[%s0 + $0x10] sm:$0xff]
    %v98 = vld [vmem:[%s0 + $0x18] sm:$0xff]
    %v99 = vld [vmem:[%s0 + $0x20] sm:$0xff]
    %v100 = vld [vmem:[%s0 + $0x28] sm:$0xff]
    %v101 = vld [vmem:[%s0 + $0x30] sm:$0xff]
    %v102 = vld [vmem:[%s0 + $0x38] sm:$0xff]
    %v103 = vld [vmem:[%s0 + $0x40] sm:$0xff]
    %v104 = vld [vmem:[%s0 + $0x48] sm:$0xff]
    %v105 = vld [vmem:[%s0 + $0x50] sm:$0xff]
    %v106 = vld [vmem:[%s0 + $0x58] sm:$0xff]
    %v107 = vld [vmem:[%s0 + $0x60] sm:$0xff]
    %v108 = vld [vmem:[%s0 + $0x68] sm:$0xff]
    %v109 = vld [vmem:[%s0 + $0x70] sm:$0xff]
    %v110 = vld [vmem:[%s0 + $0x78] sm:$0xff]
    %v111 = vld [vmem:[%s0 + $0x80] sm:$0xff]
    %v112 = vld [vmem:[%s0 + $0x88] sm:$0xff]
    %v113 = vld [vmem:[%s0 + $0x90] sm:$0xff]
    %v114 = vld [vmem:[%s0 + $0x98] sm:$0xff]
    %v115 = vld [vmem:[%s0 + $0xa0] sm:$0xff]
    %v116 = vld [vmem:[%s0 + $0xa8] sm:$0xff]
    %v117 = vld [vmem:[%s0 + $0xb0] sm:$0xff]
    %v118 = vld [vmem:[%s0 + $0xb8] sm:$0xff]
    %v119 = vld [vmem:[%s0 + $0xc0] sm:$0xff]
    %v120 = vld [vmem:[%s0 + $0xc8] sm:$0xff]
    %v121 = vld [vmem:[%s0 + $0xd0] sm:$0xff]
    %v122 = vld [vmem:[%s0 + $0xd8] sm:$0xff]
    %v123 = vld [vmem:[%s0 + $0xe0] sm:$0xff]
    %v124 = vld [vmem:[%s0 + $0xe8] sm:$0xff]
    %v125 = vld [vmem:[%s0 + $0xf0] sm:$0xff]
    %v126 = vld [vmem:[%s0 + $0xf8] sm:$0xff]
    %v127 = vld [vmem:[%s0 + $0x100] sm:$0xff]
    %v128 = vld [vmem:[%s0 + $0x108] sm:$0xff]
    %v129 = vld [vmem:[%s0 + $0x110] sm:$0xff]
    %v130 = vld [vmem:[%s0 + $0x118] sm:$0xff]
    %v131 = vld [vmem:[%s0 + $0x120] sm:$0xff]
    %v132 = vld [vmem:[%s0 + $0x128] sm:$0xff]
    %v133 = vld [vmem:[%s0 + $0x130] sm:$0xff]
    %v134 = vld [vmem:[%s0 + $0x138] sm:$0xff]
    %v135 = vld [vmem:[%s0 + $0x140] sm:$0xff]
    %v136 = vld [vmem:[%s0 + $0x148] sm:$0xff]
    %v137 = vld [vmem:[%s0 + $0x150] sm:$0xff]
    %v138 = vld [vmem:[%s0 + $0x158] sm:$0xff]
    %v139 = vld [vmem:[%s0 + $0x160] sm:$0xff]
    %v140 = vld [vmem:[%s0 + $0x168] sm:$0xff]
    %v141 = vld [vmem:[%s0 + $0x170] sm:$0xff]
    %v142 = vld [vmem:[%s0 + $0x178] sm:$0xff]
    %v143 = vld [vmem:[%s0 + $0x180] sm:$0xff]
    %v144 = vld [vmem:[%s0 + $0x188] sm:$0xff]
    %v145 = vld [vmem:[%s0 + $0x190] sm:$0xff]
    %v146 = vld [vmem:[%s0 + $0x198] sm:$0xff]
    %v147 = vld [vmem:[%s0 + $0x1a0] sm:$0xff]
    %v148 = vld [vmem:[%s0 + $0x1a8] sm:$0xff]
    %v149 = vld [vmem:[%s0 + $0x1b0] sm:$0xff]
    %v150 = vld [vmem:[%s0 + $0x1b8] sm:$0xff]
    %v151 = vld [vmem:[%s0 + $0x1c0] sm:$0xff]
    %v152 = vld [vmem:[%s0 + $0x1c8] sm:$0xff]
    %v153 = vld [vmem:[%s0 + $0x1d0] sm:$0xff]
    %v154 = vld [vmem:[%s0 + $0x1d8] sm:$0xff]
    %v155 = vld [vmem:[%s0 + $0x1e0] sm:$0xff]
    %v156 = vld [vmem:[%s0 + $0x1e8] sm:$0xff]
    %v157 = vld [vmem:[%s0 + $0x1f0] sm:$0xff]
    %v158 = vld [vmem:[%s0 + $0x1f8] sm:$0xff]
    %v159 = vld [vmem:[%s1] sm:$0xff]
    %v160 = vld [vmem:[%s1 + $0x8] sm:$0xff]
    %v161 = vld [vmem:[%s1 + $0x10] sm:$0xff]
    %v162 = vld [vmem:[%s1 + $0x18] sm:$0xff]
    %v163 = vld [vmem:[%s2] sm:$0x1]
    %v165 = vlaneseq
    %v166 = vshrl.u32 %v165, 7
    %v167 = vsub.s32 0, %v166
    %v168 = vrot.slane %v163, %v167
    %vm170 = vcmask 261120
    %v172 = vsel %vm170, %v95, 0
    %v175 = vsel %vm170, %v96, 0
    %v178 = vsel %vm170, %v97, 0
    %v181 = vsel %vm170, %v98, 0
    %v184 = vsel %vm170, %v99, 0
    %v187 = vsel %vm170, %v100, 0
    %v190 = vsel %vm170, %v101, 0
    %v193 = vsel %vm170, %v102, 0
    %v196 = vsel %vm170, %v103, 0
    %v199 = vsel %vm170, %v104, 0
    %v202 = vsel %vm170, %v105, 0
    %v205 = vsel %vm170, %v106, 0
    %v208 = vsel %vm170, %v107, 0
    %v211 = vsel %vm170, %v108, 0
    %v214 = vsel %vm170, %v109, 0
    %v217 = vsel %vm170, %v110, 0
    %v220 = vsel %vm170, %v111, 0
    %v223 = vsel %vm170, %v112, 0
    %v226 = vsel %vm170, %v113, 0
    %v229 = vsel %vm170, %v114, 0
    %v232 = vsel %vm170, %v115, 0
    %v235 = vsel %vm170, %v116, 0
    %v238 = vsel %vm170, %v117, 0
    %v241 = vsel %vm170, %v118, 0
    %v244 = vsel %vm170, %v119, 0
    %v247 = vsel %vm170, %v120, 0
    %v250 = vsel %vm170, %v121, 0
    %v253 = vsel %vm170, %v122, 0
    %v256 = vsel %vm170, %v123, 0
    %v259 = vsel %vm170, %v124, 0
    %v262 = vsel %vm170, %v125, 0
    %v265 = vsel %vm170, %v126, 0
    %v268 = vsel %vm170, %v127, 0
    %v271 = vsel %vm170, %v128, 0
    %v274 = vsel %vm170, %v129, 0
    %v277 = vsel %vm170, %v130, 0
    %v280 = vsel %vm170, %v131, 0
    %v283 = vsel %vm170, %v132, 0
    %v286 = vsel %vm170, %v133, 0
    %v289 = vsel %vm170, %v134, 0
    %v292 = vsel %vm170, %v135, 0
    %v295 = vsel %vm170, %v136, 0
    %v298 = vsel %vm170, %v137, 0
    %v301 = vsel %vm170, %v138, 0
    %v304 = vsel %vm170, %v139, 0
    %v307 = vsel %vm170, %v140, 0
    %v310 = vsel %vm170, %v141, 0
    %v313 = vsel %vm170, %v142, 0
    %v316 = vsel %vm170, %v143, 0
    %v319 = vsel %vm170, %v144, 0
    %v322 = vsel %vm170, %v145, 0
    %v325 = vsel %vm170, %v146, 0
    %v328 = vsel %vm170, %v147, 0
    %v331 = vsel %vm170, %v148, 0
    %v334 = vsel %vm170, %v149, 0
    %v337 = vsel %vm170, %v150, 0
    %v340 = vsel %vm170, %v151, 0
    %v343 = vsel %vm170, %v152, 0
    %v346 = vsel %vm170, %v153, 0
    %v349 = vsel %vm170, %v154, 0
    %v352 = vsel %vm170, %v155, 0
    %v355 = vsel %vm170, %v156, 0
    %v358 = vsel %vm170, %v157, 0
    %v361 = vsel %vm170, %v158, 0
    %363 = vmatprep.subr.mxu0 0.0
    %364 = vmatpush1.msra.mxu0 %v159
    %365 = vmatprep.subr.mxu0 0.0
    %366 = vmatpush1.msra.mxu0 %v160
    %367 = vmatprep.subr.mxu0 0.0
    %368 = vmatpush1.msra.mxu0 %v161
    %369 = vmatprep.subr.mxu0 0.0
    %370 = vmatpush1.msra.mxu0 %v162
    %371 = vmatprep.subr.mxu0 0.0
    %372 = vmatpush1.msra.mxu0 0.0
    %373 = vmatprep.subr.mxu0 0.0
    %374 = vmatpush1.msra.mxu0 0.0
    %375 = vmatprep.subr.mxu0 0.0
    %376 = vmatpush1.msra.mxu0 0.0
    %377 = vmatprep.subr.mxu0 0.0
    %378 = vmatpush1.msra.mxu0 0.0
    %379 = vmatprep.subr.mxu0 0.0
    %380 = vmatpush1.msra.mxu0 0.0
    %381 = vmatprep.subr.mxu0 0.0
    %382 = vmatpush1.msra.mxu0 0.0
    %383 = vmatprep.subr.mxu0 0.0
    %384 = vmatpush1.msra.mxu0 0.0
    %385 = vmatprep.subr.mxu0 0.0
    %386 = vmatpush1.msra.mxu0 0.0
    %387 = vmatprep.subr.mxu0 0.0
    %388 = vmatpush1.msra.mxu0 0.0
    %389 = vmatprep.subr.mxu0 0.0
    %390 = vmatpush1.msra.mxu0 0.0
    %391 = vmatprep.subr.mxu0 0.0
    %392 = vmatpush1.msra.mxu0 0.0
    %393 = vmatprep.subr.mxu0 0.0
    %394 = vmatpush1.msra.mxu0 0.0
    %395 = vmatprep.subr.mxu0 0.0
    %396 = vmatpush1.msra.mxu0 0.0
    %397 = vmatprep.subr.mxu0 0.0
    %398 = vmatpush1.msra.mxu0 0.0
    %399 = vmatprep.subr.mxu0 0.0
    %400 = vmatpush1.msra.mxu0 0.0
    %401 = vmatprep.subr.mxu0 0.0
    %402 = vmatpush1.msra.mxu0 0.0
    %403 = vmatprep.subr.mxu0 0.0
    %404 = vmatpush1.msra.mxu0 0.0
    %405 = vmatprep.subr.mxu0 0.0
    %406 = vmatpush1.msra.mxu0 0.0
    %407 = vmatprep.subr.mxu0 0.0
    %408 = vmatpush1.msra.mxu0 0.0
    %409 = vmatprep.subr.mxu0 0.0
    %410 = vmatpush1.msra.mxu0 0.0
    %411 = vmatprep.subr.mxu0 0.0
    %412 = vmatpush1.msra.mxu0 0.0
    %413 = vmatprep.subr.mxu0 0.0
    %414 = vmatpush1.msra.mxu0 0.0
    %415 = vmatprep.subr.mxu0 0.0
    %416 = vmatpush1.msra.mxu0 0.0
    %417 = vmatprep.subr.mxu0 0.0
    %418 = vmatpush1.msra.mxu0 0.0
    %419 = vmatprep.subr.mxu0 0.0
    %420 = vmatpush1.msra.mxu0 0.0
    %421 = vmatprep.subr.mxu0 0.0
    %422 = vmatpush1.msra.mxu0 0.0
    %423 = vmatprep.subr.mxu0 0.0
    %424 = vmatpush1.msra.mxu0 0.0
    %425 = vmatprep.subr.mxu0 0.0
    %426 = vmatpush1.msra.mxu0 0.0
    %427 = vmatprep.mubr.f32.mxu0 0.0
    %428 = vmatmul.mubr.f32.gmra.mrb[0].mxu0 %v172
    %v429 = vpop.f32.mrb[0].mxu0
    %v430 = vadd.f32 %v168, %v429
    %v431 = vpop.f32.mrb[0].mxu0
    %432 = vmatprep.mubr.f32.mxu0 0.0
    %433 = vmatmul.mubr.f32.gmra.mrb[0].mxu0 %v175
    %v434 = vpop.f32.mrb[0].mxu0
    %v435 = vadd.f32 %v168, %v434
    %v436 = vpop.f32.mrb[0].mxu0
    %437 = vmatprep.mubr.f32.mxu0 0.0
    %438 = vmatmul.mubr.f32.gmra.mrb[0].mxu0 %v178
    %v439 = vpop.f32.mrb[0].mxu0
    %v440 = vadd.f32 %v168, %v439
    %v441 = vpop.f32.mrb[0].mxu0
    %442 = vmatprep.mubr.f32.mxu0 0.0
    %443 = vmatmul.mubr.f32.gmra.mrb[0].mxu0 %v181
    %v444 = vpop.f32.mrb[0].mxu0
    %v445 = vadd.f32 %v168, %v444
    %v446 = vpop.f32.mrb[0].mxu0
    %447 = vmatprep.mubr.f32.mxu0 0.0
    %448 = vmatmul.mubr.f32.gmra.mrb[0].mxu0 %v184
    %v449 = vpop.f32.mrb[0].mxu0
    %v450 = vadd.f32 %v168, %v449
    %v451 = vpop.f32.mrb[0].mxu0
    %452 = vmatprep.mubr.f32.mxu0 0.0
    %453 = vmatmul.mubr.f32.gmra.mrb[0].mxu0 %v187
    %v454 = vpop.f32.mrb[0].mxu0
    %v455 = vadd.f32 %v168, %v454
    %v456 = vpop.f32.mrb[0].mxu0
    %457 = vmatprep.mubr.f32.mxu0 0.0
    %458 = vmatmul.mubr.f32.gmra.mrb[0].mxu0 %v190
    %v459 = vpop.f32.mrb[0].mxu0
    %v460 = vadd.f32 %v168, %v459
    %v461 = vpop.f32.mrb[0].mxu0
    %462 = vmatprep.mubr.f32.mxu0 0.0
    %463 = vmatmul.mubr.f32.gmra.mrb[0].mxu0 %v193
    %v464 = vpop.f32.mrb[0].mxu0
    %v465 = vadd.f32 %v168, %v464
    %v466 = vpop.f32.mrb[0].mxu0
    %467 = vmatprep.mubr.f32.mxu0 0.0
    %468 = vmatmul.mubr.f32.gmra.mrb[0].mxu0 %v196
    %v469 = vpop.f32.mrb[0].mxu0
    %v470 = vadd.f32 %v168, %v469
    %v471 = vpop.f32.mrb[0].mxu0
    %472 = vmatprep.mubr.f32.mxu0 0.0
    %473 = vmatmul.mubr.f32.gmra.mrb[0].mxu0 %v199
    %v474 = vpop.f32.mrb[0].mxu0
    %v475 = vadd.f32 %v168, %v474
    %v476 = vpop.f32.mrb[0].mxu0
    %477 = vmatprep.mubr.f32.mxu0 0.0
    %478 = vmatmul.mubr.f32.gmra.mrb[0].mxu0 %v202
    %v479 = vpop.f32.mrb[0].mxu0
    %v480 = vadd.f32 %v168, %v479
    %v481 = vpop.f32.mrb[0].mxu0
    %482 = vmatprep.mubr.f32.mxu0 0.0
    %483 = vmatmul.mubr.f32.gmra.mrb[0].mxu0 %v205
    %v484 = vpop.f32.mrb[0].mxu0
    %v485 = vadd.f32 %v168, %v484
    %v486 = vpop.f32.mrb[0].mxu0
    %487 = vmatprep.mubr.f32.mxu0 0.0
    %488 = vmatmul.mubr.f32.gmra.mrb[0].mxu0 %v208
    %v489 = vpop.f32.mrb[0].mxu0
    %v490 = vadd.f32 %v168, %v489
    %v491 = vpop.f32.mrb[0].mxu0
    %492 = vmatprep.mubr.f32.mxu0 0.0
    %493 = vmatmul.mubr.f32.gmra.mrb[0].mxu0 %v211
    %v494 = vpop.f32.mrb[0].mxu0
    %v495 = vadd.f32 %v168, %v494
    %v496 = vpop.f32.mrb[0].mxu0
    %497 = vmatprep.mubr.f32.mxu0 0.0
    %498 = vmatmul.mubr.f32.gmra.mrb[0].mxu0 %v214
    %v499 = vpop.f32.mrb[0].mxu0
    %v500 = vadd.f32 %v168, %v499
    %v501 = vpop.f32.mrb[0].mxu0
    %502 = vmatprep.mubr.f32.mxu0 0.0
    %503 = vmatmul.mubr.f32.gmra.mrb[0].mxu0 %v217
    %v504 = vpop.f32.mrb[0].mxu0
    %v505 = vadd.f32 %v168, %v504
    %v506 = vpop.f32.mrb[0].mxu0
    %507 = vmatprep.mubr.f32.mxu0 0.0
    %508 = vmatmul.mubr.f32.gmra.mrb[0].mxu0 %v220
    %v509 = vpop.f32.mrb[0].mxu0
    %v510 = vadd.f32 %v168, %v509
    %v511 = vpop.f32.mrb[0].mxu0
    %512 = vmatprep.mubr.f32.mxu0 0.0
    %513 = vmatmul.mubr.f32.gmra.mrb[0].mxu0 %v223
    %v514 = vpop.f32.mrb[0].mxu0
    %v515 = vadd.f32 %v168, %v514
    %v516 = vpop.f32.mrb[0].mxu0
    %517 = vmatprep.mubr.f32.mxu0 0.0
    %518 = vmatmul.mubr.f32.gmra.mrb[0].mxu0 %v226
    %v519 = vpop.f32.mrb[0].mxu0
    %v520 = vadd.f32 %v168, %v519
    %v521 = vpop.f32.mrb[0].mxu0
    %522 = vmatprep.mubr.f32.mxu0 0.0
    %523 = vmatmul.mubr.f32.gmra.mrb[0].mxu0 %v229
    %v524 = vpop.f32.mrb[0].mxu0
    %v525 = vadd.f32 %v168, %v524
    %v526 = vpop.f32.mrb[0].mxu0
    %527 = vmatprep.mubr.f32.mxu0 0.0
    %528 = vmatmul.mubr.f32.gmra.mrb[0].mxu0 %v232
    %v529 = vpop.f32.mrb[0].mxu0
    %v530 = vadd.f32 %v168, %v529
    %v531 = vpop.f32.mrb[0].mxu0
    %532 = vmatprep.mubr.f32.mxu0 0.0
    %533 = vmatmul.mubr.f32.gmra.mrb[0].mxu0 %v235
    %v534 = vpop.f32.mrb[0].mxu0
    %v535 = vadd.f32 %v168, %v534
    %v536 = vpop.f32.mrb[0].mxu0
    %537 = vmatprep.mubr.f32.mxu0 0.0
    %538 = vmatmul.mubr.f32.gmra.mrb[0].mxu0 %v238
    %v539 = vpop.f32.mrb[0].mxu0
    %v540 = vadd.f32 %v168, %v539
    %v541 = vpop.f32.mrb[0].mxu0
    %542 = vmatprep.mubr.f32.mxu0 0.0
    %543 = vmatmul.mubr.f32.gmra.mrb[0].mxu0 %v241
    %v544 = vpop.f32.mrb[0].mxu0
    %v545 = vadd.f32 %v168, %v544
    %v546 = vpop.f32.mrb[0].mxu0
    %547 = vmatprep.mubr.f32.mxu0 0.0
    %548 = vmatmul.mubr.f32.gmra.mrb[0].mxu0 %v244
    %v549 = vpop.f32.mrb[0].mxu0
    %v550 = vadd.f32 %v168, %v549
    %v551 = vpop.f32.mrb[0].mxu0
    %552 = vmatprep.mubr.f32.mxu0 0.0
    %553 = vmatmul.mubr.f32.gmra.mrb[0].mxu0 %v247
    %v554 = vpop.f32.mrb[0].mxu0
    %v555 = vadd.f32 %v168, %v554
    %v556 = vpop.f32.mrb[0].mxu0
    %557 = vmatprep.mubr.f32.mxu0 0.0
    %558 = vmatmul.mubr.f32.gmra.mrb[0].mxu0 %v250
    %v559 = vpop.f32.mrb[0].mxu0
    %v560 = vadd.f32 %v168, %v559
    %v561 = vpop.f32.mrb[0].mxu0
    %562 = vmatprep.mubr.f32.mxu0 0.0
    %563 = vmatmul.mubr.f32.gmra.mrb[0].mxu0 %v253
    %v564 = vpop.f32.mrb[0].mxu0
    %v565 = vadd.f32 %v168, %v564
    %v566 = vpop.f32.mrb[0].mxu0
    %567 = vmatprep.mubr.f32.mxu0 0.0
    %568 = vmatmul.mubr.f32.gmra.mrb[0].mxu0 %v256
    %v569 = vpop.f32.mrb[0].mxu0
    %v570 = vadd.f32 %v168, %v569
    %v571 = vpop.f32.mrb[0].mxu0
    %572 = vmatprep.mubr.f32.mxu0 0.0
    %573 = vmatmul.mubr.f32.gmra.mrb[0].mxu0 %v259
    %v574 = vpop.f32.mrb[0].mxu0
    %v575 = vadd.f32 %v168, %v574
    %v576 = vpop.f32.mrb[0].mxu0
    %577 = vmatprep.mubr.f32.mxu0 0.0
    %578 = vmatmul.mubr.f32.gmra.mrb[0].mxu0 %v262
    %v579 = vpop.f32.mrb[0].mxu0
    %v580 = vadd.f32 %v168, %v579
    %v581 = vpop.f32.mrb[0].mxu0
    %582 = vmatprep.mubr.f32.mxu0 0.0
    %583 = vmatmul.mubr.f32.gmra.mrb[0].mxu0 %v265
    %v584 = vpop.f32.mrb[0].mxu0
    %v585 = vadd.f32 %v168, %v584
    %v586 = vpop.f32.mrb[0].mxu0
    %587 = vmatprep.mubr.f32.mxu0 0.0
    %588 = vmatmul.mubr.f32.gmra.mrb[0].mxu0 %v268
    %v589 = vpop.f32.mrb[0].mxu0
    %v590 = vadd.f32 %v168, %v589
    %v591 = vpop.f32.mrb[0].mxu0
    %592 = vmatprep.mubr.f32.mxu0 0.0
    %593 = vmatmul.mubr.f32.gmra.mrb[0].mxu0 %v271
    %v594 = vpop.f32.mrb[0].mxu0
    %v595 = vadd.f32 %v168, %v594
    %v596 = vpop.f32.mrb[0].mxu0
    %597 = vmatprep.mubr.f32.mxu0 0.0
    %598 = vmatmul.mubr.f32.gmra.mrb[0].mxu0 %v274
    %v599 = vpop.f32.mrb[0].mxu0
    %v600 = vadd.f32 %v168, %v599
    %v601 = vpop.f32.mrb[0].mxu0
    %602 = vmatprep.mubr.f32.mxu0 0.0
    %603 = vmatmul.mubr.f32.gmra.mrb[0].mxu0 %v277
    %v604 = vpop.f32.mrb[0].mxu0
    %v605 = vadd.f32 %v168, %v604
    %v606 = vpop.f32.mrb[0].mxu0
    %607 = vmatprep.mubr.f32.mxu0 0.0
    %608 = vmatmul.mubr.f32.gmra.mrb[0].mxu0 %v280
    %v609 = vpop.f32.mrb[0].mxu0
    %v610 = vadd.f32 %v168, %v609
    %v611 = vpop.f32.mrb[0].mxu0
    %612 = vmatprep.mubr.f32.mxu0 0.0
    %613 = vmatmul.mubr.f32.gmra.mrb[0].mxu0 %v283
    %v614 = vpop.f32.mrb[0].mxu0
    %v615 = vadd.f32 %v168, %v614
    %v616 = vpop.f32.mrb[0].mxu0
    %617 = vmatprep.mubr.f32.mxu0 0.0
    %618 = vmatmul.mubr.f32.gmra.mrb[0].mxu0 %v286
    %v619 = vpop.f32.mrb[0].mxu0
    %v620 = vadd.f32 %v168, %v619
    %v621 = vpop.f32.mrb[0].mxu0
    %622 = vmatprep.mubr.f32.mxu0 0.0
    %623 = vmatmul.mubr.f32.gmra.mrb[0].mxu0 %v289
    %v624 = vpop.f32.mrb[0].mxu0
    %v625 = vadd.f32 %v168, %v624
    %v626 = vpop.f32.mrb[0].mxu0
    %627 = vmatprep.mubr.f32.mxu0 0.0
    %628 = vmatmul.mubr.f32.gmra.mrb[0].mxu0 %v292
    %v629 = vpop.f32.mrb[0].mxu0
    %v630 = vadd.f32 %v168, %v629
    %v631 = vpop.f32.mrb[0].mxu0
    %632 = vmatprep.mubr.f32.mxu0 0.0
    %633 = vmatmul.mubr.f32.gmra.mrb[0].mxu0 %v295
    %v634 = vpop.f32.mrb[0].mxu0
    %v635 = vadd.f32 %v168, %v634
    %v636 = vpop.f32.mrb[0].mxu0
    %637 = vmatprep.mubr.f32.mxu0 0.0
    %638 = vmatmul.mubr.f32.gmra.mrb[0].mxu0 %v298
    %v639 = vpop.f32.mrb[0].mxu0
    %v640 = vadd.f32 %v168, %v639
    %v641 = vpop.f32.mrb[0].mxu0
    %642 = vmatprep.mubr.f32.mxu0 0.0
    %643 = vmatmul.mubr.f32.gmra.mrb[0].mxu0 %v301
    %v644 = vpop.f32.mrb[0].mxu0
    %v645 = vadd.f32 %v168, %v644
    %v646 = vpop.f32.mrb[0].mxu0
    %647 = vmatprep.mubr.f32.mxu0 0.0
    %648 = vmatmul.mubr.f32.gmra.mrb[0].mxu0 %v304
    %v649 = vpop.f32.mrb[0].mxu0
    %v650 = vadd.f32 %v168, %v649
    %v651 = vpop.f32.mrb[0].mxu0
    %652 = vmatprep.mubr.f32.mxu0 0.0
    %653 = vmatmul.mubr.f32.gmra.mrb[0].mxu0 %v307
    %v654 = vpop.f32.mrb[0].mxu0
    %v655 = vadd.f32 %v168, %v654
    %v656 = vpop.f32.mrb[0].mxu0
    %657 = vmatprep.mubr.f32.mxu0 0.0
    %658 = vmatmul.mubr.f32.gmra.mrb[0].mxu0 %v310
    %v659 = vpop.f32.mrb[0].mxu0
    %v660 = vadd.f32 %v168, %v659
    %v661 = vpop.f32.mrb[0].mxu0
    %662 = vmatprep.mubr.f32.mxu0 0.0
    %663 = vmatmul.mubr.f32.gmra.mrb[0].mxu0 %v313
    %v664 = vpop.f32.mrb[0].mxu0
    %v665 = vadd.f32 %v168, %v664
    %v666 = vpop.f32.mrb[0].mxu0
    %667 = vmatprep.mubr.f32.mxu0 0.0
    %668 = vmatmul.mubr.f32.gmra.mrb[0].mxu0 %v316
    %v669 = vpop.f32.mrb[0].mxu0
    %v670 = vadd.f32 %v168, %v669
    %v671 = vpop.f32.mrb[0].mxu0
    %672 = vmatprep.mubr.f32.mxu0 0.0
    %673 = vmatmul.mubr.f32.gmra.mrb[0].mxu0 %v319
    %v674 = vpop.f32.mrb[0].mxu0
    %v675 = vadd.f32 %v168, %v674
    %v676 = vpop.f32.mrb[0].mxu0
    %677 = vmatprep.mubr.f32.mxu0 0.0
    %678 = vmatmul.mubr.f32.gmra.mrb[0].mxu0 %v322
    %v679 = vpop.f32.mrb[0].mxu0
    %v680 = vadd.f32 %v168, %v679
    %v681 = vpop.f32.mrb[0].mxu0
    %682 = vmatprep.mubr.f32.mxu0 0.0
    %683 = vmatmul.mubr.f32.gmra.mrb[0].mxu0 %v325
    %v684 = vpop.f32.mrb[0].mxu0
    %v685 = vadd.f32 %v168, %v684
    %v686 = vpop.f32.mrb[0].mxu0
    %687 = vmatprep.mubr.f32.mxu0 0.0
    %688 = vmatmul.mubr.f32.gmra.mrb[0].mxu0 %v328
    %v689 = vpop.f32.mrb[0].mxu0
    %v690 = vadd.f32 %v168, %v689
    %v691 = vpop.f32.mrb[0].mxu0
    %692 = vmatprep.mubr.f32.mxu0 0.0
    %693 = vmatmul.mubr.f32.gmra.mrb[0].mxu0 %v331
    %v694 = vpop.f32.mrb[0].mxu0
    %v695 = vadd.f32 %v168, %v694
    %v696 = vpop.f32.mrb[0].mxu0
    %697 = vmatprep.mubr.f32.mxu0 0.0
    %698 = vmatmul.mubr.f32.gmra.mrb[0].mxu0 %v334
    %v699 = vpop.f32.mrb[0].mxu0
    %v700 = vadd.f32 %v168, %v699
    %v701 = vpop.f32.mrb[0].mxu0
    %702 = vmatprep.mubr.f32.mxu0 0.0
    %703 = vmatmul.mubr.f32.gmra.mrb[0].mxu0 %v337
    %v704 = vpop.f32.mrb[0].mxu0
    %v705 = vadd.f32 %v168, %v704
    %v706 = vpop.f32.mrb[0].mxu0
    %707 = vmatprep.mubr.f32.mxu0 0.0
    %708 = vmatmul.mubr.f32.gmra.mrb[0].mxu0 %v340
    %v709 = vpop.f32.mrb[0].mxu0
    %v710 = vadd.f32 %v168, %v709
    %v711 = vpop.f32.mrb[0].mxu0
    %712 = vmatprep.mubr.f32.mxu0 0.0
    %713 = vmatmul.mubr.f32.gmra.mrb[0].mxu0 %v343
    %v714 = vpop.f32.mrb[0].mxu0
    %v715 = vadd.f32 %v168, %v714
    %v716 = vpop.f32.mrb[0].mxu0
    %717 = vmatprep.mubr.f32.mxu0 0.0
    %718 = vmatmul.mubr.f32.gmra.mrb[0].mxu0 %v346
    %v719 = vpop.f32.mrb[0].mxu0
    %v720 = vadd.f32 %v168, %v719
    %v721 = vpop.f32.mrb[0].mxu0
    %722 = vmatprep.mubr.f32.mxu0 0.0
    %723 = vmatmul.mubr.f32.gmra.mrb[0].mxu0 %v349
    %v724 = vpop.f32.mrb[0].mxu0
    %v725 = vadd.f32 %v168, %v724
    %v726 = vpop.f32.mrb[0].mxu0
    %727 = vmatprep.mubr.f32.mxu0 0.0
    %728 = vmatmul.mubr.f32.gmra.mrb[0].mxu0 %v352
    %v729 = vpop.f32.mrb[0].mxu0
    %v730 = vadd.f32 %v168, %v729
    %v731 = vpop.f32.mrb[0].mxu0
    %732 = vmatprep.mubr.f32.mxu0 0.0
    %733 = vmatmul.mubr.f32.gmra.mrb[0].mxu0 %v355
    %v734 = vpop.f32.mrb[0].mxu0
    %v735 = vadd.f32 %v168, %v734
    %v736 = vpop.f32.mrb[0].mxu0
    %737 = vmatprep.mubr.f32.mxu0 0.0
    %738 = vmatmul.mubr.f32.gmra.mrb[0].mxu0 %v358
    %v739 = vpop.f32.mrb[0].mxu0
    %v740 = vadd.f32 %v168, %v739
    %v741 = vpop.f32.mrb[0].mxu0
    %742 = vmatprep.mubr.f32.mxu0 0.0
    %743 = vmatmul.mubr.f32.gmra.mrb[0].mxu0 %v361
    %v744 = vpop.f32.mrb[0].mxu0
    %v745 = vadd.f32 %v168, %v744
    %v746 = vpop.f32.mrb[0].mxu0
    %747 = vdwg.mxu0
    %v748 = vld [vmem:[%s3] sm:$0xff]
    %v749 = vld [vmem:[%s3 + $0x8] sm:$0xff]
    %v750 = vld [vmem:[%s3 + $0x10] sm:$0xff]
    %v751 = vld [vmem:[%s3 + $0x18] sm:$0xff]
    %v752 = vld [vmem:[%s4] sm:$0x1]
    %v754 = vlaneseq
    %v755 = vshrl.u32 %v754, 7
    %v756 = vsub.s32 0, %v755
    %v757 = vrot.slane %v752, %v756
    %759 = vmatprep.subr.mxu0 0.0
    %760 = vmatpush1.msra.mxu0 %v748
    %761 = vmatprep.subr.mxu0 0.0
    %762 = vmatpush1.msra.mxu0 %v749
    %763 = vmatprep.subr.mxu0 0.0
    %764 = vmatpush1.msra.mxu0 %v750
    %765 = vmatprep.subr.mxu0 0.0
    %766 = vmatpush1.msra.mxu0 %v751
    %767 = vmatprep.subr.mxu0 0.0
    %768 = vmatpush1.msra.mxu0 0.0
    %769 = vmatprep.subr.mxu0 0.0
    %770 = vmatpush1.msra.mxu0 0.0
    %771 = vmatprep.subr.mxu0 0.0
    %772 = vmatpush1.msra.mxu0 0.0
    %773 = vmatprep.subr.mxu0 0.0
    %774 = vmatpush1.msra.mxu0 0.0
    %775 = vmatprep.subr.mxu0 0.0
    %776 = vmatpush1.msra.mxu0 0.0
    %777 = vmatprep.subr.mxu0 0.0
    %778 = vmatpush1.msra.mxu0 0.0
    %779 = vmatprep.subr.mxu0 0.0
    %780 = vmatpush1.msra.mxu0 0.0
    %781 = vmatprep.subr.mxu0 0.0
    %782 = vmatpush1.msra.mxu0 0.0
    %783 = vmatprep.subr.mxu0 0.0
    %784 = vmatpush1.msra.mxu0 0.0
    %785 = vmatprep.subr.mxu0 0.0
    %786 = vmatpush1.msra.mxu0 0.0
    %787 = vmatprep.subr.mxu0 0.0
    %788 = vmatpush1.msra.mxu0 0.0
    %789 = vmatprep.subr.mxu0 0.0
    %790 = vmatpush1.msra.mxu0 0.0
    %791 = vmatprep.subr.mxu0 0.0
    %792 = vmatpush1.msra.mxu0 0.0
    %793 = vmatprep.subr.mxu0 0.0
    %794 = vmatpush1.msra.mxu0 0.0
    %795 = vmatprep.subr.mxu0 0.0
    %796 = vmatpush1.msra.mxu0 0.0
    %797 = vmatprep.subr.mxu0 0.0
    %798 = vmatpush1.msra.mxu0 0.0
    %799 = vmatprep.subr.mxu0 0.0
    %800 = vmatpush1.msra.mxu0 0.0
    %801 = vmatprep.subr.mxu0 0.0
    %802 = vmatpush1.msra.mxu0 0.0
    %803 = vmatprep.subr.mxu0 0.0
    %804 = vmatpush1.msra.mxu0 0.0
    %805 = vmatprep.subr.mxu0 0.0
    %806 = vmatpush1.msra.mxu0 0.0
    %807 = vmatprep.subr.mxu0 0.0
    %808 = vmatpush1.msra.mxu0 0.0
    %809 = vmatprep.subr.mxu0 0.0
    %810 = vmatpush1.msra.mxu0 0.0
    %811 = vmatprep.subr.mxu0 0.0
    %812 = vmatpush1.msra.mxu0 0.0
    %813 = vmatprep.subr.mxu0 0.0
    %814 = vmatpush1.msra.mxu0 0.0
    %815 = vmatprep.subr.mxu0 0.0
    %816 = vmatpush1.msra.mxu0 0.0
    %817 = vmatprep.subr.mxu0 0.0
    %818 = vmatpush1.msra.mxu0 0.0
    %819 = vmatprep.subr.mxu0 0.0
    %820 = vmatpush1.msra.mxu0 0.0
    %821 = vmatprep.subr.mxu0 0.0
    %822 = vmatpush1.msra.mxu0 0.0
    %823 = vmatprep.mubr.f32.mxu0 0.0
    %824 = vmatmul.mubr.f32.gmra.mrb[0].mxu0 %v172
    %v825 = vpop.f32.mrb[0].mxu0
    %v826 = vadd.f32 %v757, %v825
    %v827 = vpop.f32.mrb[0].mxu0
    %828 = vmatprep.mubr.f32.mxu0 0.0
    %829 = vmatmul.mubr.f32.gmra.mrb[0].mxu0 %v175
    %v830 = vpop.f32.mrb[0].mxu0
    %v831 = vadd.f32 %v757, %v830
    %v832 = vpop.f32.mrb[0].mxu0
    %833 = vmatprep.mubr.f32.mxu0 0.0
    %834 = vmatmul.mubr.f32.gmra.mrb[0].mxu0 %v178
    %v835 = vpop.f32.mrb[0].mxu0
    %v836 = vadd.f32 %v757, %v835
    %v837 = vpop.f32.mrb[0].mxu0
    %838 = vmatprep.mubr.f32.mxu0 0.0
    %839 = vmatmul.mubr.f32.gmra.mrb[0].mxu0 %v181
    %v840 = vpop.f32.mrb[0].mxu0
    %v841 = vadd.f32 %v757, %v840
    %v842 = vpop.f32.mrb[0].mxu0
    %843 = vmatprep.mubr.f32.mxu0 0.0
    %844 = vmatmul.mubr.f32.gmra.mrb[0].mxu0 %v184
    %v845 = vpop.f32.mrb[0].mxu0
    %v846 = vadd.f32 %v757, %v845
    %v847 = vpop.f32.mrb[0].mxu0
    %848 = vmatprep.mubr.f32.mxu0 0.0
    %849 = vmatmul.mubr.f32.gmra.mrb[0].mxu0 %v187
    %v850 = vpop.f32.mrb[0].mxu0
    %v851 = vadd.f32 %v757, %v850
    %v852 = vpop.f32.mrb[0].mxu0
    %853 = vmatprep.mubr.f32.mxu0 0.0
    %854 = vmatmul.mubr.f32.gmra.mrb[0].mxu0 %v190
    %v855 = vpop.f32.mrb[0].mxu0
    %v856 = vadd.f32 %v757, %v855
    %v857 = vpop.f32.mrb[0].mxu0
    %858 = vmatprep.mubr.f32.mxu0 0.0
    %859 = vmatmul.mubr.f32.gmra.mrb[0].mxu0 %v193
    %v860 = vpop.f32.mrb[0].mxu0
    %v861 = vadd.f32 %v757, %v860
    %v862 = vpop.f32.mrb[0].mxu0
    %863 = vmatprep.mubr.f32.mxu0 0.0
    %864 = vmatmul.mubr.f32.gmra.mrb[0].mxu0 %v196
    %v865 = vpop.f32.mrb[0].mxu0
    %v866 = vadd.f32 %v757, %v865
    %v867 = vpop.f32.mrb[0].mxu0
    %868 = vmatprep.mubr.f32.mxu0 0.0
    %869 = vmatmul.mubr.f32.gmra.mrb[0].mxu0 %v199
    %v870 = vpop.f32.mrb[0].mxu0
    %v871 = vadd.f32 %v757, %v870
    %v872 = vpop.f32.mrb[0].mxu0
    %873 = vmatprep.mubr.f32.mxu0 0.0
    %874 = vmatmul.mubr.f32.gmra.mrb[0].mxu0 %v202
    %v875 = vpop.f32.mrb[0].mxu0
    %v876 = vadd.f32 %v757, %v875
    %v877 = vpop.f32.mrb[0].mxu0
    %878 = vmatprep.mubr.f32.mxu0 0.0
    %879 = vmatmul.mubr.f32.gmra.mrb[0].mxu0 %v205
    %v880 = vpop.f32.mrb[0].mxu0
    %v881 = vadd.f32 %v757, %v880
    %v882 = vpop.f32.mrb[0].mxu0
    %883 = vmatprep.mubr.f32.mxu0 0.0
    %884 = vmatmul.mubr.f32.gmra.mrb[0].mxu0 %v208
    %v885 = vpop.f32.mrb[0].mxu0
    %v886 = vadd.f32 %v757, %v885
    %v887 = vpop.f32.mrb[0].mxu0
    %888 = vmatprep.mubr.f32.mxu0 0.0
    %889 = vmatmul.mubr.f32.gmra.mrb[0].mxu0 %v211
    %v890 = vpop.f32.mrb[0].mxu0
    %v891 = vadd.f32 %v757, %v890
    %v892 = vpop.f32.mrb[0].mxu0
    %893 = vmatprep.mubr.f32.mxu0 0.0
    %894 = vmatmul.mubr.f32.gmra.mrb[0].mxu0 %v214
    %v895 = vpop.f32.mrb[0].mxu0
    %v896 = vadd.f32 %v757, %v895
    %v897 = vpop.f32.mrb[0].mxu0
    %898 = vmatprep.mubr.f32.mxu0 0.0
    %899 = vmatmul.mubr.f32.gmra.mrb[0].mxu0 %v217
    %v900 = vpop.f32.mrb[0].mxu0
    %v901 = vadd.f32 %v757, %v900
    %v902 = vpop.f32.mrb[0].mxu0
    %903 = vmatprep.mubr.f32.mxu0 0.0
    %904 = vmatmul.mubr.f32.gmra.mrb[0].mxu0 %v220
    %v905 = vpop.f32.mrb[0].mxu0
    %v906 = vadd.f32 %v757, %v905
    %v907 = vpop.f32.mrb[0].mxu0
    %908 = vmatprep.mubr.f32.mxu0 0.0
    %909 = vmatmul.mubr.f32.gmra.mrb[0].mxu0 %v223
    %v910 = vpop.f32.mrb[0].mxu0
    %v911 = vadd.f32 %v757, %v910
    %v912 = vpop.f32.mrb[0].mxu0
    %913 = vmatprep.mubr.f32.mxu0 0.0
    %914 = vmatmul.mubr.f32.gmra.mrb[0].mxu0 %v226
    %v915 = vpop.f32.mrb[0].mxu0
    %v916 = vadd.f32 %v757, %v915
    %v917 = vpop.f32.mrb[0].mxu0
    %918 = vmatprep.mubr.f32.mxu0 0.0
    %919 = vmatmul.mubr.f32.gmra.mrb[0].mxu0 %v229
    %v920 = vpop.f32.mrb[0].mxu0
    %v921 = vadd.f32 %v757, %v920
    %v922 = vpop.f32.mrb[0].mxu0
    %923 = vmatprep.mubr.f32.mxu0 0.0
    %924 = vmatmul.mubr.f32.gmra.mrb[0].mxu0 %v232
    %v925 = vpop.f32.mrb[0].mxu0
    %v926 = vadd.f32 %v757, %v925
    %v927 = vpop.f32.mrb[0].mxu0
    %928 = vmatprep.mubr.f32.mxu0 0.0
    %929 = vmatmul.mubr.f32.gmra.mrb[0].mxu0 %v235
    %v930 = vpop.f32.mrb[0].mxu0
    %v931 = vadd.f32 %v757, %v930
    %v932 = vpop.f32.mrb[0].mxu0
    %933 = vmatprep.mubr.f32.mxu0 0.0
    %934 = vmatmul.mubr.f32.gmra.mrb[0].mxu0 %v238
    %v935 = vpop.f32.mrb[0].mxu0
    %v936 = vadd.f32 %v757, %v935
    %v937 = vpop.f32.mrb[0].mxu0
    %938 = vmatprep.mubr.f32.mxu0 0.0
    %939 = vmatmul.mubr.f32.gmra.mrb[0].mxu0 %v241
    %v940 = vpop.f32.mrb[0].mxu0
    %v941 = vadd.f32 %v757, %v940
    %v942 = vpop.f32.mrb[0].mxu0
    %943 = vmatprep.mubr.f32.mxu0 0.0
    %944 = vmatmul.mubr.f32.gmra.mrb[0].mxu0 %v244
    %v945 = vpop.f32.mrb[0].mxu0
    %v946 = vadd.f32 %v757, %v945
    %v947 = vpop.f32.mrb[0].mxu0
    %948 = vmatprep.mubr.f32.mxu0 0.0
    %949 = vmatmul.mubr.f32.gmra.mrb[0].mxu0 %v247
    %v950 = vpop.f32.mrb[0].mxu0
    %v951 = vadd.f32 %v757, %v950
    %v952 = vpop.f32.mrb[0].mxu0
    %953 = vmatprep.mubr.f32.mxu0 0.0
    %954 = vmatmul.mubr.f32.gmra.mrb[0].mxu0 %v250
    %v955 = vpop.f32.mrb[0].mxu0
    %v956 = vadd.f32 %v757, %v955
    %v957 = vpop.f32.mrb[0].mxu0
    %958 = vmatprep.mubr.f32.mxu0 0.0
    %959 = vmatmul.mubr.f32.gmra.mrb[0].mxu0 %v253
    %v960 = vpop.f32.mrb[0].mxu0
    %v961 = vadd.f32 %v757, %v960
    %v962 = vpop.f32.mrb[0].mxu0
    %963 = vmatprep.mubr.f32.mxu0 0.0
    %964 = vmatmul.mubr.f32.gmra.mrb[0].mxu0 %v256
    %v965 = vpop.f32.mrb[0].mxu0
    %v966 = vadd.f32 %v757, %v965
    %v967 = vpop.f32.mrb[0].mxu0
    %968 = vmatprep.mubr.f32.mxu0 0.0
    %969 = vmatmul.mubr.f32.gmra.mrb[0].mxu0 %v259
    %v970 = vpop.f32.mrb[0].mxu0
    %v971 = vadd.f32 %v757, %v970
    %v972 = vpop.f32.mrb[0].mxu0
    %973 = vmatprep.mubr.f32.mxu0 0.0
    %974 = vmatmul.mubr.f32.gmra.mrb[0].mxu0 %v262
    %v975 = vpop.f32.mrb[0].mxu0
    %v976 = vadd.f32 %v757, %v975
    %v977 = vpop.f32.mrb[0].mxu0
    %978 = vmatprep.mubr.f32.mxu0 0.0
    %979 = vmatmul.mubr.f32.gmra.mrb[0].mxu0 %v265
    %v980 = vpop.f32.mrb[0].mxu0
    %v981 = vadd.f32 %v757, %v980
    %v982 = vpop.f32.mrb[0].mxu0
    %983 = vmatprep.mubr.f32.mxu0 0.0
    %984 = vmatmul.mubr.f32.gmra.mrb[0].mxu0 %v268
    %v985 = vpop.f32.mrb[0].mxu0
    %v986 = vadd.f32 %v757, %v985
    %v987 = vpop.f32.mrb[0].mxu0
    %988 = vmatprep.mubr.f32.mxu0 0.0
    %989 = vmatmul.mubr.f32.gmra.mrb[0].mxu0 %v271
    %v990 = vpop.f32.mrb[0].mxu0
    %v991 = vadd.f32 %v757, %v990
    %v992 = vpop.f32.mrb[0].mxu0
    %993 = vmatprep.mubr.f32.mxu0 0.0
    %994 = vmatmul.mubr.f32.gmra.mrb[0].mxu0 %v274
    %v995 = vpop.f32.mrb[0].mxu0
    %v996 = vadd.f32 %v757, %v995
    %v997 = vpop.f32.mrb[0].mxu0
    %998 = vmatprep.mubr.f32.mxu0 0.0
    %999 = vmatmul.mubr.f32.gmra.mrb[0].mxu0 %v277
    %v1000 = vpop.f32.mrb[0].mxu0
    %v1001 = vadd.f32 %v757, %v1000
    %v1002 = vpop.f32.mrb[0].mxu0
    %1003 = vmatprep.mubr.f32.mxu0 0.0
    %1004 = vmatmul.mubr.f32.gmra.mrb[0].mxu0 %v280
    %v1005 = vpop.f32.mrb[0].mxu0
    %v1006 = vadd.f32 %v757, %v1005
    %v1007 = vpop.f32.mrb[0].mxu0
    %1008 = vmatprep.mubr.f32.mxu0 0.0
    %1009 = vmatmul.mubr.f32.gmra.mrb[0].mxu0 %v283
    %v1010 = vpop.f32.mrb[0].mxu0
    %v1011 = vadd.f32 %v757, %v1010
    %v1012 = vpop.f32.mrb[0].mxu0
    %1013 = vmatprep.mubr.f32.mxu0 0.0
    %1014 = vmatmul.mubr.f32.gmra.mrb[0].mxu0 %v286
    %v1015 = vpop.f32.mrb[0].mxu0
    %v1016 = vadd.f32 %v757, %v1015
    %v1017 = vpop.f32.mrb[0].mxu0
    %1018 = vmatprep.mubr.f32.mxu0 0.0
    %1019 = vmatmul.mubr.f32.gmra.mrb[0].mxu0 %v289
    %v1020 = vpop.f32.mrb[0].mxu0
    %v1021 = vadd.f32 %v757, %v1020
    %v1022 = vpop.f32.mrb[0].mxu0
    %1023 = vmatprep.mubr.f32.mxu0 0.0
    %1024 = vmatmul.mubr.f32.gmra.mrb[0].mxu0 %v292
    %v1025 = vpop.f32.mrb[0].mxu0
    %v1026 = vadd.f32 %v757, %v1025
    %v1027 = vpop.f32.mrb[0].mxu0
    %1028 = vmatprep.mubr.f32.mxu0 0.0
    %1029 = vmatmul.mubr.f32.gmra.mrb[0].mxu0 %v295
    %v1030 = vpop.f32.mrb[0].mxu0
    %v1031 = vadd.f32 %v757, %v1030
    %v1032 = vpop.f32.mrb[0].mxu0
    %1033 = vmatprep.mubr.f32.mxu0 0.0
    %1034 = vmatmul.mubr.f32.gmra.mrb[0].mxu0 %v298
    %v1035 = vpop.f32.mrb[0].mxu0
    %v1036 = vadd.f32 %v757, %v1035
    %v1037 = vpop.f32.mrb[0].mxu0
    %1038 = vmatprep.mubr.f32.mxu0 0.0
    %1039 = vmatmul.mubr.f32.gmra.mrb[0].mxu0 %v301
    %v1040 = vpop.f32.mrb[0].mxu0
    %v1041 = vadd.f32 %v757, %v1040
    %v1042 = vpop.f32.mrb[0].mxu0
    %1043 = vmatprep.mubr.f32.mxu0 0.0
    %1044 = vmatmul.mubr.f32.gmra.mrb[0].mxu0 %v304
    %v1045 = vpop.f32.mrb[0].mxu0
    %v1046 = vadd.f32 %v757, %v1045
    %v1047 = vpop.f32.mrb[0].mxu0
    %1048 = vmatprep.mubr.f32.mxu0 0.0
    %1049 = vmatmul.mubr.f32.gmra.mrb[0].mxu0 %v307
    %v1050 = vpop.f32.mrb[0].mxu0
    %v1051 = vadd.f32 %v757, %v1050
    %v1052 = vpop.f32.mrb[0].mxu0
    %1053 = vmatprep.mubr.f32.mxu0 0.0
    %1054 = vmatmul.mubr.f32.gmra.mrb[0].mxu0 %v310
    %v1055 = vpop.f32.mrb[0].mxu0
    %v1056 = vadd.f32 %v757, %v1055
    %v1057 = vpop.f32.mrb[0].mxu0
    %1058 = vmatprep.mubr.f32.mxu0 0.0
    %1059 = vmatmul.mubr.f32.gmra.mrb[0].mxu0 %v313
    %v1060 = vpop.f32.mrb[0].mxu0
    %v1061 = vadd.f32 %v757, %v1060
    %v1062 = vpop.f32.mrb[0].mxu0
    %1063 = vmatprep.mubr.f32.mxu0 0.0
    %1064 = vmatmul.mubr.f32.gmra.mrb[0].mxu0 %v316
    %v1065 = vpop.f32.mrb[0].mxu0
    %v1066 = vadd.f32 %v757, %v1065
    %v1067 = vpop.f32.mrb[0].mxu0
    %1068 = vmatprep.mubr.f32.mxu0 0.0
    %1069 = vmatmul.mubr.f32.gmra.mrb[0].mxu0 %v319
    %v1070 = vpop.f32.mrb[0].mxu0
    %v1071 = vadd.f32 %v757, %v1070
    %v1072 = vpop.f32.mrb[0].mxu0
    %1073 = vmatprep.mubr.f32.mxu0 0.0
    %1074 = vmatmul.mubr.f32.gmra.mrb[0].mxu0 %v322
    %v1075 = vpop.f32.mrb[0].mxu0
    %v1076 = vadd.f32 %v757, %v1075
    %v1077 = vpop.f32.mrb[0].mxu0
    %1078 = vmatprep.mubr.f32.mxu0 0.0
    %1079 = vmatmul.mubr.f32.gmra.mrb[0].mxu0 %v325
    %v1080 = vpop.f32.mrb[0].mxu0
    %v1081 = vadd.f32 %v757, %v1080
    %v1082 = vpop.f32.mrb[0].mxu0
    %1083 = vmatprep.mubr.f32.mxu0 0.0
    %1084 = vmatmul.mubr.f32.gmra.mrb[0].mxu0 %v328
    %v1085 = vpop.f32.mrb[0].mxu0
    %v1086 = vadd.f32 %v757, %v1085
    %v1087 = vpop.f32.mrb[0].mxu0
    %1088 = vmatprep.mubr.f32.mxu0 0.0
    %1089 = vmatmul.mubr.f32.gmra.mrb[0].mxu0 %v331
    %v1090 = vpop.f32.mrb[0].mxu0
    %v1091 = vadd.f32 %v757, %v1090
    %v1092 = vpop.f32.mrb[0].mxu0
    %1093 = vmatprep.mubr.f32.mxu0 0.0
    %1094 = vmatmul.mubr.f32.gmra.mrb[0].mxu0 %v334
    %v1095 = vpop.f32.mrb[0].mxu0
    %v1096 = vadd.f32 %v757, %v1095
    %v1097 = vpop.f32.mrb[0].mxu0
    %1098 = vmatprep.mubr.f32.mxu0 0.0
    %1099 = vmatmul.mubr.f32.gmra.mrb[0].mxu0 %v337
    %v1100 = vpop.f32.mrb[0].mxu0
    %v1101 = vadd.f32 %v757, %v1100
    %v1102 = vpop.f32.mrb[0].mxu0
    %1103 = vmatprep.mubr.f32.mxu0 0.0
    %1104 = vmatmul.mubr.f32.gmra.mrb[0].mxu0 %v340
    %v1105 = vpop.f32.mrb[0].mxu0
    %v1106 = vadd.f32 %v757, %v1105
    %v1107 = vpop.f32.mrb[0].mxu0
    %1108 = vmatprep.mubr.f32.mxu0 0.0
    %1109 = vmatmul.mubr.f32.gmra.mrb[0].mxu0 %v343
    %v1110 = vpop.f32.mrb[0].mxu0
    %v1111 = vadd.f32 %v757, %v1110
    %v1112 = vpop.f32.mrb[0].mxu0
    %1113 = vmatprep.mubr.f32.mxu0 0.0
    %1114 = vmatmul.mubr.f32.gmra.mrb[0].mxu0 %v346
    %v1115 = vpop.f32.mrb[0].mxu0
    %v1116 = vadd.f32 %v757, %v1115
    %v1117 = vpop.f32.mrb[0].mxu0
    %1118 = vmatprep.mubr.f32.mxu0 0.0
    %1119 = vmatmul.mubr.f32.gmra.mrb[0].mxu0 %v349
    %v1120 = vpop.f32.mrb[0].mxu0
    %v1121 = vadd.f32 %v757, %v1120
    %v1122 = vpop.f32.mrb[0].mxu0
    %1123 = vmatprep.mubr.f32.mxu0 0.0
    %1124 = vmatmul.mubr.f32.gmra.mrb[0].mxu0 %v352
    %v1125 = vpop.f32.mrb[0].mxu0
    %v1126 = vadd.f32 %v757, %v1125
    %v1127 = vpop.f32.mrb[0].mxu0
    %1128 = vmatprep.mubr.f32.mxu0 0.0
    %1129 = vmatmul.mubr.f32.gmra.mrb[0].mxu0 %v355
    %v1130 = vpop.f32.mrb[0].mxu0
    %v1131 = vadd.f32 %v757, %v1130
    %v1132 = vpop.f32.mrb[0].mxu0
    %1133 = vmatprep.mubr.f32.mxu0 0.0
    %1134 = vmatmul.mubr.f32.gmra.mrb[0].mxu0 %v358
    %v1135 = vpop.f32.mrb[0].mxu0
    %v1136 = vadd.f32 %v757, %v1135
    %v1137 = vpop.f32.mrb[0].mxu0
    %1138 = vmatprep.mubr.f32.mxu0 0.0
    %1139 = vmatmul.mubr.f32.gmra.mrb[0].mxu0 %v361
    %v1140 = vpop.f32.mrb[0].mxu0
    %v1141 = vadd.f32 %v757, %v1140
    %v1142 = vpop.f32.mrb[0].mxu0
    %1143 = vdwg.mxu0
    %v1144 = vsub.f32 0.0, %v430
    %v1145 = vsub.f32 0.0, %v435
    %v1146 = vsub.f32 0.0, %v440
    %v1147 = vsub.f32 0.0, %v445
    %v1148 = vsub.f32 0.0, %v450
    %v1149 = vsub.f32 0.0, %v455
    %v1150 = vsub.f32 0.0, %v460
    %v1151 = vsub.f32 0.0, %v465
    %v1152 = vsub.f32 0.0, %v470
    %v1153 = vsub.f32 0.0, %v475
    %v1154 = vsub.f32 0.0, %v480
    %v1155 = vsub.f32 0.0, %v485
    %v1156 = vsub.f32 0.0, %v490
    %v1157 = vsub.f32 0.0, %v495
    %v1158 = vsub.f32 0.0, %v500
    %v1159 = vsub.f32 0.0, %v505
    %v1160 = vsub.f32 0.0, %v510
    %v1161 = vsub.f32 0.0, %v515
    %v1162 = vsub.f32 0.0, %v520
    %v1163 = vsub.f32 0.0, %v525
    %v1164 = vsub.f32 0.0, %v530
    %v1165 = vsub.f32 0.0, %v535
    %v1166 = vsub.f32 0.0, %v540
    %v1167 = vsub.f32 0.0, %v545
    %v1168 = vsub.f32 0.0, %v550
    %v1169 = vsub.f32 0.0, %v555
    %v1170 = vsub.f32 0.0, %v560
    %v1171 = vsub.f32 0.0, %v565
    %v1172 = vsub.f32 0.0, %v570
    %v1173 = vsub.f32 0.0, %v575
    %v1174 = vsub.f32 0.0, %v580
    %v1175 = vsub.f32 0.0, %v585
    %v1176 = vsub.f32 0.0, %v590
    %v1177 = vsub.f32 0.0, %v595
    %v1178 = vsub.f32 0.0, %v600
    %v1179 = vsub.f32 0.0, %v605
    %v1180 = vsub.f32 0.0, %v610
    %v1181 = vsub.f32 0.0, %v615
    %v1182 = vsub.f32 0.0, %v620
    %v1183 = vsub.f32 0.0, %v625
    %v1184 = vsub.f32 0.0, %v630
    %v1185 = vsub.f32 0.0, %v635
    %v1186 = vsub.f32 0.0, %v640
    %v1187 = vsub.f32 0.0, %v645
    %v1188 = vsub.f32 0.0, %v650
    %v1189 = vsub.f32 0.0, %v655
    %v1190 = vsub.f32 0.0, %v660
    %v1191 = vsub.f32 0.0, %v665
    %v1192 = vsub.f32 0.0, %v670
    %v1193 = vsub.f32 0.0, %v675
    %v1194 = vsub.f32 0.0, %v680
    %v1195 = vsub.f32 0.0, %v685
    %v1196 = vsub.f32 0.0, %v690
    %v1197 = vsub.f32 0.0, %v695
    %v1198 = vsub.f32 0.0, %v700
    %v1199 = vsub.f32 0.0, %v705
    %v1200 = vsub.f32 0.0, %v710
    %v1201 = vsub.f32 0.0, %v715
    %v1202 = vsub.f32 0.0, %v720
    %v1203 = vsub.f32 0.0, %v725
    %v1204 = vsub.f32 0.0, %v730
    %v1205 = vsub.f32 0.0, %v735
    %v1206 = vsub.f32 0.0, %v740
    %v1207 = vsub.f32 0.0, %v745
    %v1208 = vmul.f32 %v1144, 1.442695
    %v1209 = vpow.pop %v1208
    %v1210 = vmul.f32 %v1145, 1.442695
    %v1211 = vpow.pop %v1210
    %v1212 = vmul.f32 %v1146, 1.442695
    %v1213 = vpow.pop %v1212
    %v1214 = vmul.f32 %v1147, 1.442695
    %v1215 = vpow.pop %v1214
    %v1216 = vmul.f32 %v1148, 1.442695
    %v1217 = vpow.pop %v1216
    %v1218 = vmul.f32 %v1149, 1.442695
    %v1219 = vpow.pop %v1218
    %v1220 = vmul.f32 %v1150, 1.442695
    %v1221 = vpow.pop %v1220
    %v1222 = vmul.f32 %v1151, 1.442695
    %v1223 = vpow.pop %v1222
    %v1224 = vmul.f32 %v1152, 1.442695
    %v1225 = vpow.pop %v1224
    %v1226 = vmul.f32 %v1153, 1.442695
    %v1227 = vpow.pop %v1226
    %v1228 = vmul.f32 %v1154, 1.442695
    %v1229 = vpow.pop %v1228
    %v1230 = vmul.f32 %v1155, 1.442695
    %v1231 = vpow.pop %v1230
    %v1232 = vmul.f32 %v1156, 1.442695
    %v1233 = vpow.pop %v1232
    %v1234 = vmul.f32 %v1157, 1.442695
    %v1235 = vpow.pop %v1234
    %v1236 = vmul.f32 %v1158, 1.442695
    %v1237 = vpow.pop %v1236
    %v1238 = vmul.f32 %v1159, 1.442695
    %v1239 = vpow.pop %v1238
    %v1240 = vmul.f32 %v1160, 1.442695
    %v1241 = vpow.pop %v1240
    %v1242 = vmul.f32 %v1161, 1.442695
    %v1243 = vpow.pop %v1242
    %v1244 = vmul.f32 %v1162, 1.442695
    %v1245 = vpow.pop %v1244
    %v1246 = vmul.f32 %v1163, 1.442695
    %v1247 = vpow.pop %v1246
    %v1248 = vmul.f32 %v1164, 1.442695
    %v1249 = vpow.pop %v1248
    %v1250 = vmul.f32 %v1165, 1.442695
    %v1251 = vpow.pop %v1250
    %v1252 = vmul.f32 %v1166, 1.442695
    %v1253 = vpow.pop %v1252
    %v1254 = vmul.f32 %v1167, 1.442695
    %v1255 = vpow.pop %v1254
    %v1256 = vmul.f32 %v1168, 1.442695
    %v1257 = vpow.pop %v1256
    %v1258 = vmul.f32 %v1169, 1.442695
    %v1259 = vpow.pop %v1258
    %v1260 = vmul.f32 %v1170, 1.442695
    %v1261 = vpow.pop %v1260
    %v1262 = vmul.f32 %v1171, 1.442695
    %v1263 = vpow.pop %v1262
    %v1264 = vmul.f32 %v1172, 1.442695
    %v1265 = vpow.pop %v1264
    %v1266 = vmul.f32 %v1173, 1.442695
    %v1267 = vpow.pop %v1266
    %v1268 = vmul.f32 %v1174, 1.442695
    %v1269 = vpow.pop %v1268
    %v1270 = vmul.f32 %v1175, 1.442695
    %v1271 = vpow.pop %v1270
    %v1272 = vmul.f32 %v1176, 1.442695
    %v1273 = vpow.pop %v1272
    %v1274 = vmul.f32 %v1177, 1.442695
    %v1275 = vpow.pop %v1274
    %v1276 = vmul.f32 %v1178, 1.442695
    %v1277 = vpow.pop %v1276
    %v1278 = vmul.f32 %v1179, 1.442695
    %v1279 = vpow.pop %v1278
    %v1280 = vmul.f32 %v1180, 1.442695
    %v1281 = vpow.pop %v1280
    %v1282 = vmul.f32 %v1181, 1.442695
    %v1283 = vpow.pop %v1282
    %v1284 = vmul.f32 %v1182, 1.442695
    %v1285 = vpow.pop %v1284
    %v1286 = vmul.f32 %v1183, 1.442695
    %v1287 = vpow.pop %v1286
    %v1288 = vmul.f32 %v1184, 1.442695
    %v1289 = vpow.pop %v1288
    %v1290 = vmul.f32 %v1185, 1.442695
    %v1291 = vpow.pop %v1290
    %v1292 = vmul.f32 %v1186, 1.442695
    %v1293 = vpow.pop %v1292
    %v1294 = vmul.f32 %v1187, 1.442695
    %v1295 = vpow.pop %v1294
    %v1296 = vmul.f32 %v1188, 1.442695
    %v1297 = vpow.pop %v1296
    %v1298 = vmul.f32 %v1189, 1.442695
    %v1299 = vpow.pop %v1298
    %v1300 = vmul.f32 %v1190, 1.442695
    %v1301 = vpow.pop %v1300
    %v1302 = vmul.f32 %v1191, 1.442695
    %v1303 = vpow.pop %v1302
    %v1304 = vmul.f32 %v1192, 1.442695
    %v1305 = vpow.pop %v1304
    %v1306 = vmul.f32 %v1193, 1.442695
    %v1307 = vpow.pop %v1306
    %v1308 = vmul.f32 %v1194, 1.442695
    %v1309 = vpow.pop %v1308
    %v1310 = vmul.f32 %v1195, 1.442695
    %v1311 = vpow.pop %v1310
    %v1312 = vmul.f32 %v1196, 1.442695
    %v1313 = vpow.pop %v1312
    %v1314 = vmul.f32 %v1197, 1.442695
    %v1315 = vpow.pop %v1314
    %v1316 = vmul.f32 %v1198, 1.442695
    %v1317 = vpow.pop %v1316
    %v1318 = vmul.f32 %v1199, 1.442695
    %v1319 = vpow.pop %v1318
    %v1320 = vmul.f32 %v1200, 1.442695
    %v1321 = vpow.pop %v1320
    %v1322 = vmul.f32 %v1201, 1.442695
    %v1323 = vpow.pop %v1322
    %v1324 = vmul.f32 %v1202, 1.442695
    %v1325 = vpow.pop %v1324
    %v1326 = vmul.f32 %v1203, 1.442695
    %v1327 = vpow.pop %v1326
    %v1328 = vmul.f32 %v1204, 1.442695
    %v1329 = vpow.pop %v1328
    %v1330 = vmul.f32 %v1205, 1.442695
    %v1331 = vpow.pop %v1330
    %v1332 = vmul.f32 %v1206, 1.442695
    %v1333 = vpow.pop %v1332
    %v1334 = vmul.f32 %v1207, 1.442695
    %v1335 = vpow.pop %v1334
    %v1336 = vadd.f32 %v1209, 1.0
    %v1337 = vadd.f32 %v1211, 1.0
    %v1338 = vadd.f32 %v1213, 1.0
    %v1339 = vadd.f32 %v1215, 1.0
    %v1340 = vadd.f32 %v1217, 1.0
    %v1341 = vadd.f32 %v1219, 1.0
    %v1342 = vadd.f32 %v1221, 1.0
    %v1343 = vadd.f32 %v1223, 1.0
    %v1344 = vadd.f32 %v1225, 1.0
    %v1345 = vadd.f32 %v1227, 1.0
    %v1346 = vadd.f32 %v1229, 1.0
    %v1347 = vadd.f32 %v1231, 1.0
    %v1348 = vadd.f32 %v1233, 1.0
    %v1349 = vadd.f32 %v1235, 1.0
    %v1350 = vadd.f32 %v1237, 1.0
    %v1351 = vadd.f32 %v1239, 1.0
    %v1352 = vadd.f32 %v1241, 1.0
    %v1353 = vadd.f32 %v1243, 1.0
    %v1354 = vadd.f32 %v1245, 1.0
    %v1355 = vadd.f32 %v1247, 1.0
    %v1356 = vadd.f32 %v1249, 1.0
    %v1357 = vadd.f32 %v1251, 1.0
    %v1358 = vadd.f32 %v1253, 1.0
    %v1359 = vadd.f32 %v1255, 1.0
    %v1360 = vadd.f32 %v1257, 1.0
    %v1361 = vadd.f32 %v1259, 1.0
    %v1362 = vadd.f32 %v1261, 1.0
    %v1363 = vadd.f32 %v1263, 1.0
    %v1364 = vadd.f32 %v1265, 1.0
    %v1365 = vadd.f32 %v1267, 1.0
    %v1366 = vadd.f32 %v1269, 1.0
    %v1367 = vadd.f32 %v1271, 1.0
    %v1368 = vadd.f32 %v1273, 1.0
    %v1369 = vadd.f32 %v1275, 1.0
    %v1370 = vadd.f32 %v1277, 1.0
    %v1371 = vadd.f32 %v1279, 1.0
    %v1372 = vadd.f32 %v1281, 1.0
    %v1373 = vadd.f32 %v1283, 1.0
    %v1374 = vadd.f32 %v1285, 1.0
    %v1375 = vadd.f32 %v1287, 1.0
    %v1376 = vadd.f32 %v1289, 1.0
    %v1377 = vadd.f32 %v1291, 1.0
    %v1378 = vadd.f32 %v1293, 1.0
    %v1379 = vadd.f32 %v1295, 1.0
    %v1380 = vadd.f32 %v1297, 1.0
    %v1381 = vadd.f32 %v1299, 1.0
    %v1382 = vadd.f32 %v1301, 1.0
    %v1383 = vadd.f32 %v1303, 1.0
    %v1384 = vadd.f32 %v1305, 1.0
    %v1385 = vadd.f32 %v1307, 1.0
    %v1386 = vadd.f32 %v1309, 1.0
    %v1387 = vadd.f32 %v1311, 1.0
    %v1388 = vadd.f32 %v1313, 1.0
    %v1389 = vadd.f32 %v1315, 1.0
    %v1390 = vadd.f32 %v1317, 1.0
    %v1391 = vadd.f32 %v1319, 1.0
    %v1392 = vadd.f32 %v1321, 1.0
    %v1393 = vadd.f32 %v1323, 1.0
    %v1394 = vadd.f32 %v1325, 1.0
    %v1395 = vadd.f32 %v1327, 1.0
    %v1396 = vadd.f32 %v1329, 1.0
    %v1397 = vadd.f32 %v1331, 1.0
    %v1398 = vadd.f32 %v1333, 1.0
    %v1399 = vadd.f32 %v1335, 1.0
    %v1400 = vrcp.pop %v1336
    %v1401 = vmul.f32 1.0, %v1400
    %v1402 = vrcp.pop %v1337
    %v1403 = vmul.f32 1.0, %v1402
    %v1404 = vrcp.pop %v1338
    %v1405 = vmul.f32 1.0, %v1404
    %v1406 = vrcp.pop %v1339
    %v1407 = vmul.f32 1.0, %v1406
    %v1408 = vrcp.pop %v1340
    %v1409 = vmul.f32 1.0, %v1408
    %v1410 = vrcp.pop %v1341
    %v1411 = vmul.f32 1.0, %v1410
    %v1412 = vrcp.pop %v1342
    %v1413 = vmul.f32 1.0, %v1412
    %v1414 = vrcp.pop %v1343
    %v1415 = vmul.f32 1.0, %v1414
    %v1416 = vrcp.pop %v1344
    %v1417 = vmul.f32 1.0, %v1416
    %v1418 = vrcp.pop %v1345
    %v1419 = vmul.f32 1.0, %v1418
    %v1420 = vrcp.pop %v1346
    %v1421 = vmul.f32 1.0, %v1420
    %v1422 = vrcp.pop %v1347
    %v1423 = vmul.f32 1.0, %v1422
    %v1424 = vrcp.pop %v1348
    %v1425 = vmul.f32 1.0, %v1424
    %v1426 = vrcp.pop %v1349
    %v1427 = vmul.f32 1.0, %v1426
    %v1428 = vrcp.pop %v1350
    %v1429 = vmul.f32 1.0, %v1428
    %v1430 = vrcp.pop %v1351
    %v1431 = vmul.f32 1.0, %v1430
    %v1432 = vrcp.pop %v1352
    %v1433 = vmul.f32 1.0, %v1432
    %v1434 = vrcp.pop %v1353
    %v1435 = vmul.f32 1.0, %v1434
    %v1436 = vrcp.pop %v1354
    %v1437 = vmul.f32 1.0, %v1436
    %v1438 = vrcp.pop %v1355
    %v1439 = vmul.f32 1.0, %v1438
    %v1440 = vrcp.pop %v1356
    %v1441 = vmul.f32 1.0, %v1440
    %v1442 = vrcp.pop %v1357
    %v1443 = vmul.f32 1.0, %v1442
    %v1444 = vrcp.pop %v1358
    %v1445 = vmul.f32 1.0, %v1444
    %v1446 = vrcp.pop %v1359
    %v1447 = vmul.f32 1.0, %v1446
    %v1448 = vrcp.pop %v1360
    %v1449 = vmul.f32 1.0, %v1448
    %v1450 = vrcp.pop %v1361
    %v1451 = vmul.f32 1.0, %v1450
    %v1452 = vrcp.pop %v1362
    %v1453 = vmul.f32 1.0, %v1452
    %v1454 = vrcp.pop %v1363
    %v1455 = vmul.f32 1.0, %v1454
    %v1456 = vrcp.pop %v1364
    %v1457 = vmul.f32 1.0, %v1456
    %v1458 = vrcp.pop %v1365
    %v1459 = vmul.f32 1.0, %v1458
    %v1460 = vrcp.pop %v1366
    %v1461 = vmul.f32 1.0, %v1460
    %v1462 = vrcp.pop %v1367
    %v1463 = vmul.f32 1.0, %v1462
    %v1464 = vrcp.pop %v1368
    %v1465 = vmul.f32 1.0, %v1464
    %v1466 = vrcp.pop %v1369
    %v1467 = vmul.f32 1.0, %v1466
    %v1468 = vrcp.pop %v1370
    %v1469 = vmul.f32 1.0, %v1468
    %v1470 = vrcp.pop %v1371
    %v1471 = vmul.f32 1.0, %v1470
    %v1472 = vrcp.pop %v1372
    %v1473 = vmul.f32 1.0, %v1472
    %v1474 = vrcp.pop %v1373
    %v1475 = vmul.f32 1.0, %v1474
    %v1476 = vrcp.pop %v1374
    %v1477 = vmul.f32 1.0, %v1476
    %v1478 = vrcp.pop %v1375
    %v1479 = vmul.f32 1.0, %v1478
    %v1480 = vrcp.pop %v1376
    %v1481 = vmul.f32 1.0, %v1480
    %v1482 = vrcp.pop %v1377
    %v1483 = vmul.f32 1.0, %v1482
    %v1484 = vrcp.pop %v1378
    %v1485 = vmul.f32 1.0, %v1484
    %v1486 = vrcp.pop %v1379
    %v1487 = vmul.f32 1.0, %v1486
    %v1488 = vrcp.pop %v1380
    %v1489 = vmul.f32 1.0, %v1488
    %v1490 = vrcp.pop %v1381
    %v1491 = vmul.f32 1.0, %v1490
    %v1492 = vrcp.pop %v1382
    %v1493 = vmul.f32 1.0, %v1492
    %v1494 = vrcp.pop %v1383
    %v1495 = vmul.f32 1.0, %v1494
    %v1496 = vrcp.pop %v1384
    %v1497 = vmul.f32 1.0, %v1496
    %v1498 = vrcp.pop %v1385
    %v1499 = vmul.f32 1.0, %v1498
    %v1500 = vrcp.pop %v1386
    %v1501 = vmul.f32 1.0, %v1500
    %v1502 = vrcp.pop %v1387
    %v1503 = vmul.f32 1.0, %v1502
    %v1504 = vrcp.pop %v1388
    %v1505 = vmul.f32 1.0, %v1504
    %v1506 = vrcp.pop %v1389
    %v1507 = vmul.f32 1.0, %v1506
    %v1508 = vrcp.pop %v1390
    %v1509 = vmul.f32 1.0, %v1508
    %v1510 = vrcp.pop %v1391
    %v1511 = vmul.f32 1.0, %v1510
    %v1512 = vrcp.pop %v1392
    %v1513 = vmul.f32 1.0, %v1512
    %v1514 = vrcp.pop %v1393
    %v1515 = vmul.f32 1.0, %v1514
    %v1516 = vrcp.pop %v1394
    %v1517 = vmul.f32 1.0, %v1516
    %v1518 = vrcp.pop %v1395
    %v1519 = vmul.f32 1.0, %v1518
    %v1520 = vrcp.pop %v1396
    %v1521 = vmul.f32 1.0, %v1520
    %v1522 = vrcp.pop %v1397
    %v1523 = vmul.f32 1.0, %v1522
    %v1524 = vrcp.pop %v1398
    %v1525 = vmul.f32 1.0, %v1524
    %v1526 = vrcp.pop %v1399
    %v1527 = vmul.f32 1.0, %v1526
    %v1528 = vmul.f32 %v430, %v1401
    %v1529 = vmul.f32 %v435, %v1403
    %v1530 = vmul.f32 %v440, %v1405
    %v1531 = vmul.f32 %v445, %v1407
    %v1532 = vmul.f32 %v450, %v1409
    %v1533 = vmul.f32 %v455, %v1411
    %v1534 = vmul.f32 %v460, %v1413
    %v1535 = vmul.f32 %v465, %v1415
    %v1536 = vmul.f32 %v470, %v1417
    %v1537 = vmul.f32 %v475, %v1419
    %v1538 = vmul.f32 %v480, %v1421
    %v1539 = vmul.f32 %v485, %v1423
    %v1540 = vmul.f32 %v490, %v1425
    %v1541 = vmul.f32 %v495, %v1427
    %v1542 = vmul.f32 %v500, %v1429
    %v1543 = vmul.f32 %v505, %v1431
    %v1544 = vmul.f32 %v510, %v1433
    %v1545 = vmul.f32 %v515, %v1435
    %v1546 = vmul.f32 %v520, %v1437
    %v1547 = vmul.f32 %v525, %v1439
    %v1548 = vmul.f32 %v530, %v1441
    %v1549 = vmul.f32 %v535, %v1443
    %v1550 = vmul.f32 %v540, %v1445
    %v1551 = vmul.f32 %v545, %v1447
    %v1552 = vmul.f32 %v550, %v1449
    %v1553 = vmul.f32 %v555, %v1451
    %v1554 = vmul.f32 %v560, %v1453
    %v1555 = vmul.f32 %v565, %v1455
    %v1556 = vmul.f32 %v570, %v1457
    %v1557 = vmul.f32 %v575, %v1459
    %v1558 = vmul.f32 %v580, %v1461
    %v1559 = vmul.f32 %v585, %v1463
    %v1560 = vmul.f32 %v590, %v1465
    %v1561 = vmul.f32 %v595, %v1467
    %v1562 = vmul.f32 %v600, %v1469
    %v1563 = vmul.f32 %v605, %v1471
    %v1564 = vmul.f32 %v610, %v1473
    %v1565 = vmul.f32 %v615, %v1475
    %v1566 = vmul.f32 %v620, %v1477
    %v1567 = vmul.f32 %v625, %v1479
    %v1568 = vmul.f32 %v630, %v1481
    %v1569 = vmul.f32 %v635, %v1483
    %v1570 = vmul.f32 %v640, %v1485
    %v1571 = vmul.f32 %v645, %v1487
    %v1572 = vmul.f32 %v650, %v1489
    %v1573 = vmul.f32 %v655, %v1491
    %v1574 = vmul.f32 %v660, %v1493
    %v1575 = vmul.f32 %v665, %v1495
    %v1576 = vmul.f32 %v670, %v1497
    %v1577 = vmul.f32 %v675, %v1499
    %v1578 = vmul.f32 %v680, %v1501
    %v1579 = vmul.f32 %v685, %v1503
    %v1580 = vmul.f32 %v690, %v1505
    %v1581 = vmul.f32 %v695, %v1507
    %v1582 = vmul.f32 %v700, %v1509
    %v1583 = vmul.f32 %v705, %v1511
    %v1584 = vmul.f32 %v710, %v1513
    %v1585 = vmul.f32 %v715, %v1515
    %v1586 = vmul.f32 %v720, %v1517
    %v1587 = vmul.f32 %v725, %v1519
    %v1588 = vmul.f32 %v730, %v1521
    %v1589 = vmul.f32 %v735, %v1523
    %v1590 = vmul.f32 %v740, %v1525
    %v1591 = vmul.f32 %v745, %v1527
    %v1592 = vmul.f32 %v1528, %v826
    %v1593 = vmul.f32 %v1529, %v831
    %v1594 = vmul.f32 %v1530, %v836
    %v1595 = vmul.f32 %v1531, %v841
    %v1596 = vmul.f32 %v1532, %v846
    %v1597 = vmul.f32 %v1533, %v851
    %v1598 = vmul.f32 %v1534, %v856
    %v1599 = vmul.f32 %v1535, %v861
    %v1600 = vmul.f32 %v1536, %v866
    %v1601 = vmul.f32 %v1537, %v871
    %v1602 = vmul.f32 %v1538, %v876
    %v1603 = vmul.f32 %v1539, %v881
    %v1604 = vmul.f32 %v1540, %v886
    %v1605 = vmul.f32 %v1541, %v891
    %v1606 = vmul.f32 %v1542, %v896
    %v1607 = vmul.f32 %v1543, %v901
    %v1608 = vmul.f32 %v1544, %v906
    %v1609 = vmul.f32 %v1545, %v911
    %v1610 = vmul.f32 %v1546, %v916
    %v1611 = vmul.f32 %v1547, %v921
    %v1612 = vmul.f32 %v1548, %v926
    %v1613 = vmul.f32 %v1549, %v931
    %v1614 = vmul.f32 %v1550, %v936
    %v1615 = vmul.f32 %v1551, %v941
    %v1616 = vmul.f32 %v1552, %v946
    %v1617 = vmul.f32 %v1553, %v951
    %v1618 = vmul.f32 %v1554, %v956
    %v1619 = vmul.f32 %v1555, %v961
    %v1620 = vmul.f32 %v1556, %v966
    %v1621 = vmul.f32 %v1557, %v971
    %v1622 = vmul.f32 %v1558, %v976
    %v1623 = vmul.f32 %v1559, %v981
    %v1624 = vmul.f32 %v1560, %v986
    %v1625 = vmul.f32 %v1561, %v991
    %v1626 = vmul.f32 %v1562, %v996
    %v1627 = vmul.f32 %v1563, %v1001
    %v1628 = vmul.f32 %v1564, %v1006
    %v1629 = vmul.f32 %v1565, %v1011
    %v1630 = vmul.f32 %v1566, %v1016
    %v1631 = vmul.f32 %v1567, %v1021
    %v1632 = vmul.f32 %v1568, %v1026
    %v1633 = vmul.f32 %v1569, %v1031
    %v1634 = vmul.f32 %v1570, %v1036
    %v1635 = vmul.f32 %v1571, %v1041
    %v1636 = vmul.f32 %v1572, %v1046
    %v1637 = vmul.f32 %v1573, %v1051
    %v1638 = vmul.f32 %v1574, %v1056
    %v1639 = vmul.f32 %v1575, %v1061
    %v1640 = vmul.f32 %v1576, %v1066
    %v1641 = vmul.f32 %v1577, %v1071
    %v1642 = vmul.f32 %v1578, %v1076
    %v1643 = vmul.f32 %v1579, %v1081
    %v1644 = vmul.f32 %v1580, %v1086
    %v1645 = vmul.f32 %v1581, %v1091
    %v1646 = vmul.f32 %v1582, %v1096
    %v1647 = vmul.f32 %v1583, %v1101
    %v1648 = vmul.f32 %v1584, %v1106
    %v1649 = vmul.f32 %v1585, %v1111
    %v1650 = vmul.f32 %v1586, %v1116
    %v1651 = vmul.f32 %v1587, %v1121
    %v1652 = vmul.f32 %v1588, %v1126
    %v1653 = vmul.f32 %v1589, %v1131
    %v1654 = vmul.f32 %v1590, %v1136
    %v1655 = vmul.f32 %v1591, %v1141
    %v1656 = vld [vmem:[#allocation2] sm:$0xff]
    %v1657 = vld [vmem:[#allocation2 + $0x8] sm:$0xff]
    %v1658 = vld [vmem:[#allocation2 + $0x10] sm:$0xff]
    %v1659 = vld [vmem:[#allocation2 + $0x18] sm:$0xff]
    %v1660 = vld [vmem:[#allocation2 + $0x20] sm:$0xff]
    %v1661 = vld [vmem:[#allocation2 + $0x28] sm:$0xff]
    %v1662 = vld [vmem:[#allocation2 + $0x30] sm:$0xff]
    %v1663 = vld [vmem:[#allocation2 + $0x38] sm:$0xff]
    %v1664 = vld [vmem:[#allocation2 + $0x40] sm:$0xff]
    %v1665 = vld [vmem:[#allocation2 + $0x48] sm:$0xff]
    %v1666 = vld [vmem:[#allocation2 + $0x50] sm:$0xff]
    %v1667 = vld [vmem:[#allocation2 + $0x58] sm:$0xff]
    %v1668 = vld [vmem:[#allocation2 + $0x60] sm:$0xff]
    %v1669 = vld [vmem:[#allocation2 + $0x68] sm:$0xff]
    %v1670 = vld [vmem:[#allocation2 + $0x70] sm:$0xff]
    %v1671 = vld [vmem:[#allocation2 + $0x78] sm:$0xff]
    %v1672 = vld [vmem:[#allocation2 + $0x80] sm:$0xff]
    %v1673 = vld [vmem:[#allocation2 + $0x88] sm:$0xff]
    %v1674 = vld [vmem:[#allocation2 + $0x90] sm:$0xff]
    %v1675 = vld [vmem:[#allocation2 + $0x98] sm:$0xff]
    %v1676 = vld [vmem:[#allocation2 + $0xa0] sm:$0xff]
    %v1677 = vld [vmem:[#allocation2 + $0xa8] sm:$0xff]
    %v1678 = vld [vmem:[#allocation2 + $0xb0] sm:$0xff]
    %v1679 = vld [vmem:[#allocation2 + $0xb8] sm:$0xff]
    %v1680 = vld [vmem:[#allocation2 + $0xc0] sm:$0xff]
    %v1681 = vld [vmem:[#allocation2 + $0xc8] sm:$0xff]
    %v1682 = vld [vmem:[#allocation2 + $0xd0] sm:$0xff]
    %v1683 = vld [vmem:[#allocation2 + $0xd8] sm:$0xff]
    %v1684 = vld [vmem:[#allocation2 + $0xe0] sm:$0xff]
    %v1685 = vld [vmem:[#allocation2 + $0xe8] sm:$0xff]
    %v1686 = vld [vmem:[#allocation2 + $0xf0] sm:$0xff]
    %v1687 = vld [vmem:[#allocation2 + $0xf8] sm:$0xff]
    %v1688 = vld [vmem:[#allocation2 + $0x100] sm:$0xff]
    %v1689 = vld [vmem:[#allocation2 + $0x108] sm:$0xff]
    %v1690 = vld [vmem:[#allocation2 + $0x110] sm:$0xff]
    %v1691 = vld [vmem:[#allocation2 + $0x118] sm:$0xff]
    %v1692 = vld [vmem:[#allocation2 + $0x120] sm:$0xff]
    %v1693 = vld [vmem:[#allocation2 + $0x128] sm:$0xff]
    %v1694 = vld [vmem:[#allocation2 + $0x130] sm:$0xff]
    %v1695 = vld [vmem:[#allocation2 + $0x138] sm:$0xff]
    %v1696 = vld [vmem:[#allocation2 + $0x140] sm:$0xff]
    %v1697 = vld [vmem:[#allocation2 + $0x148] sm:$0xff]
    %v1698 = vld [vmem:[#allocation2 + $0x150] sm:$0xff]
    %v1699 = vld [vmem:[#allocation2 + $0x158] sm:$0xff]
    %v1700 = vld [vmem:[#allocation2 + $0x160] sm:$0xff]
    %v1701 = vld [vmem:[#allocation2 + $0x168] sm:$0xff]
    %v1702 = vld [vmem:[#allocation2 + $0x170] sm:$0xff]
    %v1703 = vld [vmem:[#allocation2 + $0x178] sm:$0xff]
    %v1704 = vld [vmem:[#allocation2 + $0x180] sm:$0xff]
    %v1705 = vld [vmem:[#allocation2 + $0x188] sm:$0xff]
    %v1706 = vld [vmem:[#allocation2 + $0x190] sm:$0xff]
    %v1707 = vld [vmem:[#allocation2 + $0x198] sm:$0xff]
    %v1708 = vld [vmem:[#allocation2 + $0x1a0] sm:$0xff]
    %v1709 = vld [vmem:[#allocation2 + $0x1a8] sm:$0xff]
    %v1710 = vld [vmem:[#allocation2 + $0x1b0] sm:$0xff]
    %v1711 = vld [vmem:[#allocation2 + $0x1b8] sm:$0xff]
    %v1712 = vld [vmem:[#allocation2 + $0x1c0] sm:$0xff]
    %v1713 = vld [vmem:[#allocation2 + $0x1c8] sm:$0xff]
    %v1714 = vld [vmem:[#allocation2 + $0x1d0] sm:$0xff]
    %v1715 = vld [vmem:[#allocation2 + $0x1d8] sm:$0xff]
    %v1716 = vld [vmem:[#allocation2 + $0x1e0] sm:$0xff]
    %v1717 = vld [vmem:[#allocation2 + $0x1e8] sm:$0xff]
    %v1718 = vld [vmem:[#allocation2 + $0x1f0] sm:$0xff]
    %v1719 = vld [vmem:[#allocation2 + $0x1f8] sm:$0xff]
    %v1720 = vld [vmem:[%s5] sm:$0xff]
    %v1721 = vld [vmem:[%s5 + $0x8] sm:$0xff]
    %v1722 = vld [vmem:[%s5 + $0x10] sm:$0xff]
    %v1723 = vld [vmem:[%s5 + $0x18] sm:$0xff]
    %v1724 = vld [vmem:[%s5 + $0x20] sm:$0xff]
    %v1725 = vld [vmem:[%s5 + $0x28] sm:$0xff]
    %v1726 = vld [vmem:[%s5 + $0x30] sm:$0xff]
    %v1727 = vld [vmem:[%s5 + $0x38] sm:$0xff]
    %vm1728 = vcmask 523264
    %v1730 = vsel %vm1728, %v1592, 0
    %v1733 = vsel %vm1728, %v1593, 0
    %v1736 = vsel %vm1728, %v1594, 0
    %v1739 = vsel %vm1728, %v1595, 0
    %v1742 = vsel %vm1728, %v1596, 0
    %v1745 = vsel %vm1728, %v1597, 0
    %v1748 = vsel %vm1728, %v1598, 0
    %v1751 = vsel %vm1728, %v1599, 0
    %v1754 = vsel %vm1728, %v1600, 0
    %v1757 = vsel %vm1728, %v1601, 0
    %v1760 = vsel %vm1728, %v1602, 0
    %v1763 = vsel %vm1728, %v1603, 0
    %v1766 = vsel %vm1728, %v1604, 0
    %v1769 = vsel %vm1728, %v1605, 0
    %v1772 = vsel %vm1728, %v1606, 0
    %v1775 = vsel %vm1728, %v1607, 0
    %v1778 = vsel %vm1728, %v1608, 0
    %v1781 = vsel %vm1728, %v1609, 0
    %v1784 = vsel %vm1728, %v1610, 0
    %v1787 = vsel %vm1728, %v1611, 0
    %v1790 = vsel %vm1728, %v1612, 0
    %v1793 = vsel %vm1728, %v1613, 0
    %v1796 = vsel %vm1728, %v1614, 0
    %v1799 = vsel %vm1728, %v1615, 0
    %v1802 = vsel %vm1728, %v1616, 0
    %v1805 = vsel %vm1728, %v1617, 0
    %v1808 = vsel %vm1728, %v1618, 0
    %v1811 = vsel %vm1728, %v1619, 0
    %v1814 = vsel %vm1728, %v1620, 0
    %v1817 = vsel %vm1728, %v1621, 0
    %v1820 = vsel %vm1728, %v1622, 0
    %v1823 = vsel %vm1728, %v1623, 0
    %v1826 = vsel %vm1728, %v1624, 0
    %v1829 = vsel %vm1728, %v1625, 0
    %v1832 = vsel %vm1728, %v1626, 0
    %v1835 = vsel %vm1728, %v1627, 0
    %v1838 = vsel %vm1728, %v1628, 0
    %v1841 = vsel %vm1728, %v1629, 0
    %v1844 = vsel %vm1728, %v1630, 0
    %v1847 = vsel %vm1728, %v1631, 0
    %v1850 = vsel %vm1728, %v1632, 0
    %v1853 = vsel %vm1728, %v1633, 0
    %v1856 = vsel %vm1728, %v1634, 0
    %v1859 = vsel %vm1728, %v1635, 0
    %v1862 = vsel %vm1728, %v1636, 0
    %v1865 = vsel %vm1728, %v1637, 0
    %v1868 = vsel %vm1728, %v1638, 0
    %v1871 = vsel %vm1728, %v1639, 0
    %v1874 = vsel %vm1728, %v1640, 0
    %v1877 = vsel %vm1728, %v1641, 0
    %v1880 = vsel %vm1728, %v1642, 0
    %v1883 = vsel %vm1728, %v1643, 0
    %v1886 = vsel %vm1728, %v1644, 0
    %v1889 = vsel %vm1728, %v1645, 0
    %v1892 = vsel %vm1728, %v1646, 0
    %v1895 = vsel %vm1728, %v1647, 0
    %v1898 = vsel %vm1728, %v1648, 0
    %v1901 = vsel %vm1728, %v1649, 0
    %v1904 = vsel %vm1728, %v1650, 0
    %v1907 = vsel %vm1728, %v1651, 0
    %v1910 = vsel %vm1728, %v1652, 0
    %v1913 = vsel %vm1728, %v1653, 0
    %v1916 = vsel %vm1728, %v1654, 0
    %v1919 = vsel %vm1728, %v1655, 0
    %1921 = vmatprep.subr.mxu0 0.0
    %1922 = vmatpush1.msra.mxu0 %v1720
    %1923 = vmatprep.subr.mxu0 0.0
    %1924 = vmatpush1.msra.mxu0 %v1721
    %1925 = vmatprep.subr.mxu0 0.0
    %1926 = vmatpush1.msra.mxu0 %v1722
    %1927 = vmatprep.subr.mxu0 0.0
    %1928 = vmatpush1.msra.mxu0 %v1723
    %1929 = vmatprep.subr.mxu0 0.0
    %1930 = vmatpush1.msra.mxu0 %v1724
    %1931 = vmatprep.subr.mxu0 0.0
    %1932 = vmatpush1.msra.mxu0 %v1725
    %1933 = vmatprep.subr.mxu0 0.0
    %1934 = vmatpush1.msra.mxu0 %v1726
    %1935 = vmatprep.subr.mxu0 0.0
    %1936 = vmatpush1.msra.mxu0 %v1727
    %1937 = vmatprep.subr.mxu0 0.0
    %1938 = vmatpush1.msra.mxu0 0.0
    %1939 = vmatprep.subr.mxu0 0.0
    %1940 = vmatpush1.msra.mxu0 0.0
    %1941 = vmatprep.subr.mxu0 0.0
    %1942 = vmatpush1.msra.mxu0 0.0
    %1943 = vmatprep.subr.mxu0 0.0
    %1944 = vmatpush1.msra.mxu0 0.0
    %1945 = vmatprep.subr.mxu0 0.0
    %1946 = vmatpush1.msra.mxu0 0.0
    %1947 = vmatprep.subr.mxu0 0.0
    %1948 = vmatpush1.msra.mxu0 0.0
    %1949 = vmatprep.subr.mxu0 0.0
    %1950 = vmatpush1.msra.mxu0 0.0
    %1951 = vmatprep.subr.mxu0 0.0
    %1952 = vmatpush1.msra.mxu0 0.0
    %1953 = vmatprep.subr.mxu0 0.0
    %1954 = vmatpush1.msra.mxu0 0.0
    %1955 = vmatprep.subr.mxu0 0.0
    %1956 = vmatpush1.msra.mxu0 0.0
    %1957 = vmatprep.subr.mxu0 0.0
    %1958 = vmatpush1.msra.mxu0 0.0
    %1959 = vmatprep.subr.mxu0 0.0
    %1960 = vmatpush1.msra.mxu0 0.0
    %1961 = vmatprep.subr.mxu0 0.0
    %1962 = vmatpush1.msra.mxu0 0.0
    %1963 = vmatprep.subr.mxu0 0.0
    %1964 = vmatpush1.msra.mxu0 0.0
    %1965 = vmatprep.subr.mxu0 0.0
    %1966 = vmatpush1.msra.mxu0 0.0
    %1967 = vmatprep.subr.mxu0 0.0
    %1968 = vmatpush1.msra.mxu0 0.0
    %1969 = vmatprep.subr.mxu0 0.0
    %1970 = vmatpush1.msra.mxu0 0.0
    %1971 = vmatprep.subr.mxu0 0.0
    %1972 = vmatpush1.msra.mxu0 0.0
    %1973 = vmatprep.subr.mxu0 0.0
    %1974 = vmatpush1.msra.mxu0 0.0
    %1975 = vmatprep.subr.mxu0 0.0
    %1976 = vmatpush1.msra.mxu0 0.0
    %1977 = vmatprep.subr.mxu0 0.0
    %1978 = vmatpush1.msra.mxu0 0.0
    %1979 = vmatprep.subr.mxu0 0.0
    %1980 = vmatpush1.msra.mxu0 0.0
    %1981 = vmatprep.subr.mxu0 0.0
    %1982 = vmatpush1.msra.mxu0 0.0
    %1983 = vmatprep.subr.mxu0 0.0
    %1984 = vmatpush1.msra.mxu0 0.0
    %1985 = vmatprep.mubr.f32.mxu0 0.0
    %1986 = vmatmul.mubr.f32.gmra.mrb[0].mxu0 %v1730
    %v1987 = vpop.f32.mrb[0].mxu0
    %v1988 = vadd.f32 0.0, %v1987
    %v1989 = vpop.f32.mrb[0].mxu0
    %1990 = vmatprep.mubr.f32.mxu0 0.0
    %1991 = vmatmul.mubr.f32.gmra.mrb[0].mxu0 %v1733
    %v1992 = vpop.f32.mrb[0].mxu0
    %v1993 = vadd.f32 0.0, %v1992
    %v1994 = vpop.f32.mrb[0].mxu0
    %1995 = vmatprep.mubr.f32.mxu0 0.0
    %1996 = vmatmul.mubr.f32.gmra.mrb[0].mxu0 %v1736
    %v1997 = vpop.f32.mrb[0].mxu0
    %v1998 = vadd.f32 0.0, %v1997
    %v1999 = vpop.f32.mrb[0].mxu0
    %2000 = vmatprep.mubr.f32.mxu0 0.0
    %2001 = vmatmul.mubr.f32.gmra.mrb[0].mxu0 %v1739
    %v2002 = vpop.f32.mrb[0].mxu0
    %v2003 = vadd.f32 0.0, %v2002
    %v2004 = vpop.f32.mrb[0].mxu0
    %2005 = vmatprep.mubr.f32.mxu0 0.0
    %2006 = vmatmul.mubr.f32.gmra.mrb[0].mxu0 %v1742
    %v2007 = vpop.f32.mrb[0].mxu0
    %v2008 = vadd.f32 0.0, %v2007
    %v2009 = vpop.f32.mrb[0].mxu0
    %2010 = vmatprep.mubr.f32.mxu0 0.0
    %2011 = vmatmul.mubr.f32.gmra.mrb[0].mxu0 %v1745
    %v2012 = vpop.f32.mrb[0].mxu0
    %v2013 = vadd.f32 0.0, %v2012
    %v2014 = vpop.f32.mrb[0].mxu0
    %2015 = vmatprep.mubr.f32.mxu0 0.0
    %2016 = vmatmul.mubr.f32.gmra.mrb[0].mxu0 %v1748
    %v2017 = vpop.f32.mrb[0].mxu0
    %v2018 = vadd.f32 0.0, %v2017
    %v2019 = vpop.f32.mrb[0].mxu0
    %2020 = vmatprep.mubr.f32.mxu0 0.0
    %2021 = vmatmul.mubr.f32.gmra.mrb[0].mxu0 %v1751
    %v2022 = vpop.f32.mrb[0].mxu0
    %v2023 = vadd.f32 0.0, %v2022
    %v2024 = vpop.f32.mrb[0].mxu0
    %2025 = vmatprep.mubr.f32.mxu0 0.0
    %2026 = vmatmul.mubr.f32.gmra.mrb[0].mxu0 %v1754
    %v2027 = vpop.f32.mrb[0].mxu0
    %v2028 = vadd.f32 0.0, %v2027
    %v2029 = vpop.f32.mrb[0].mxu0
    %2030 = vmatprep.mubr.f32.mxu0 0.0
    %2031 = vmatmul.mubr.f32.gmra.mrb[0].mxu0 %v1757
    %v2032 = vpop.f32.mrb[0].mxu0
    %v2033 = vadd.f32 0.0, %v2032
    %v2034 = vpop.f32.mrb[0].mxu0
    %2035 = vmatprep.mubr.f32.mxu0 0.0
    %2036 = vmatmul.mubr.f32.gmra.mrb[0].mxu0 %v1760
    %v2037 = vpop.f32.mrb[0].mxu0
    %v2038 = vadd.f32 0.0, %v2037
    %v2039 = vpop.f32.mrb[0].mxu0
    %2040 = vmatprep.mubr.f32.mxu0 0.0
    %2041 = vmatmul.mubr.f32.gmra.mrb[0].mxu0 %v1763
    %v2042 = vpop.f32.mrb[0].mxu0
    %v2043 = vadd.f32 0.0, %v2042
    %v2044 = vpop.f32.mrb[0].mxu0
    %2045 = vmatprep.mubr.f32.mxu0 0.0
    %2046 = vmatmul.mubr.f32.gmra.mrb[0].mxu0 %v1766
    %v2047 = vpop.f32.mrb[0].mxu0
    %v2048 = vadd.f32 0.0, %v2047
    %v2049 = vpop.f32.mrb[0].mxu0
    %2050 = vmatprep.mubr.f32.mxu0 0.0
    %2051 = vmatmul.mubr.f32.gmra.mrb[0].mxu0 %v1769
    %v2052 = vpop.f32.mrb[0].mxu0
    %v2053 = vadd.f32 0.0, %v2052
    %v2054 = vpop.f32.mrb[0].mxu0
    %2055 = vmatprep.mubr.f32.mxu0 0.0
    %2056 = vmatmul.mubr.f32.gmra.mrb[0].mxu0 %v1772
    %v2057 = vpop.f32.mrb[0].mxu0
    %v2058 = vadd.f32 0.0, %v2057
    %v2059 = vpop.f32.mrb[0].mxu0
    %2060 = vmatprep.mubr.f32.mxu0 0.0
    %2061 = vmatmul.mubr.f32.gmra.mrb[0].mxu0 %v1775
    %v2062 = vpop.f32.mrb[0].mxu0
    %v2063 = vadd.f32 0.0, %v2062
    %v2064 = vpop.f32.mrb[0].mxu0
    %2065 = vmatprep.mubr.f32.mxu0 0.0
    %2066 = vmatmul.mubr.f32.gmra.mrb[0].mxu0 %v1778
    %v2067 = vpop.f32.mrb[0].mxu0
    %v2068 = vadd.f32 0.0, %v2067
    %v2069 = vpop.f32.mrb[0].mxu0
    %2070 = vmatprep.mubr.f32.mxu0 0.0
    %2071 = vmatmul.mubr.f32.gmra.mrb[0].mxu0 %v1781
    %v2072 = vpop.f32.mrb[0].mxu0
    %v2073 = vadd.f32 0.0, %v2072
    %v2074 = vpop.f32.mrb[0].mxu0
    %2075 = vmatprep.mubr.f32.mxu0 0.0
    %2076 = vmatmul.mubr.f32.gmra.mrb[0].mxu0 %v1784
    %v2077 = vpop.f32.mrb[0].mxu0
    %v2078 = vadd.f32 0.0, %v2077
    %v2079 = vpop.f32.mrb[0].mxu0
    %2080 = vmatprep.mubr.f32.mxu0 0.0
    %2081 = vmatmul.mubr.f32.gmra.mrb[0].mxu0 %v1787
    %v2082 = vpop.f32.mrb[0].mxu0
    %v2083 = vadd.f32 0.0, %v2082
    %v2084 = vpop.f32.mrb[0].mxu0
    %2085 = vmatprep.mubr.f32.mxu0 0.0
    %2086 = vmatmul.mubr.f32.gmra.mrb[0].mxu0 %v1790
    %v2087 = vpop.f32.mrb[0].mxu0
    %v2088 = vadd.f32 0.0, %v2087
    %v2089 = vpop.f32.mrb[0].mxu0
    %2090 = vmatprep.mubr.f32.mxu0 0.0
    %2091 = vmatmul.mubr.f32.gmra.mrb[0].mxu0 %v1793
    %v2092 = vpop.f32.mrb[0].mxu0
    %v2093 = vadd.f32 0.0, %v2092
    %v2094 = vpop.f32.mrb[0].mxu0
    %2095 = vmatprep.mubr.f32.mxu0 0.0
    %2096 = vmatmul.mubr.f32.gmra.mrb[0].mxu0 %v1796
    %v2097 = vpop.f32.mrb[0].mxu0
    %v2098 = vadd.f32 0.0, %v2097
    %v2099 = vpop.f32.mrb[0].mxu0
    %2100 = vmatprep.mubr.f32.mxu0 0.0
    %2101 = vmatmul.mubr.f32.gmra.mrb[0].mxu0 %v1799
    %v2102 = vpop.f32.mrb[0].mxu0
    %v2103 = vadd.f32 0.0, %v2102
    %v2104 = vpop.f32.mrb[0].mxu0
    %2105 = vmatprep.mubr.f32.mxu0 0.0
    %2106 = vmatmul.mubr.f32.gmra.mrb[0].mxu0 %v1802
    %v2107 = vpop.f32.mrb[0].mxu0
    %v2108 = vadd.f32 0.0, %v2107
    %v2109 = vpop.f32.mrb[0].mxu0
    %2110 = vmatprep.mubr.f32.mxu0 0.0
    %2111 = vmatmul.mubr.f32.gmra.mrb[0].mxu0 %v1805
    %v2112 = vpop.f32.mrb[0].mxu0
    %v2113 = vadd.f32 0.0, %v2112
    %v2114 = vpop.f32.mrb[0].mxu0
    %2115 = vmatprep.mubr.f32.mxu0 0.0
    %2116 = vmatmul.mubr.f32.gmra.mrb[0].mxu0 %v1808
    %v2117 = vpop.f32.mrb[0].mxu0
    %v2118 = vadd.f32 0.0, %v2117
    %v2119 = vpop.f32.mrb[0].mxu0
    %2120 = vmatprep.mubr.f32.mxu0 0.0
    %2121 = vmatmul.mubr.f32.gmra.mrb[0].mxu0 %v1811
    %v2122 = vpop.f32.mrb[0].mxu0
    %v2123 = vadd.f32 0.0, %v2122
    %v2124 = vpop.f32.mrb[0].mxu0
    %2125 = vmatprep.mubr.f32.mxu0 0.0
    %2126 = vmatmul.mubr.f32.gmra.mrb[0].mxu0 %v1814
    %v2127 = vpop.f32.mrb[0].mxu0
    %v2128 = vadd.f32 0.0, %v2127
    %v2129 = vpop.f32.mrb[0].mxu0
    %2130 = vmatprep.mubr.f32.mxu0 0.0
    %2131 = vmatmul.mubr.f32.gmra.mrb[0].mxu0 %v1817
    %v2132 = vpop.f32.mrb[0].mxu0
    %v2133 = vadd.f32 0.0, %v2132
    %v2134 = vpop.f32.mrb[0].mxu0
    %2135 = vmatprep.mubr.f32.mxu0 0.0
    %2136 = vmatmul.mubr.f32.gmra.mrb[0].mxu0 %v1820
    %v2137 = vpop.f32.mrb[0].mxu0
    %v2138 = vadd.f32 0.0, %v2137
    %v2139 = vpop.f32.mrb[0].mxu0
    %2140 = vmatprep.mubr.f32.mxu0 0.0
    %2141 = vmatmul.mubr.f32.gmra.mrb[0].mxu0 %v1823
    %v2142 = vpop.f32.mrb[0].mxu0
    %v2143 = vadd.f32 0.0, %v2142
    %v2144 = vpop.f32.mrb[0].mxu0
    %2145 = vmatprep.mubr.f32.mxu0 0.0
    %2146 = vmatmul.mubr.f32.gmra.mrb[0].mxu0 %v1826
    %v2147 = vpop.f32.mrb[0].mxu0
    %v2148 = vadd.f32 0.0, %v2147
    %v2149 = vpop.f32.mrb[0].mxu0
    %2150 = vmatprep.mubr.f32.mxu0 0.0
    %2151 = vmatmul.mubr.f32.gmra.mrb[0].mxu0 %v1829
    %v2152 = vpop.f32.mrb[0].mxu0
    %v2153 = vadd.f32 0.0, %v2152
    %v2154 = vpop.f32.mrb[0].mxu0
    %2155 = vmatprep.mubr.f32.mxu0 0.0
    %2156 = vmatmul.mubr.f32.gmra.mrb[0].mxu0 %v1832
    %v2157 = vpop.f32.mrb[0].mxu0
    %v2158 = vadd.f32 0.0, %v2157
    %v2159 = vpop.f32.mrb[0].mxu0
    %2160 = vmatprep.mubr.f32.mxu0 0.0
    %2161 = vmatmul.mubr.f32.gmra.mrb[0].mxu0 %v1835
    %v2162 = vpop.f32.mrb[0].mxu0
    %v2163 = vadd.f32 0.0, %v2162
    %v2164 = vpop.f32.mrb[0].mxu0
    %2165 = vmatprep.mubr.f32.mxu0 0.0
    %2166 = vmatmul.mubr.f32.gmra.mrb[0].mxu0 %v1838
    %v2167 = vpop.f32.mrb[0].mxu0
    %v2168 = vadd.f32 0.0, %v2167
    %v2169 = vpop.f32.mrb[0].mxu0
    %2170 = vmatprep.mubr.f32.mxu0 0.0
    %2171 = vmatmul.mubr.f32.gmra.mrb[0].mxu0 %v1841
    %v2172 = vpop.f32.mrb[0].mxu0
    %v2173 = vadd.f32 0.0, %v2172
    %v2174 = vpop.f32.mrb[0].mxu0
    %2175 = vmatprep.mubr.f32.mxu0 0.0
    %2176 = vmatmul.mubr.f32.gmra.mrb[0].mxu0 %v1844
    %v2177 = vpop.f32.mrb[0].mxu0
    %v2178 = vadd.f32 0.0, %v2177
    %v2179 = vpop.f32.mrb[0].mxu0
    %2180 = vmatprep.mubr.f32.mxu0 0.0
    %2181 = vmatmul.mubr.f32.gmra.mrb[0].mxu0 %v1847
    %v2182 = vpop.f32.mrb[0].mxu0
    %v2183 = vadd.f32 0.0, %v2182
    %v2184 = vpop.f32.mrb[0].mxu0
    %2185 = vmatprep.mubr.f32.mxu0 0.0
    %2186 = vmatmul.mubr.f32.gmra.mrb[0].mxu0 %v1850
    %v2187 = vpop.f32.mrb[0].mxu0
    %v2188 = vadd.f32 0.0, %v2187
    %v2189 = vpop.f32.mrb[0].mxu0
    %2190 = vmatprep.mubr.f32.mxu0 0.0
    %2191 = vmatmul.mubr.f32.gmra.mrb[0].mxu0 %v1853
    %v2192 = vpop.f32.mrb[0].mxu0
    %v2193 = vadd.f32 0.0, %v2192
    %v2194 = vpop.f32.mrb[0].mxu0
    %2195 = vmatprep.mubr.f32.mxu0 0.0
    %2196 = vmatmul.mubr.f32.gmra.mrb[0].mxu0 %v1856
    %v2197 = vpop.f32.mrb[0].mxu0
    %v2198 = vadd.f32 0.0, %v2197
    %v2199 = vpop.f32.mrb[0].mxu0
    %2200 = vmatprep.mubr.f32.mxu0 0.0
    %2201 = vmatmul.mubr.f32.gmra.mrb[0].mxu0 %v1859
    %v2202 = vpop.f32.mrb[0].mxu0
    %v2203 = vadd.f32 0.0, %v2202
    %v2204 = vpop.f32.mrb[0].mxu0
    %2205 = vmatprep.mubr.f32.mxu0 0.0
    %2206 = vmatmul.mubr.f32.gmra.mrb[0].mxu0 %v1862
    %v2207 = vpop.f32.mrb[0].mxu0
    %v2208 = vadd.f32 0.0, %v2207
    %v2209 = vpop.f32.mrb[0].mxu0
    %2210 = vmatprep.mubr.f32.mxu0 0.0
    %2211 = vmatmul.mubr.f32.gmra.mrb[0].mxu0 %v1865
    %v2212 = vpop.f32.mrb[0].mxu0
    %v2213 = vadd.f32 0.0, %v2212
    %v2214 = vpop.f32.mrb[0].mxu0
    %2215 = vmatprep.mubr.f32.mxu0 0.0
    %2216 = vmatmul.mubr.f32.gmra.mrb[0].mxu0 %v1868
    %v2217 = vpop.f32.mrb[0].mxu0
    %v2218 = vadd.f32 0.0, %v2217
    %v2219 = vpop.f32.mrb[0].mxu0
    %2220 = vmatprep.mubr.f32.mxu0 0.0
    %2221 = vmatmul.mubr.f32.gmra.mrb[0].mxu0 %v1871
    %v2222 = vpop.f32.mrb[0].mxu0
    %v2223 = vadd.f32 0.0, %v2222
    %v2224 = vpop.f32.mrb[0].mxu0
    %2225 = vmatprep.mubr.f32.mxu0 0.0
    %2226 = vmatmul.mubr.f32.gmra.mrb[0].mxu0 %v1874
    %v2227 = vpop.f32.mrb[0].mxu0
    %v2228 = vadd.f32 0.0, %v2227
    %v2229 = vpop.f32.mrb[0].mxu0
    %2230 = vmatprep.mubr.f32.mxu0 0.0
    %2231 = vmatmul.mubr.f32.gmra.mrb[0].mxu0 %v1877
    %v2232 = vpop.f32.mrb[0].mxu0
    %v2233 = vadd.f32 0.0, %v2232
    %v2234 = vpop.f32.mrb[0].mxu0
    %2235 = vmatprep.mubr.f32.mxu0 0.0
    %2236 = vmatmul.mubr.f32.gmra.mrb[0].mxu0 %v1880
    %v2237 = vpop.f32.mrb[0].mxu0
    %v2238 = vadd.f32 0.0, %v2237
    %v2239 = vpop.f32.mrb[0].mxu0
    %2240 = vmatprep.mubr.f32.mxu0 0.0
    %2241 = vmatmul.mubr.f32.gmra.mrb[0].mxu0 %v1883
    %v2242 = vpop.f32.mrb[0].mxu0
    %v2243 = vadd.f32 0.0, %v2242
    %v2244 = vpop.f32.mrb[0].mxu0
    %2245 = vmatprep.mubr.f32.mxu0 0.0
    %2246 = vmatmul.mubr.f32.gmra.mrb[0].mxu0 %v1886
    %v2247 = vpop.f32.mrb[0].mxu0
    %v2248 = vadd.f32 0.0, %v2247
    %v2249 = vpop.f32.mrb[0].mxu0
    %2250 = vmatprep.mubr.f32.mxu0 0.0
    %2251 = vmatmul.mubr.f32.gmra.mrb[0].mxu0 %v1889
    %v2252 = vpop.f32.mrb[0].mxu0
    %v2253 = vadd.f32 0.0, %v2252
    %v2254 = vpop.f32.mrb[0].mxu0
    %2255 = vmatprep.mubr.f32.mxu0 0.0
    %2256 = vmatmul.mubr.f32.gmra.mrb[0].mxu0 %v1892
    %v2257 = vpop.f32.mrb[0].mxu0
    %v2258 = vadd.f32 0.0, %v2257
    %v2259 = vpop.f32.mrb[0].mxu0
    %2260 = vmatprep.mubr.f32.mxu0 0.0
    %2261 = vmatmul.mubr.f32.gmra.mrb[0].mxu0 %v1895
    %v2262 = vpop.f32.mrb[0].mxu0
    %v2263 = vadd.f32 0.0, %v2262
    %v2264 = vpop.f32.mrb[0].mxu0
    %2265 = vmatprep.mubr.f32.mxu0 0.0
    %2266 = vmatmul.mubr.f32.gmra.mrb[0].mxu0 %v1898
    %v2267 = vpop.f32.mrb[0].mxu0
    %v2268 = vadd.f32 0.0, %v2267
    %v2269 = vpop.f32.mrb[0].mxu0
    %2270 = vmatprep.mubr.f32.mxu0 0.0
    %2271 = vmatmul.mubr.f32.gmra.mrb[0].mxu0 %v1901
    %v2272 = vpop.f32.mrb[0].mxu0
    %v2273 = vadd.f32 0.0, %v2272
    %v2274 = vpop.f32.mrb[0].mxu0
    %2275 = vmatprep.mubr.f32.mxu0 0.0
    %2276 = vmatmul.mubr.f32.gmra.mrb[0].mxu0 %v1904
    %v2277 = vpop.f32.mrb[0].mxu0
    %v2278 = vadd.f32 0.0, %v2277
    %v2279 = vpop.f32.mrb[0].mxu0
    %2280 = vmatprep.mubr.f32.mxu0 0.0
    %2281 = vmatmul.mubr.f32.gmra.mrb[0].mxu0 %v1907
    %v2282 = vpop.f32.mrb[0].mxu0
    %v2283 = vadd.f32 0.0, %v2282
    %v2284 = vpop.f32.mrb[0].mxu0
    %2285 = vmatprep.mubr.f32.mxu0 0.0
    %2286 = vmatmul.mubr.f32.gmra.mrb[0].mxu0 %v1910
    %v2287 = vpop.f32.mrb[0].mxu0
    %v2288 = vadd.f32 0.0, %v2287
    %v2289 = vpop.f32.mrb[0].mxu0
    %2290 = vmatprep.mubr.f32.mxu0 0.0
    %2291 = vmatmul.mubr.f32.gmra.mrb[0].mxu0 %v1913
    %v2292 = vpop.f32.mrb[0].mxu0
    %v2293 = vadd.f32 0.0, %v2292
    %v2294 = vpop.f32.mrb[0].mxu0
    %2295 = vmatprep.mubr.f32.mxu0 0.0
    %2296 = vmatmul.mubr.f32.gmra.mrb[0].mxu0 %v1916
    %v2297 = vpop.f32.mrb[0].mxu0
    %v2298 = vadd.f32 0.0, %v2297
    %v2299 = vpop.f32.mrb[0].mxu0
    %2300 = vmatprep.mubr.f32.mxu0 0.0
    %2301 = vmatmul.mubr.f32.gmra.mrb[0].mxu0 %v1919
    %v2302 = vpop.f32.mrb[0].mxu0
    %v2303 = vadd.f32 0.0, %v2302
    %v2304 = vpop.f32.mrb[0].mxu0
    %2305 = vdwg.mxu0
    %v2306 = vadd.f32 %v1656, %v1988
    %v2307 = vadd.f32 %v1657, %v1993
    %v2308 = vadd.f32 %v1658, %v1998
    %v2309 = vadd.f32 %v1659, %v2003
    %v2310 = vadd.f32 %v1660, %v2008
    %v2311 = vadd.f32 %v1661, %v2013
    %v2312 = vadd.f32 %v1662, %v2018
    %v2313 = vadd.f32 %v1663, %v2023
    %v2314 = vadd.f32 %v1664, %v2028
    %v2315 = vadd.f32 %v1665, %v2033
    %v2316 = vadd.f32 %v1666, %v2038
    %v2317 = vadd.f32 %v1667, %v2043
    %v2318 = vadd.f32 %v1668, %v2048
    %v2319 = vadd.f32 %v1669, %v2053
    %v2320 = vadd.f32 %v1670, %v2058
    %v2321 = vadd.f32 %v1671, %v2063
    %v2322 = vadd.f32 %v1672, %v2068
    %v2323 = vadd.f32 %v1673, %v2073
    %v2324 = vadd.f32 %v1674, %v2078
    %v2325 = vadd.f32 %v1675, %v2083
    %v2326 = vadd.f32 %v1676, %v2088
    %v2327 = vadd.f32 %v1677, %v2093
    %v2328 = vadd.f32 %v1678, %v2098
    %v2329 = vadd.f32 %v1679, %v2103
    %v2330 = vadd.f32 %v1680, %v2108
    %v2331 = vadd.f32 %v1681, %v2113
    %v2332 = vadd.f32 %v1682, %v2118
    %v2333 = vadd.f32 %v1683, %v2123
    %v2334 = vadd.f32 %v1684, %v2128
    %v2335 = vadd.f32 %v1685, %v2133
    %v2336 = vadd.f32 %v1686, %v2138
    %v2337 = vadd.f32 %v1687, %v2143
    %v2338 = vadd.f32 %v1688, %v2148
    %v2339 = vadd.f32 %v1689, %v2153
    %v2340 = vadd.f32 %v1690, %v2158
    %v2341 = vadd.f32 %v1691, %v2163
    %v2342 = vadd.f32 %v1692, %v2168
    %v2343 = vadd.f32 %v1693, %v2173
    %v2344 = vadd.f32 %v1694, %v2178
    %v2345 = vadd.f32 %v1695, %v2183
    %v2346 = vadd.f32 %v1696, %v2188
    %v2347 = vadd.f32 %v1697, %v2193
    %v2348 = vadd.f32 %v1698, %v2198
    %v2349 = vadd.f32 %v1699, %v2203
    %v2350 = vadd.f32 %v1700, %v2208
    %v2351 = vadd.f32 %v1701, %v2213
    %v2352 = vadd.f32 %v1702, %v2218
    %v2353 = vadd.f32 %v1703, %v2223
    %v2354 = vadd.f32 %v1704, %v2228
    %v2355 = vadd.f32 %v1705, %v2233
    %v2356 = vadd.f32 %v1706, %v2238
    %v2357 = vadd.f32 %v1707, %v2243
    %v2358 = vadd.f32 %v1708, %v2248
    %v2359 = vadd.f32 %v1709, %v2253
    %v2360 = vadd.f32 %v1710, %v2258
    %v2361 = vadd.f32 %v1711, %v2263
    %v2362 = vadd.f32 %v1712, %v2268
    %v2363 = vadd.f32 %v1713, %v2273
    %v2364 = vadd.f32 %v1714, %v2278
    %v2365 = vadd.f32 %v1715, %v2283
    %v2366 = vadd.f32 %v1716, %v2288
    %v2367 = vadd.f32 %v1717, %v2293
    %v2368 = vadd.f32 %v1718, %v2298
    %v2369 = vadd.f32 %v1719, %v2303
    %2370 = vst [vmem:[#allocation2] sm:$0xff] %v2306
    %2371 = vst [vmem:[#allocation2 + $0x8] sm:$0xff] %v2307
    %2372 = vst [vmem:[#allocation2 + $0x10] sm:$0xff] %v2308
    %2373 = vst [vmem:[#allocation2 + $0x18] sm:$0xff] %v2309
    %2374 = vst [vmem:[#allocation2 + $0x20] sm:$0xff] %v2310
    %2375 = vst [vmem:[#allocation2 + $0x28] sm:$0xff] %v2311
    %2376 = vst [vmem:[#allocation2 + $0x30] sm:$0xff] %v2312
    %2377 = vst [vmem:[#allocation2 + $0x38] sm:$0xff] %v2313
    %2378 = vst [vmem:[#allocation2 + $0x40] sm:$0xff] %v2314
    %2379 = vst [vmem:[#allocation2 + $0x48] sm:$0xff] %v2315
    %2380 = vst [vmem:[#allocation2 + $0x50] sm:$0xff] %v2316
    %2381 = vst [vmem:[#allocation2 + $0x58] sm:$0xff] %v2317
    %2382 = vst [vmem:[#allocation2 + $0x60] sm:$0xff] %v2318
    %2383 = vst [vmem:[#allocation2 + $0x68] sm:$0xff] %v2319
    %2384 = vst [vmem:[#allocation2 + $0x70] sm:$0xff] %v2320
    %2385 = vst [vmem:[#allocation2 + $0x78] sm:$0xff] %v2321
    %2386 = vst [vmem:[#allocation2 + $0x80] sm:$0xff] %v2322
    %2387 = vst [vmem:[#allocation2 + $0x88] sm:$0xff] %v2323
    %2388 = vst [vmem:[#allocation2 + $0x90] sm:$0xff] %v2324
    %2389 = vst [vmem:[#allocation2 + $0x98] sm:$0xff] %v2325
    %2390 = vst [vmem:[#allocation2 + $0xa0] sm:$0xff] %v2326
    %2391 = vst [vmem:[#allocation2 + $0xa8] sm:$0xff] %v2327
    %2392 = vst [vmem:[#allocation2 + $0xb0] sm:$0xff] %v2328
    %2393 = vst [vmem:[#allocation2 + $0xb8] sm:$0xff] %v2329
    %2394 = vst [vmem:[#allocation2 + $0xc0] sm:$0xff] %v2330
    %2395 = vst [vmem:[#allocation2 + $0xc8] sm:$0xff] %v2331
    %2396 = vst [vmem:[#allocation2 + $0xd0] sm:$0xff] %v2332
    %2397 = vst [vmem:[#allocation2 + $0xd8] sm:$0xff] %v2333
    %2398 = vst [vmem:[#allocation2 + $0xe0] sm:$0xff] %v2334
    %2399 = vst [vmem:[#allocation2 + $0xe8] sm:$0xff] %v2335
    %2400 = vst [vmem:[#allocation2 + $0xf0] sm:$0xff] %v2336
    %2401 = vst [vmem:[#allocation2 + $0xf8] sm:$0xff] %v2337
    %2402 = vst [vmem:[#allocation2 + $0x100] sm:$0xff] %v2338
    %2403 = vst [vmem:[#allocation2 + $0x108] sm:$0xff] %v2339
    %2404 = vst [vmem:[#allocation2 + $0x110] sm:$0xff] %v2340
    %2405 = vst [vmem:[#allocation2 + $0x118] sm:$0xff] %v2341
    %2406 = vst [vmem:[#allocation2 + $0x120] sm:$0xff] %v2342
    %2407 = vst [vmem:[#allocation2 + $0x128] sm:$0xff] %v2343
    %2408 = vst [vmem:[#allocation2 + $0x130] sm:$0xff] %v2344
    %2409 = vst [vmem:[#allocation2 + $0x138] sm:$0xff] %v2345
    %2410 = vst [vmem:[#allocation2 + $0x140] sm:$0xff] %v2346
    %2411 = vst [vmem:[#allocation2 + $0x148] sm:$0xff] %v2347
    %2412 = vst [vmem:[#allocation2 + $0x150] sm:$0xff] %v2348
    %2413 = vst [vmem:[#allocation2 + $0x158] sm:$0xff] %v2349
    %2414 = vst [vmem:[#allocation2 + $0x160] sm:$0xff] %v2350
    %2415 = vst [vmem:[#allocation2 + $0x168] sm:$0xff] %v2351
    %2416 = vst [vmem:[#allocation2 + $0x170] sm:$0xff] %v2352
    %2417 = vst [vmem:[#allocation2 + $0x178] sm:$0xff] %v2353
    %2418 = vst [vmem:[#allocation2 + $0x180] sm:$0xff] %v2354
    %2419 = vst [vmem:[#allocation2 + $0x188] sm:$0xff] %v2355
    %2420 = vst [vmem:[#allocation2 + $0x190] sm:$0xff] %v2356
    %2421 = vst [vmem:[#allocation2 + $0x198] sm:$0xff] %v2357
    %2422 = vst [vmem:[#allocation2 + $0x1a0] sm:$0xff] %v2358
    %2423 = vst [vmem:[#allocation2 + $0x1a8] sm:$0xff] %v2359
    %2424 = vst [vmem:[#allocation2 + $0x1b0] sm:$0xff] %v2360
    %2425 = vst [vmem:[#allocation2 + $0x1b8] sm:$0xff] %v2361
    %2426 = vst [vmem:[#allocation2 + $0x1c0] sm:$0xff] %v2362
    %2427 = vst [vmem:[#allocation2 + $0x1c8] sm:$0xff] %v2363
    %2428 = vst [vmem:[#allocation2 + $0x1d0] sm:$0xff] %v2364
    %2429 = vst [vmem:[#allocation2 + $0x1d8] sm:$0xff] %v2365
    %2430 = vst [vmem:[#allocation2 + $0x1e0] sm:$0xff] %v2366
    %2431 = vst [vmem:[#allocation2 + $0x1e8] sm:$0xff] %v2367
    %2432 = vst [vmem:[#allocation2 + $0x1f0] sm:$0xff] %v2368
    %2433 = vst [vmem:[#allocation2 + $0x1f8] sm:$0xff] %v2369
    // Predicated region
    $region34: #{tpu_custom_call.1} parent=1 // pred_check
      %p2434 = pneg %p27
    $region35: #{tpu_custom_call.1} parent=1 // pred_check_branch
      %2436 = sbr.rel (%p2434) target = $region37
    $region36: #{tpu_custom_call.1} parent=1 // pred_region
      %v2437 = vld [vmem:[#allocation2] sm:$0xff]
      %v2438 = vld [vmem:[#allocation2 + $0x8] sm:$0xff]
      %v2439 = vld [vmem:[#allocation2 + $0x10] sm:$0xff]
      %v2440 = vld [vmem:[#allocation2 + $0x18] sm:$0xff]
      %v2441 = vld [vmem:[#allocation2 + $0x20] sm:$0xff]
      %v2442 = vld [vmem:[#allocation2 + $0x28] sm:$0xff]
      %v2443 = vld [vmem:[#allocation2 + $0x30] sm:$0xff]
      %v2444 = vld [vmem:[#allocation2 + $0x38] sm:$0xff]
      %v2445 = vld [vmem:[#allocation2 + $0x40] sm:$0xff]
      %v2446 = vld [vmem:[#allocation2 + $0x48] sm:$0xff]
      %v2447 = vld [vmem:[#allocation2 + $0x50] sm:$0xff]
      %v2448 = vld [vmem:[#allocation2 + $0x58] sm:$0xff]
      %v2449 = vld [vmem:[#allocation2 + $0x60] sm:$0xff]
      %v2450 = vld [vmem:[#allocation2 + $0x68] sm:$0xff]
      %v2451 = vld [vmem:[#allocation2 + $0x70] sm:$0xff]
      %v2452 = vld [vmem:[#allocation2 + $0x78] sm:$0xff]
      %v2453 = vld [vmem:[#allocation2 + $0x80] sm:$0xff]
      %v2454 = vld [vmem:[#allocation2 + $0x88] sm:$0xff]
      %v2455 = vld [vmem:[#allocation2 + $0x90] sm:$0xff]
      %v2456 = vld [vmem:[#allocation2 + $0x98] sm:$0xff]
      %v2457 = vld [vmem:[#allocation2 + $0xa0] sm:$0xff]
      %v2458 = vld [vmem:[#allocation2 + $0xa8] sm:$0xff]
      %v2459 = vld [vmem:[#allocation2 + $0xb0] sm:$0xff]
      %v2460 = vld [vmem:[#allocation2 + $0xb8] sm:$0xff]
      %v2461 = vld [vmem:[#allocation2 + $0xc0] sm:$0xff]
      %v2462 = vld [vmem:[#allocation2 + $0xc8] sm:$0xff]
      %v2463 = vld [vmem:[#allocation2 + $0xd0] sm:$0xff]
      %v2464 = vld [vmem:[#allocation2 + $0xd8] sm:$0xff]
      %v2465 = vld [vmem:[#allocation2 + $0xe0] sm:$0xff]
      %v2466 = vld [vmem:[#allocation2 + $0xe8] sm:$0xff]
      %v2467 = vld [vmem:[#allocation2 + $0xf0] sm:$0xff]
      %v2468 = vld [vmem:[#allocation2 + $0xf8] sm:$0xff]
      %v2469 = vld [vmem:[#allocation2 + $0x100] sm:$0xff]
      %v2470 = vld [vmem:[#allocation2 + $0x108] sm:$0xff]
      %v2471 = vld [vmem:[#allocation2 + $0x110] sm:$0xff]
      %v2472 = vld [vmem:[#allocation2 + $0x118] sm:$0xff]
      %v2473 = vld [vmem:[#allocation2 + $0x120] sm:$0xff]
      %v2474 = vld [vmem:[#allocation2 + $0x128] sm:$0xff]
      %v2475 = vld [vmem:[#allocation2 + $0x130] sm:$0xff]
      %v2476 = vld [vmem:[#allocation2 + $0x138] sm:$0xff]
      %v2477 = vld [vmem:[#allocation2 + $0x140] sm:$0xff]
      %v2478 = vld [vmem:[#allocation2 + $0x148] sm:$0xff]
      %v2479 = vld [vmem:[#allocation2 + $0x150] sm:$0xff]
      %v2480 = vld [vmem:[#allocation2 + $0x158] sm:$0xff]
      %v2481 = vld [vmem:[#allocation2 + $0x160] sm:$0xff]
      %v2482 = vld [vmem:[#allocation2 + $0x168] sm:$0xff]
      %v2483 = vld [vmem:[#allocation2 + $0x170] sm:$0xff]
      %v2484 = vld [vmem:[#allocation2 + $0x178] sm:$0xff]
      %v2485 = vld [vmem:[#allocation2 + $0x180] sm:$0xff]
      %v2486 = vld [vmem:[#allocation2 + $0x188] sm:$0xff]
      %v2487 = vld [vmem:[#allocation2 + $0x190] sm:$0xff]
      %v2488 = vld [vmem:[#allocation2 + $0x198] sm:$0xff]
      %v2489 = vld [vmem:[#allocation2 + $0x1a0] sm:$0xff]
      %v2490 = vld [vmem:[#allocation2 + $0x1a8] sm:$0xff]
      %v2491 = vld [vmem:[#allocation2 + $0x1b0] sm:$0xff]
      %v2492 = vld [vmem:[#allocation2 + $0x1b8] sm:$0xff]
      %v2493 = vld [vmem:[#allocation2 + $0x1c0] sm:$0xff]
      %v2494 = vld [vmem:[#allocation2 + $0x1c8] sm:$0xff]
      %v2495 = vld [vmem:[#allocation2 + $0x1d0] sm:$0xff]
      %v2496 = vld [vmem:[#allocation2 + $0x1d8] sm:$0xff]
      %v2497 = vld [vmem:[#allocation2 + $0x1e0] sm:$0xff]
      %v2498 = vld [vmem:[#allocation2 + $0x1e8] sm:$0xff]
      %v2499 = vld [vmem:[#allocation2 + $0x1f0] sm:$0xff]
      %v2500 = vld [vmem:[#allocation2 + $0x1f8] sm:$0xff]
      %v2501 = vld [vmem:[%s6] sm:$0x1]
      %v2503 = vlaneseq
      %v2504 = vshrl.u32 %v2503, 7
      %v2505 = vsub.s32 0, %v2504
      %v2506 = vrot.slane %v2501, %v2505
      %v2508 = vadd.f32 %v2437, %v2506
      %v2509 = vadd.f32 %v2438, %v2506
      %v2510 = vadd.f32 %v2439, %v2506
      %v2511 = vadd.f32 %v2440, %v2506
      %v2512 = vadd.f32 %v2441, %v2506
      %v2513 = vadd.f32 %v2442, %v2506
      %v2514 = vadd.f32 %v2443, %v2506
      %v2515 = vadd.f32 %v2444, %v2506
      %v2516 = vadd.f32 %v2445, %v2506
      %v2517 = vadd.f32 %v2446, %v2506
      %v2518 = vadd.f32 %v2447, %v2506
      %v2519 = vadd.f32 %v2448, %v2506
      %v2520 = vadd.f32 %v2449, %v2506
      %v2521 = vadd.f32 %v2450, %v2506
      %v2522 = vadd.f32 %v2451, %v2506
      %v2523 = vadd.f32 %v2452, %v2506
      %v2524 = vadd.f32 %v2453, %v2506
      %v2525 = vadd.f32 %v2454, %v2506
      %v2526 = vadd.f32 %v2455, %v2506
      %v2527 = vadd.f32 %v2456, %v2506
      %v2528 = vadd.f32 %v2457, %v2506
      %v2529 = vadd.f32 %v2458, %v2506
      %v2530 = vadd.f32 %v2459, %v2506
      %v2531 = vadd.f32 %v2460, %v2506
      %v2532 = vadd.f32 %v2461, %v2506
      %v2533 = vadd.f32 %v2462, %v2506
      %v2534 = vadd.f32 %v2463, %v2506
      %v2535 = vadd.f32 %v2464, %v2506
      %v2536 = vadd.f32 %v2465, %v2506
      %v2537 = vadd.f32 %v2466, %v2506
      %v2538 = vadd.f32 %v2467, %v2506
      %v2539 = vadd.f32 %v2468, %v2506
      %v2540 = vadd.f32 %v2469, %v2506
      %v2541 = vadd.f32 %v2470, %v2506
      %v2542 = vadd.f32 %v2471, %v2506
      %v2543 = vadd.f32 %v2472, %v2506
      %v2544 = vadd.f32 %v2473, %v2506
      %v2545 = vadd.f32 %v2474, %v2506
      %v2546 = vadd.f32 %v2475, %v2506
      %v2547 = vadd.f32 %v2476, %v2506
      %v2548 = vadd.f32 %v2477, %v2506
      %v2549 = vadd.f32 %v2478, %v2506
      %v2550 = vadd.f32 %v2479, %v2506
      %v2551 = vadd.f32 %v2480, %v2506
      %v2552 = vadd.f32 %v2481, %v2506
      %v2553 = vadd.f32 %v2482, %v2506
      %v2554 = vadd.f32 %v2483, %v2506
      %v2555 = vadd.f32 %v2484, %v2506
      %v2556 = vadd.f32 %v2485, %v2506
      %v2557 = vadd.f32 %v2486, %v2506
      %v2558 = vadd.f32 %v2487, %v2506
      %v2559 = vadd.f32 %v2488, %v2506
      %v2560 = vadd.f32 %v2489, %v2506
      %v2561 = vadd.f32 %v2490, %v2506
      %v2562 = vadd.f32 %v2491, %v2506
      %v2563 = vadd.f32 %v2492, %v2506
      %v2564 = vadd.f32 %v2493, %v2506
      %v2565 = vadd.f32 %v2494, %v2506
      %v2566 = vadd.f32 %v2495, %v2506
      %v2567 = vadd.f32 %v2496, %v2506
      %v2568 = vadd.f32 %v2497, %v2506
      %v2569 = vadd.f32 %v2498, %v2506
      %v2570 = vadd.f32 %v2499, %v2506
      %v2571 = vadd.f32 %v2500, %v2506
      %2572 = vst [vmem:[#allocation3] sm:$0xff] %v2508
      %2573 = vst [vmem:[#allocation3 + $0x8] sm:$0xff] %v2509
      %2574 = vst [vmem:[#allocation3 + $0x10] sm:$0xff] %v2510
      %2575 = vst [vmem:[#allocation3 + $0x18] sm:$0xff] %v2511
      %2576 = vst [vmem:[#allocation3 + $0x20] sm:$0xff] %v2512
      %2577 = vst [vmem:[#allocation3 + $0x28] sm:$0xff] %v2513
      %2578 = vst [vmem:[#allocation3 + $0x30] sm:$0xff] %v2514
      %2579 = vst [vmem:[#allocation3 + $0x38] sm:$0xff] %v2515
      %2580 = vst [vmem:[#allocation3 + $0x40] sm:$0xff] %v2516
      %2581 = vst [vmem:[#allocation3 + $0x48] sm:$0xff] %v2517
      %2582 = vst [vmem:[#allocation3 + $0x50] sm:$0xff] %v2518
      %2583 = vst [vmem:[#allocation3 + $0x58] sm:$0xff] %v2519
      %2584 = vst [vmem:[#allocation3 + $0x60] sm:$0xff] %v2520
      %2585 = vst [vmem:[#allocation3 + $0x68] sm:$0xff] %v2521
      %2586 = vst [vmem:[#allocation3 + $0x70] sm:$0xff] %v2522
      %2587 = vst [vmem:[#allocation3 + $0x78] sm:$0xff] %v2523
      %2588 = vst [vmem:[#allocation3 + $0x80] sm:$0xff] %v2524
      %2589 = vst [vmem:[#allocation3 + $0x88] sm:$0xff] %v2525
      %2590 = vst [vmem:[#allocation3 + $0x90] sm:$0xff] %v2526
      %2591 = vst [vmem:[#allocation3 + $0x98] sm:$0xff] %v2527
      %2592 = vst [vmem:[#allocation3 + $0xa0] sm:$0xff] %v2528
      %2593 = vst [vmem:[#allocation3 + $0xa8] sm:$0xff] %v2529
      %2594 = vst [vmem:[#allocation3 + $0xb0] sm:$0xff] %v2530
      %2595 = vst [vmem:[#allocation3 + $0xb8] sm:$0xff] %v2531
      %2596 = vst [vmem:[#allocation3 + $0xc0] sm:$0xff] %v2532
      %2597 = vst [vmem:[#allocation3 + $0xc8] sm:$0xff] %v2533
      %2598 = vst [vmem:[#allocation3 + $0xd0] sm:$0xff] %v2534
      %2599 = vst [vmem:[#allocation3 + $0xd8] sm:$0xff] %v2535
      %2600 = vst [vmem:[#allocation3 + $0xe0] sm:$0xff] %v2536
      %2601 = vst [vmem:[#allocation3 + $0xe8] sm:$0xff] %v2537
      %2602 = vst [vmem:[#allocation3 + $0xf0] sm:$0xff] %v2538
      %2603 = vst [vmem:[#allocation3 + $0xf8] sm:$0xff] %v2539
      %2604 = vst [vmem:[#allocation3 + $0x100] sm:$0xff] %v2540
      %2605 = vst [vmem:[#allocation3 + $0x108] sm:$0xff] %v2541
      %2606 = vst [vmem:[#allocation3 + $0x110] sm:$0xff] %v2542
      %2607 = vst [vmem:[#allocation3 + $0x118] sm:$0xff] %v2543
      %2608 = vst [vmem:[#allocation3 + $0x120] sm:$0xff] %v2544
      %2609 = vst [vmem:[#allocation3 + $0x128] sm:$0xff] %v2545
      %2610 = vst [vmem:[#allocation3 + $0x130] sm:$0xff] %v2546
      %2611 = vst [vmem:[#allocation3 + $0x138] sm:$0xff] %v2547
      %2612 = vst [vmem:[#allocation3 + $0x140] sm:$0xff] %v2548
      %2613 = vst [vmem:[#allocation3 + $0x148] sm:$0xff] %v2549
      %2614 = vst [vmem:[#allocation3 + $0x150] sm:$0xff] %v2550
      %2615 = vst [vmem:[#allocation3 + $0x158] sm:$0xff] %v2551
      %2616 = vst [vmem:[#allocation3 + $0x160] sm:$0xff] %v2552
      %2617 = vst [vmem:[#allocation3 + $0x168] sm:$0xff] %v2553
      %2618 = vst [vmem:[#allocation3 + $0x170] sm:$0xff] %v2554
      %2619 = vst [vmem:[#allocation3 + $0x178] sm:$0xff] %v2555
      %2620 = vst [vmem:[#allocation3 + $0x180] sm:$0xff] %v2556
      %2621 = vst [vmem:[#allocation3 + $0x188] sm:$0xff] %v2557
      %2622 = vst [vmem:[#allocation3 + $0x190] sm:$0xff] %v2558
      %2623 = vst [vmem:[#allocation3 + $0x198] sm:$0xff] %v2559
      %2624 = vst [vmem:[#allocation3 + $0x1a0] sm:$0xff] %v2560
      %2625 = vst [vmem:[#allocation3 + $0x1a8] sm:$0xff] %v2561
      %2626 = vst [vmem:[#allocation3 + $0x1b0] sm:$0xff] %v2562
      %2627 = vst [vmem:[#allocation3 + $0x1b8] sm:$0xff] %v2563
      %2628 = vst [vmem:[#allocation3 + $0x1c0] sm:$0xff] %v2564
      %2629 = vst [vmem:[#allocation3 + $0x1c8] sm:$0xff] %v2565
      %2630 = vst [vmem:[#allocation3 + $0x1d0] sm:$0xff] %v2566
      %2631 = vst [vmem:[#allocation3 + $0x1d8] sm:$0xff] %v2567
      %2632 = vst [vmem:[#allocation3 + $0x1e0] sm:$0xff] %v2568
      %2633 = vst [vmem:[#allocation3 + $0x1e8] sm:$0xff] %v2569
      %2634 = vst [vmem:[#allocation3 + $0x1f0] sm:$0xff] %v2570
      %2635 = vst [vmem:[#allocation3 + $0x1f8] sm:$0xff] %v2571
    $region37: #{tpu_custom_call.1} parent=1 // pred_fallthru
      _
    // Predicated region
    $region38: #{tpu_custom_call.1} parent=1 // pred_check
      _
    $region39: #{tpu_custom_call.1} parent=1 // pred_check_branch
      %2637 = sbr.rel (0) target = $region41
    $region40: #{tpu_custom_call.1} parent=1 // pred_region
      %s2639 = ssub.s32 8192, 8064
      %2640 = vsyncadd [#allocation4], %s2639
      %s2641 = sshll.u32 [#allocation3], 4
      %s2642 = int_to_ptr.vmem [resolvable:$true] %s2641
      %2647 = dma.vmem_to_hbm [thread:$0]  %s2642, 8064, %s7, [#allocation4], 128, 128, 8
    $region41: #{tpu_custom_call.1} parent=1 // pred_fallthru
      _
    // Predicated region
    $region42: #{tpu_custom_call.1} parent=1 // pred_check
      _
    $region43: #{tpu_custom_call.1} parent=1 // pred_check_branch
      %2649 = sbr.rel (0) target = $region45
    $region44: #{tpu_custom_call.1} parent=1 // pred_region
      %2650 = dma.done [#allocation4], 8192
    $region45: #{tpu_custom_call.1} parent=1 // pred_fallthru
      _
    %2651 = vsyncpa [#allocation4], 1

// kernel: tpu_custom_call.1
$region0: #{tpu_custom_call.1}
  #allocation0 [shape = 'u32[]', space=smem, size = 0x4, offset = 0x4, fixed_abs, tag = 'smem constant byte address 0x4 - core index']
  #allocation1 [shape = 'u32[144,128]{1,0:T(1,128)}', space=vmem, size = 0x12000, scoped, tag = 'internal scratch']
  #allocation2 [shape = 'f32[512,128]{1,0:T(8,128)}', space=vmem, size = 0x40000, scoped, tag = 'scratch operand']
  %s0 = inlined_call_operand.vmem [shape: f32[500,32], index: 0, kind: input, shape index: {}]
  %s1 = inlined_call_operand.vmem [shape: f32[32,64], index: 1, kind: input, shape index: {}]
  %s2 = inlined_call_operand.vmem [shape: f32[1,64], index: 2, kind: input, shape index: {}]
  %s3 = inlined_call_operand.vmem [shape: f32[32,64], index: 3, kind: input, shape index: {}]
  %s4 = inlined_call_operand.vmem [shape: f32[1,64], index: 4, kind: input, shape index: {}]
  %s5 = inlined_call_operand.vmem [shape: f32[64,128], index: 5, kind: input, shape index: {}]
  %s6 = inlined_call_operand.vmem [shape: f32[1,128], index: 6, kind: input, shape index: {}]
  %s7 = inlined_call_operand.hbm [shape: f32[500,128], index: 7, kind: output, shape index: {}]
  %s8 = sld [smem:[#allocation0]]
  $region46: #{tpu_custom_call.1} parent=0
    _
  %s10 = ssub.s32 1, %s8
  %s11 = scalar_select 0, %s10, %s8
  $region1: #{tpu_custom_call.1} parent=0
    #allocation3 [shape = 'u8[262144]{0}', space=vmem, size = 0x40000, scoped, tag = 'output window, operand 0, single buffered']
    #allocation4 [shape = 's32[1]{0}', space=sflag, size = 0x4, scoped, tag = 'scoped memory for tpu_custom_call.1']
    %12 = vsyncpa [#allocation4], 0
    // Predicated region
    $region2: #{tpu_custom_call.1} parent=1 // pred_check
      _
    $region3: #{tpu_custom_call.1} parent=1 // pred_check_branch
      %14 = sbr.rel (0) target = $region5
    $region4: #{tpu_custom_call.1} parent=1 // pred_region
      _
    $region5: #{tpu_custom_call.1} parent=1 // pred_fallthru
      _
    // Predicated region
    $region6: #{tpu_custom_call.1} parent=1 // pred_check
      _
    $region7: #{tpu_custom_call.1} parent=1 // pred_check_branch
      %16 = sbr.rel (0) target = $region9
    $region8: #{tpu_custom_call.1} parent=1 // pred_region
      _
    $region9: #{tpu_custom_call.1} parent=1 // pred_fallthru
      _
    // Predicated region
    $region10: #{tpu_custom_call.1} parent=1 // pred_check
      _
    $region11: #{tpu_custom_call.1} parent=1 // pred_check_branch
      %18 = sbr.rel (0) target = $region13
    $region12: #{tpu_custom_call.1} parent=1 // pred_region
      _
    $region13: #{tpu_custom_call.1} parent=1 // pred_fallthru
      _
    // Predicated region
    $region14: #{tpu_custom_call.1} parent=1 // pred_check
      _
    $region15: #{tpu_custom_call.1} parent=1 // pred_check_branch
      %20 = sbr.rel (0) target = $region17
    $region16: #{tpu_custom_call.1} parent=1 // pred_region
      _
    $region17: #{tpu_custom_call.1} parent=1 // pred_fallthru
      _
    // Predicated region
    $region18: #{tpu_custom_call.1} parent=1 // pred_check
      _
    $region19: #{tpu_custom_call.1} parent=1 // pred_check_branch
      %22 = sbr.rel (0) target = $region21
    $region20: #{tpu_custom_call.1} parent=1 // pred_region
      _
    $region21: #{tpu_custom_call.1} parent=1 // pred_fallthru
      _
    // Predicated region
    $region22: #{tpu_custom_call.1} parent=1 // pred_check
      _
    $region23: #{tpu_custom_call.1} parent=1 // pred_check_branch
      %24 = sbr.rel (0) target = $region25
    $region24: #{tpu_custom_call.1} parent=1 // pred_region
      _
    $region25: #{tpu_custom_call.1} parent=1 // pred_fallthru
      _
    // Predicated region
    $region26: #{tpu_custom_call.1} parent=1 // pred_check
      _
    $region27: #{tpu_custom_call.1} parent=1 // pred_check_branch
      %26 = sbr.rel (0) target = $region29
    $region28: #{tpu_custom_call.1} parent=1 // pred_region
      _
    $region29: #{tpu_custom_call.1} parent=1 // pred_fallthru
      _
    %p27 = scmp.eq.s32.totalorder 0, 0
    // Predicated region
    $region30: #{tpu_custom_call.1} parent=1 // pred_check
      %p28 = pneg %p27
    $region31: #{tpu_custom_call.1} parent=1 // pred_check_branch
      %30 = sbr.rel (%p28) target = $region33
    $region32: #{tpu_custom_call.1} parent=1 // pred_region
      %31 = vst [vmem:[#allocation2] sm:$0xff] 0.0
      %32 = vst [vmem:[#allocation2 + $0x8] sm:$0xff] 0.0
      %33 = vst [vmem:[#allocation2 + $0x10] sm:$0xff] 0.0
      %34 = vst [vmem:[#allocation2 + $0x18] sm:$0xff] 0.0
      %35 = vst [vmem:[#allocation2 + $0x20] sm:$0xff] 0.0
      %36 = vst [vmem:[#allocation2 + $0x28] sm:$0xff] 0.0
      %37 = vst [vmem:[#allocation2 + $0x30] sm:$0xff] 0.0
      %38 = vst [vmem:[#allocation2 + $0x38] sm:$0xff] 0.0
      %39 = vst [vmem:[#allocation2 + $0x40] sm:$0xff] 0.0
      %40 = vst [vmem:[#allocation2 + $0x48] sm:$0xff] 0.0
      %41 = vst [vmem:[#allocation2 + $0x50] sm:$0xff] 0.0
      %42 = vst [vmem:[#allocation2 + $0x58] sm:$0xff] 0.0
      %43 = vst [vmem:[#allocation2 + $0x60] sm:$0xff] 0.0
      %44 = vst [vmem:[#allocation2 + $0x68] sm:$0xff] 0.0
      %45 = vst [vmem:[#allocation2 + $0x70] sm:$0xff] 0.0
      %46 = vst [vmem:[#allocation2 + $0x78] sm:$0xff] 0.0
      %47 = vst [vmem:[#allocation2 + $0x80] sm:$0xff] 0.0
      %48 = vst [vmem:[#allocation2 + $0x88] sm:$0xff] 0.0
      %49 = vst [vmem:[#allocation2 + $0x90] sm:$0xff] 0.0
      %50 = vst [vmem:[#allocation2 + $0x98] sm:$0xff] 0.0
      %51 = vst [vmem:[#allocation2 + $0xa0] sm:$0xff] 0.0
      %52 = vst [vmem:[#allocation2 + $0xa8] sm:$0xff] 0.0
      %53 = vst [vmem:[#allocation2 + $0xb0] sm:$0xff] 0.0
      %54 = vst [vmem:[#allocation2 + $0xb8] sm:$0xff] 0.0
      %55 = vst [vmem:[#allocation2 + $0xc0] sm:$0xff] 0.0
      %56 = vst [vmem:[#allocation2 + $0xc8] sm:$0xff] 0.0
      %57 = vst [vmem:[#allocation2 + $0xd0] sm:$0xff] 0.0
      %58 = vst [vmem:[#allocation2 + $0xd8] sm:$0xff] 0.0
      %59 = vst [vmem:[#allocation2 + $0xe0] sm:$0xff] 0.0
      %60 = vst [vmem:[#allocation2 + $0xe8] sm:$0xff] 0.0
      %61 = vst [vmem:[#allocation2 + $0xf0] sm:$0xff] 0.0
      %62 = vst [vmem:[#allocation2 + $0xf8] sm:$0xff] 0.0
      %63 = vst [vmem:[#allocation2 + $0x100] sm:$0xff] 0.0
      %64 = vst [vmem:[#allocation2 + $0x108] sm:$0xff] 0.0
      %65 = vst [vmem:[#allocation2 + $0x110] sm:$0xff] 0.0
      %66 = vst [vmem:[#allocation2 + $0x118] sm:$0xff] 0.0
      %67 = vst [vmem:[#allocation2 + $0x120] sm:$0xff] 0.0
      %68 = vst [vmem:[#allocation2 + $0x128] sm:$0xff] 0.0
      %69 = vst [vmem:[#allocation2 + $0x130] sm:$0xff] 0.0
      %70 = vst [vmem:[#allocation2 + $0x138] sm:$0xff] 0.0
      %71 = vst [vmem:[#allocation2 + $0x140] sm:$0xff] 0.0
      %72 = vst [vmem:[#allocation2 + $0x148] sm:$0xff] 0.0
      %73 = vst [vmem:[#allocation2 + $0x150] sm:$0xff] 0.0
      %74 = vst [vmem:[#allocation2 + $0x158] sm:$0xff] 0.0
      %75 = vst [vmem:[#allocation2 + $0x160] sm:$0xff] 0.0
      %76 = vst [vmem:[#allocation2 + $0x168] sm:$0xff] 0.0
      %77 = vst [vmem:[#allocation2 + $0x170] sm:$0xff] 0.0
      %78 = vst [vmem:[#allocation2 + $0x178] sm:$0xff] 0.0
      %79 = vst [vmem:[#allocation2 + $0x180] sm:$0xff] 0.0
      %80 = vst [vmem:[#allocation2 + $0x188] sm:$0xff] 0.0
      %81 = vst [vmem:[#allocation2 + $0x190] sm:$0xff] 0.0
      %82 = vst [vmem:[#allocation2 + $0x198] sm:$0xff] 0.0
      %83 = vst [vmem:[#allocation2 + $0x1a0] sm:$0xff] 0.0
      %84 = vst [vmem:[#allocation2 + $0x1a8] sm:$0xff] 0.0
      %85 = vst [vmem:[#allocation2 + $0x1b0] sm:$0xff] 0.0
      %86 = vst [vmem:[#allocation2 + $0x1b8] sm:$0xff] 0.0
      %87 = vst [vmem:[#allocation2 + $0x1c0] sm:$0xff] 0.0
      %88 = vst [vmem:[#allocation2 + $0x1c8] sm:$0xff] 0.0
      %89 = vst [vmem:[#allocation2 + $0x1d0] sm:$0xff] 0.0
      %90 = vst [vmem:[#allocation2 + $0x1d8] sm:$0xff] 0.0
      %91 = vst [vmem:[#allocation2 + $0x1e0] sm:$0xff] 0.0
      %92 = vst [vmem:[#allocation2 + $0x1e8] sm:$0xff] 0.0
      %93 = vst [vmem:[#allocation2 + $0x1f0] sm:$0xff] 0.0
      %94 = vst [vmem:[#allocation2 + $0x1f8] sm:$0xff] 0.0
    $region33: #{tpu_custom_call.1} parent=1 // pred_fallthru
      _
    %v95 = vld [vmem:[%s0] sm:$0xff]
    %v96 = vld [vmem:[%s0 + $0x8] sm:$0xff]
    %v97 = vld [vmem:[%s0 + $0x10] sm:$0xff]
    %v98 = vld [vmem:[%s0 + $0x18] sm:$0xff]
    %v99 = vld [vmem:[%s0 + $0x20] sm:$0xff]
    %v100 = vld [vmem:[%s0 + $0x28] sm:$0xff]
    %v101 = vld [vmem:[%s0 + $0x30] sm:$0xff]
    %v102 = vld [vmem:[%s0 + $0x38] sm:$0xff]
    %v103 = vld [vmem:[%s0 + $0x40] sm:$0xff]
    %v104 = vld [vmem:[%s0 + $0x48] sm:$0xff]
    %v105 = vld [vmem:[%s0 + $0x50] sm:$0xff]
    %v106 = vld [vmem:[%s0 + $0x58] sm:$0xff]
    %v107 = vld [vmem:[%s0 + $0x60] sm:$0xff]
    %v108 = vld [vmem:[%s0 + $0x68] sm:$0xff]
    %v109 = vld [vmem:[%s0 + $0x70] sm:$0xff]
    %v110 = vld [vmem:[%s0 + $0x78] sm:$0xff]
    %v111 = vld [vmem:[%s0 + $0x80] sm:$0xff]
    %v112 = vld [vmem:[%s0 + $0x88] sm:$0xff]
    %v113 = vld [vmem:[%s0 + $0x90] sm:$0xff]
    %v114 = vld [vmem:[%s0 + $0x98] sm:$0xff]
    %v115 = vld [vmem:[%s0 + $0xa0] sm:$0xff]
    %v116 = vld [vmem:[%s0 + $0xa8] sm:$0xff]
    %v117 = vld [vmem:[%s0 + $0xb0] sm:$0xff]
    %v118 = vld [vmem:[%s0 + $0xb8] sm:$0xff]
    %v119 = vld [vmem:[%s0 + $0xc0] sm:$0xff]
    %v120 = vld [vmem:[%s0 + $0xc8] sm:$0xff]
    %v121 = vld [vmem:[%s0 + $0xd0] sm:$0xff]
    %v122 = vld [vmem:[%s0 + $0xd8] sm:$0xff]
    %v123 = vld [vmem:[%s0 + $0xe0] sm:$0xff]
    %v124 = vld [vmem:[%s0 + $0xe8] sm:$0xff]
    %v125 = vld [vmem:[%s0 + $0xf0] sm:$0xff]
    %v126 = vld [vmem:[%s0 + $0xf8] sm:$0xff]
    %v127 = vld [vmem:[%s0 + $0x100] sm:$0xff]
    %v128 = vld [vmem:[%s0 + $0x108] sm:$0xff]
    %v129 = vld [vmem:[%s0 + $0x110] sm:$0xff]
    %v130 = vld [vmem:[%s0 + $0x118] sm:$0xff]
    %v131 = vld [vmem:[%s0 + $0x120] sm:$0xff]
    %v132 = vld [vmem:[%s0 + $0x128] sm:$0xff]
    %v133 = vld [vmem:[%s0 + $0x130] sm:$0xff]
    %v134 = vld [vmem:[%s0 + $0x138] sm:$0xff]
    %v135 = vld [vmem:[%s0 + $0x140] sm:$0xff]
    %v136 = vld [vmem:[%s0 + $0x148] sm:$0xff]
    %v137 = vld [vmem:[%s0 + $0x150] sm:$0xff]
    %v138 = vld [vmem:[%s0 + $0x158] sm:$0xff]
    %v139 = vld [vmem:[%s0 + $0x160] sm:$0xff]
    %v140 = vld [vmem:[%s0 + $0x168] sm:$0xff]
    %v141 = vld [vmem:[%s0 + $0x170] sm:$0xff]
    %v142 = vld [vmem:[%s0 + $0x178] sm:$0xff]
    %v143 = vld [vmem:[%s0 + $0x180] sm:$0xff]
    %v144 = vld [vmem:[%s0 + $0x188] sm:$0xff]
    %v145 = vld [vmem:[%s0 + $0x190] sm:$0xff]
    %v146 = vld [vmem:[%s0 + $0x198] sm:$0xff]
    %v147 = vld [vmem:[%s0 + $0x1a0] sm:$0xff]
    %v148 = vld [vmem:[%s0 + $0x1a8] sm:$0xff]
    %v149 = vld [vmem:[%s0 + $0x1b0] sm:$0xff]
    %v150 = vld [vmem:[%s0 + $0x1b8] sm:$0xff]
    %v151 = vld [vmem:[%s0 + $0x1c0] sm:$0xff]
    %v152 = vld [vmem:[%s0 + $0x1c8] sm:$0xff]
    %v153 = vld [vmem:[%s0 + $0x1d0] sm:$0xff]
    %v154 = vld [vmem:[%s0 + $0x1d8] sm:$0xff]
    %v155 = vld [vmem:[%s0 + $0x1e0] sm:$0xff]
    %v156 = vld [vmem:[%s0 + $0x1e8] sm:$0xff]
    %v157 = vld [vmem:[%s0 + $0x1f0] sm:$0xff]
    %v158 = vld [vmem:[%s0 + $0x1f8] sm:$0xff]
    %v159 = vld [vmem:[%s1] sm:$0xff]
    %v160 = vld [vmem:[%s1 + $0x8] sm:$0xff]
    %v161 = vld [vmem:[%s1 + $0x10] sm:$0xff]
    %v162 = vld [vmem:[%s1 + $0x18] sm:$0xff]
    %v163 = vld [vmem:[%s2] sm:$0x1]
    %v165 = vlaneseq
    %v166 = vshrl.u32 %v165, 7
    %v167 = vsub.s32 0, %v166
    %v168 = vrot.slane %v163, %v167
    %vm170 = vcmask 261120
    %v172 = vsel %vm170, %v95, 0
    %v175 = vsel %vm170, %v96, 0
    %v178 = vsel %vm170, %v97, 0
    %v181 = vsel %vm170, %v98, 0
    %v184 = vsel %vm170, %v99, 0
    %v187 = vsel %vm170, %v100, 0
    %v190 = vsel %vm170, %v101, 0
    %v193 = vsel %vm170, %v102, 0
    %v196 = vsel %vm170, %v103, 0
    %v199 = vsel %vm170, %v104, 0
    %v202 = vsel %vm170, %v105, 0
    %v205 = vsel %vm170, %v106, 0
    %v208 = vsel %vm170, %v107, 0
    %v211 = vsel %vm170, %v108, 0
    %v214 = vsel %vm170, %v109, 0
    %v217 = vsel %vm170, %v110, 0
    %v220 = vsel %vm170, %v111, 0
    %v223 = vsel %vm170, %v112, 0
    %v226 = vsel %vm170, %v113, 0
    %v229 = vsel %vm170, %v114, 0
    %v232 = vsel %vm170, %v115, 0
    %v235 = vsel %vm170, %v116, 0
    %v238 = vsel %vm170, %v117, 0
    %v241 = vsel %vm170, %v118, 0
    %v244 = vsel %vm170, %v119, 0
    %v247 = vsel %vm170, %v120, 0
    %v250 = vsel %vm170, %v121, 0
    %v253 = vsel %vm170, %v122, 0
    %v256 = vsel %vm170, %v123, 0
    %v259 = vsel %vm170, %v124, 0
    %v262 = vsel %vm170, %v125, 0
    %v265 = vsel %vm170, %v126, 0
    %v268 = vsel %vm170, %v127, 0
    %v271 = vsel %vm170, %v128, 0
    %v274 = vsel %vm170, %v129, 0
    %v277 = vsel %vm170, %v130, 0
    %v280 = vsel %vm170, %v131, 0
    %v283 = vsel %vm170, %v132, 0
    %v286 = vsel %vm170, %v133, 0
    %v289 = vsel %vm170, %v134, 0
    %v292 = vsel %vm170, %v135, 0
    %v295 = vsel %vm170, %v136, 0
    %v298 = vsel %vm170, %v137, 0
    %v301 = vsel %vm170, %v138, 0
    %v304 = vsel %vm170, %v139, 0
    %v307 = vsel %vm170, %v140, 0
    %v310 = vsel %vm170, %v141, 0
    %v313 = vsel %vm170, %v142, 0
    %v316 = vsel %vm170, %v143, 0
    %v319 = vsel %vm170, %v144, 0
    %v322 = vsel %vm170, %v145, 0
    %v325 = vsel %vm170, %v146, 0
    %v328 = vsel %vm170, %v147, 0
    %v331 = vsel %vm170, %v148, 0
    %v334 = vsel %vm170, %v149, 0
    %v337 = vsel %vm170, %v150, 0
    %v340 = vsel %vm170, %v151, 0
    %v343 = vsel %vm170, %v152, 0
    %v346 = vsel %vm170, %v153, 0
    %v349 = vsel %vm170, %v154, 0
    %v352 = vsel %vm170, %v155, 0
    %v355 = vsel %vm170, %v156, 0
    %v358 = vsel %vm170, %v157, 0
    %v361 = vsel %vm170, %v158, 0
    %363 = vmatprep.subr.mxu0 0.0
    %364 = vmatpush1.msra.mxu0 %v159
    %365 = vmatprep.subr.mxu0 0.0
    %366 = vmatpush1.msra.mxu0 %v160
    %367 = vmatprep.subr.mxu0 0.0
    %368 = vmatpush1.msra.mxu0 %v161
    %369 = vmatprep.subr.mxu0 0.0
    %370 = vmatpush1.msra.mxu0 %v162
    %371 = vmatprep.subr.mxu0 0.0
    %372 = vmatpush1.msra.mxu0 0.0
    %373 = vmatprep.subr.mxu0 0.0
    %374 = vmatpush1.msra.mxu0 0.0
    %375 = vmatprep.subr.mxu0 0.0
    %376 = vmatpush1.msra.mxu0 0.0
    %377 = vmatprep.subr.mxu0 0.0
    %378 = vmatpush1.msra.mxu0 0.0
    %379 = vmatprep.subr.mxu0 0.0
    %380 = vmatpush1.msra.mxu0 0.0
    %381 = vmatprep.subr.mxu0 0.0
    %382 = vmatpush1.msra.mxu0 0.0
    %383 = vmatprep.subr.mxu0 0.0
    %384 = vmatpush1.msra.mxu0 0.0
    %385 = vmatprep.subr.mxu0 0.0
    %386 = vmatpush1.msra.mxu0 0.0
    %387 = vmatprep.subr.mxu0 0.0
    %388 = vmatpush1.msra.mxu0 0.0
    %389 = vmatprep.subr.mxu0 0.0
    %390 = vmatpush1.msra.mxu0 0.0
    %391 = vmatprep.subr.mxu0 0.0
    %392 = vmatpush1.msra.mxu0 0.0
    %393 = vmatprep.subr.mxu0 0.0
    %394 = vmatpush1.msra.mxu0 0.0
    %395 = vmatprep.subr.mxu0 0.0
    %396 = vmatpush1.msra.mxu0 0.0
    %397 = vmatprep.subr.mxu0 0.0
    %398 = vmatpush1.msra.mxu0 0.0
    %399 = vmatprep.subr.mxu0 0.0
    %400 = vmatpush1.msra.mxu0 0.0
    %401 = vmatprep.subr.mxu0 0.0
    %402 = vmatpush1.msra.mxu0 0.0
    %403 = vmatprep.subr.mxu0 0.0
    %404 = vmatpush1.msra.mxu0 0.0
    %405 = vmatprep.subr.mxu0 0.0
    %406 = vmatpush1.msra.mxu0 0.0
    %407 = vmatprep.subr.mxu0 0.0
    %408 = vmatpush1.msra.mxu0 0.0
    %409 = vmatprep.subr.mxu0 0.0
    %410 = vmatpush1.msra.mxu0 0.0
    %411 = vmatprep.subr.mxu0 0.0
    %412 = vmatpush1.msra.mxu0 0.0
    %413 = vmatprep.subr.mxu0 0.0
    %414 = vmatpush1.msra.mxu0 0.0
    %415 = vmatprep.subr.mxu0 0.0
    %416 = vmatpush1.msra.mxu0 0.0
    %417 = vmatprep.subr.mxu0 0.0
    %418 = vmatpush1.msra.mxu0 0.0
    %419 = vmatprep.subr.mxu0 0.0
    %420 = vmatpush1.msra.mxu0 0.0
    %421 = vmatprep.subr.mxu0 0.0
    %422 = vmatpush1.msra.mxu0 0.0
    %423 = vmatprep.subr.mxu0 0.0
    %424 = vmatpush1.msra.mxu0 0.0
    %425 = vmatprep.subr.mxu0 0.0
    %426 = vmatpush1.msra.mxu0 0.0
    %427 = vmatprep.mubr.f32.mxu0 0.0
    %428 = vmatmul.mubr.f32.gmra.mrb[0].mxu0 %v172
    %v429 = vpop.f32.mrb[0].mxu0
    %v430 = vadd.f32 %v168, %v429
    %v431 = vpop.f32.mrb[0].mxu0
    %432 = vmatprep.mubr.f32.mxu0 0.0
    %433 = vmatmul.mubr.f32.gmra.mrb[0].mxu0 %v175
    %v434 = vpop.f32.mrb[0].mxu0
    %v435 = vadd.f32 %v168, %v434
    %v436 = vpop.f32.mrb[0].mxu0
    %437 = vmatprep.mubr.f32.mxu0 0.0
    %438 = vmatmul.mubr.f32.gmra.mrb[0].mxu0 %v178
    %v439 = vpop.f32.mrb[0].mxu0
    %v440 = vadd.f32 %v168, %v439
    %v441 = vpop.f32.mrb[0].mxu0
    %442 = vmatprep.mubr.f32.mxu0 0.0
    %443 = vmatmul.mubr.f32.gmra.mrb[0].mxu0 %v181
    %v444 = vpop.f32.mrb[0].mxu0
    %v445 = vadd.f32 %v168, %v444
    %v446 = vpop.f32.mrb[0].mxu0
    %447 = vmatprep.mubr.f32.mxu0 0.0
    %448 = vmatmul.mubr.f32.gmra.mrb[0].mxu0 %v184
    %v449 = vpop.f32.mrb[0].mxu0
    %v450 = vadd.f32 %v168, %v449
    %v451 = vpop.f32.mrb[0].mxu0
    %452 = vmatprep.mubr.f32.mxu0 0.0
    %453 = vmatmul.mubr.f32.gmra.mrb[0].mxu0 %v187
    %v454 = vpop.f32.mrb[0].mxu0
    %v455 = vadd.f32 %v168, %v454
    %v456 = vpop.f32.mrb[0].mxu0
    %457 = vmatprep.mubr.f32.mxu0 0.0
    %458 = vmatmul.mubr.f32.gmra.mrb[0].mxu0 %v190
    %v459 = vpop.f32.mrb[0].mxu0
    %v460 = vadd.f32 %v168, %v459
    %v461 = vpop.f32.mrb[0].mxu0
    %462 = vmatprep.mubr.f32.mxu0 0.0
    %463 = vmatmul.mubr.f32.gmra.mrb[0].mxu0 %v193
    %v464 = vpop.f32.mrb[0].mxu0
    %v465 = vadd.f32 %v168, %v464
    %v466 = vpop.f32.mrb[0].mxu0
    %467 = vmatprep.mubr.f32.mxu0 0.0
    %468 = vmatmul.mubr.f32.gmra.mrb[0].mxu0 %v196
    %v469 = vpop.f32.mrb[0].mxu0
    %v470 = vadd.f32 %v168, %v469
    %v471 = vpop.f32.mrb[0].mxu0
    %472 = vmatprep.mubr.f32.mxu0 0.0
    %473 = vmatmul.mubr.f32.gmra.mrb[0].mxu0 %v199
    %v474 = vpop.f32.mrb[0].mxu0
    %v475 = vadd.f32 %v168, %v474
    %v476 = vpop.f32.mrb[0].mxu0
    %477 = vmatprep.mubr.f32.mxu0 0.0
    %478 = vmatmul.mubr.f32.gmra.mrb[0].mxu0 %v202
    %v479 = vpop.f32.mrb[0].mxu0
    %v480 = vadd.f32 %v168, %v479
    %v481 = vpop.f32.mrb[0].mxu0
    %482 = vmatprep.mubr.f32.mxu0 0.0
    %483 = vmatmul.mubr.f32.gmra.mrb[0].mxu0 %v205
    %v484 = vpop.f32.mrb[0].mxu0
    %v485 = vadd.f32 %v168, %v484
    %v486 = vpop.f32.mrb[0].mxu0
    %487 = vmatprep.mubr.f32.mxu0 0.0
    %488 = vmatmul.mubr.f32.gmra.mrb[0].mxu0 %v208
    %v489 = vpop.f32.mrb[0].mxu0
    %v490 = vadd.f32 %v168, %v489
    %v491 = vpop.f32.mrb[0].mxu0
    %492 = vmatprep.mubr.f32.mxu0 0.0
    %493 = vmatmul.mubr.f32.gmra.mrb[0].mxu0 %v211
    %v494 = vpop.f32.mrb[0].mxu0
    %v495 = vadd.f32 %v168, %v494
    %v496 = vpop.f32.mrb[0].mxu0
    %497 = vmatprep.mubr.f32.mxu0 0.0
    %498 = vmatmul.mubr.f32.gmra.mrb[0].mxu0 %v214
    %v499 = vpop.f32.mrb[0].mxu0
    %v500 = vadd.f32 %v168, %v499
    %v501 = vpop.f32.mrb[0].mxu0
    %502 = vmatprep.mubr.f32.mxu0 0.0
    %503 = vmatmul.mubr.f32.gmra.mrb[0].mxu0 %v217
    %v504 = vpop.f32.mrb[0].mxu0
    %v505 = vadd.f32 %v168, %v504
    %v506 = vpop.f32.mrb[0].mxu0
    %507 = vmatprep.mubr.f32.mxu0 0.0
    %508 = vmatmul.mubr.f32.gmra.mrb[0].mxu0 %v220
    %v509 = vpop.f32.mrb[0].mxu0
    %v510 = vadd.f32 %v168, %v509
    %v511 = vpop.f32.mrb[0].mxu0
    %512 = vmatprep.mubr.f32.mxu0 0.0
    %513 = vmatmul.mubr.f32.gmra.mrb[0].mxu0 %v223
    %v514 = vpop.f32.mrb[0].mxu0
    %v515 = vadd.f32 %v168, %v514
    %v516 = vpop.f32.mrb[0].mxu0
    %517 = vmatprep.mubr.f32.mxu0 0.0
    %518 = vmatmul.mubr.f32.gmra.mrb[0].mxu0 %v226
    %v519 = vpop.f32.mrb[0].mxu0
    %v520 = vadd.f32 %v168, %v519
    %v521 = vpop.f32.mrb[0].mxu0
    %522 = vmatprep.mubr.f32.mxu0 0.0
    %523 = vmatmul.mubr.f32.gmra.mrb[0].mxu0 %v229
    %v524 = vpop.f32.mrb[0].mxu0
    %v525 = vadd.f32 %v168, %v524
    %v526 = vpop.f32.mrb[0].mxu0
    %527 = vmatprep.mubr.f32.mxu0 0.0
    %528 = vmatmul.mubr.f32.gmra.mrb[0].mxu0 %v232
    %v529 = vpop.f32.mrb[0].mxu0
    %v530 = vadd.f32 %v168, %v529
    %v531 = vpop.f32.mrb[0].mxu0
    %532 = vmatprep.mubr.f32.mxu0 0.0
    %533 = vmatmul.mubr.f32.gmra.mrb[0].mxu0 %v235
    %v534 = vpop.f32.mrb[0].mxu0
    %v535 = vadd.f32 %v168, %v534
    %v536 = vpop.f32.mrb[0].mxu0
    %537 = vmatprep.mubr.f32.mxu0 0.0
    %538 = vmatmul.mubr.f32.gmra.mrb[0].mxu0 %v238
    %v539 = vpop.f32.mrb[0].mxu0
    %v540 = vadd.f32 %v168, %v539
    %v541 = vpop.f32.mrb[0].mxu0
    %542 = vmatprep.mubr.f32.mxu0 0.0
    %543 = vmatmul.mubr.f32.gmra.mrb[0].mxu0 %v241
    %v544 = vpop.f32.mrb[0].mxu0
    %v545 = vadd.f32 %v168, %v544
    %v546 = vpop.f32.mrb[0].mxu0
    %547 = vmatprep.mubr.f32.mxu0 0.0
    %548 = vmatmul.mubr.f32.gmra.mrb[0].mxu0 %v244
    %v549 = vpop.f32.mrb[0].mxu0
    %v550 = vadd.f32 %v168, %v549
    %v551 = vpop.f32.mrb[0].mxu0
    %552 = vmatprep.mubr.f32.mxu0 0.0
    %553 = vmatmul.mubr.f32.gmra.mrb[0].mxu0 %v247
    %v554 = vpop.f32.mrb[0].mxu0
    %v555 = vadd.f32 %v168, %v554
    %v556 = vpop.f32.mrb[0].mxu0
    %557 = vmatprep.mubr.f32.mxu0 0.0
    %558 = vmatmul.mubr.f32.gmra.mrb[0].mxu0 %v250
    %v559 = vpop.f32.mrb[0].mxu0
    %v560 = vadd.f32 %v168, %v559
    %v561 = vpop.f32.mrb[0].mxu0
    %562 = vmatprep.mubr.f32.mxu0 0.0
    %563 = vmatmul.mubr.f32.gmra.mrb[0].mxu0 %v253
    %v564 = vpop.f32.mrb[0].mxu0
    %v565 = vadd.f32 %v168, %v564
    %v566 = vpop.f32.mrb[0].mxu0
    %567 = vmatprep.mubr.f32.mxu0 0.0
    %568 = vmatmul.mubr.f32.gmra.mrb[0].mxu0 %v256
    %v569 = vpop.f32.mrb[0].mxu0
    %v570 = vadd.f32 %v168, %v569
    %v571 = vpop.f32.mrb[0].mxu0
    %572 = vmatprep.mubr.f32.mxu0 0.0
    %573 = vmatmul.mubr.f32.gmra.mrb[0].mxu0 %v259
    %v574 = vpop.f32.mrb[0].mxu0
    %v575 = vadd.f32 %v168, %v574
    %v576 = vpop.f32.mrb[0].mxu0
    %577 = vmatprep.mubr.f32.mxu0 0.0
    %578 = vmatmul.mubr.f32.gmra.mrb[0].mxu0 %v262
    %v579 = vpop.f32.mrb[0].mxu0
    %v580 = vadd.f32 %v168, %v579
    %v581 = vpop.f32.mrb[0].mxu0
    %582 = vmatprep.mubr.f32.mxu0 0.0
    %583 = vmatmul.mubr.f32.gmra.mrb[0].mxu0 %v265
    %v584 = vpop.f32.mrb[0].mxu0
    %v585 = vadd.f32 %v168, %v584
    %v586 = vpop.f32.mrb[0].mxu0
    %587 = vmatprep.mubr.f32.mxu0 0.0
    %588 = vmatmul.mubr.f32.gmra.mrb[0].mxu0 %v268
    %v589 = vpop.f32.mrb[0].mxu0
    %v590 = vadd.f32 %v168, %v589
    %v591 = vpop.f32.mrb[0].mxu0
    %592 = vmatprep.mubr.f32.mxu0 0.0
    %593 = vmatmul.mubr.f32.gmra.mrb[0].mxu0 %v271
    %v594 = vpop.f32.mrb[0].mxu0
    %v595 = vadd.f32 %v168, %v594
    %v596 = vpop.f32.mrb[0].mxu0
    %597 = vmatprep.mubr.f32.mxu0 0.0
    %598 = vmatmul.mubr.f32.gmra.mrb[0].mxu0 %v274
    %v599 = vpop.f32.mrb[0].mxu0
    %v600 = vadd.f32 %v168, %v599
    %v601 = vpop.f32.mrb[0].mxu0
    %602 = vmatprep.mubr.f32.mxu0 0.0
    %603 = vmatmul.mubr.f32.gmra.mrb[0].mxu0 %v277
    %v604 = vpop.f32.mrb[0].mxu0
    %v605 = vadd.f32 %v168, %v604
    %v606 = vpop.f32.mrb[0].mxu0
    %607 = vmatprep.mubr.f32.mxu0 0.0
    %608 = vmatmul.mubr.f32.gmra.mrb[0].mxu0 %v280
    %v609 = vpop.f32.mrb[0].mxu0
    %v610 = vadd.f32 %v168, %v609
    %v611 = vpop.f32.mrb[0].mxu0
    %612 = vmatprep.mubr.f32.mxu0 0.0
    %613 = vmatmul.mubr.f32.gmra.mrb[0].mxu0 %v283
    %v614 = vpop.f32.mrb[0].mxu0
    %v615 = vadd.f32 %v168, %v614
    %v616 = vpop.f32.mrb[0].mxu0
    %617 = vmatprep.mubr.f32.mxu0 0.0
    %618 = vmatmul.mubr.f32.gmra.mrb[0].mxu0 %v286
    %v619 = vpop.f32.mrb[0].mxu0
    %v620 = vadd.f32 %v168, %v619
    %v621 = vpop.f32.mrb[0].mxu0
    %622 = vmatprep.mubr.f32.mxu0 0.0
    %623 = vmatmul.mubr.f32.gmra.mrb[0].mxu0 %v289
    %v624 = vpop.f32.mrb[0].mxu0
    %v625 = vadd.f32 %v168, %v624
    %v626 = vpop.f32.mrb[0].mxu0
    %627 = vmatprep.mubr.f32.mxu0 0.0
    %628 = vmatmul.mubr.f32.gmra.mrb[0].mxu0 %v292
    %v629 = vpop.f32.mrb[0].mxu0
    %v630 = vadd.f32 %v168, %v629
    %v631 = vpop.f32.mrb[0].mxu0
    %632 = vmatprep.mubr.f32.mxu0 0.0
    %633 = vmatmul.mubr.f32.gmra.mrb[0].mxu0 %v295
    %v634 = vpop.f32.mrb[0].mxu0
    %v635 = vadd.f32 %v168, %v634
    %v636 = vpop.f32.mrb[0].mxu0
    %637 = vmatprep.mubr.f32.mxu0 0.0
    %638 = vmatmul.mubr.f32.gmra.mrb[0].mxu0 %v298
    %v639 = vpop.f32.mrb[0].mxu0
    %v640 = vadd.f32 %v168, %v639
    %v641 = vpop.f32.mrb[0].mxu0
    %642 = vmatprep.mubr.f32.mxu0 0.0
    %643 = vmatmul.mubr.f32.gmra.mrb[0].mxu0 %v301
    %v644 = vpop.f32.mrb[0].mxu0
    %v645 = vadd.f32 %v168, %v644
    %v646 = vpop.f32.mrb[0].mxu0
    %647 = vmatprep.mubr.f32.mxu0 0.0
    %648 = vmatmul.mubr.f32.gmra.mrb[0].mxu0 %v304
    %v649 = vpop.f32.mrb[0].mxu0
    %v650 = vadd.f32 %v168, %v649
    %v651 = vpop.f32.mrb[0].mxu0
    %652 = vmatprep.mubr.f32.mxu0 0.0
    %653 = vmatmul.mubr.f32.gmra.mrb[0].mxu0 %v307
    %v654 = vpop.f32.mrb[0].mxu0
    %v655 = vadd.f32 %v168, %v654
    %v656 = vpop.f32.mrb[0].mxu0
    %657 = vmatprep.mubr.f32.mxu0 0.0
    %658 = vmatmul.mubr.f32.gmra.mrb[0].mxu0 %v310
    %v659 = vpop.f32.mrb[0].mxu0
    %v660 = vadd.f32 %v168, %v659
    %v661 = vpop.f32.mrb[0].mxu0
    %662 = vmatprep.mubr.f32.mxu0 0.0
    %663 = vmatmul.mubr.f32.gmra.mrb[0].mxu0 %v313
    %v664 = vpop.f32.mrb[0].mxu0
    %v665 = vadd.f32 %v168, %v664
    %v666 = vpop.f32.mrb[0].mxu0
    %667 = vmatprep.mubr.f32.mxu0 0.0
    %668 = vmatmul.mubr.f32.gmra.mrb[0].mxu0 %v316
    %v669 = vpop.f32.mrb[0].mxu0
    %v670 = vadd.f32 %v168, %v669
    %v671 = vpop.f32.mrb[0].mxu0
    %672 = vmatprep.mubr.f32.mxu0 0.0
    %673 = vmatmul.mubr.f32.gmra.mrb[0].mxu0 %v319
    %v674 = vpop.f32.mrb[0].mxu0
    %v675 = vadd.f32 %v168, %v674
    %v676 = vpop.f32.mrb[0].mxu0
    %677 = vmatprep.mubr.f32.mxu0 0.0
    %678 = vmatmul.mubr.f32.gmra.mrb[0].mxu0 %v322
    %v679 = vpop.f32.mrb[0].mxu0
    %v680 = vadd.f32 %v168, %v679
    %v681 = vpop.f32.mrb[0].mxu0
    %682 = vmatprep.mubr.f32.mxu0 0.0
    %683 = vmatmul.mubr.f32.gmra.mrb[0].mxu0 %v325
    %v684 = vpop.f32.mrb[0].mxu0
    %v685 = vadd.f32 %v168, %v684
    %v686 = vpop.f32.mrb[0].mxu0
    %687 = vmatprep.mubr.f32.mxu0 0.0
    %688 = vmatmul.mubr.f32.gmra.mrb[0].mxu0 %v328
    %v689 = vpop.f32.mrb[0].mxu0
    %v690 = vadd.f32 %v168, %v689
    %v691 = vpop.f32.mrb[0].mxu0
    %692 = vmatprep.mubr.f32.mxu0 0.0
    %693 = vmatmul.mubr.f32.gmra.mrb[0].mxu0 %v331
    %v694 = vpop.f32.mrb[0].mxu0
    %v695 = vadd.f32 %v168, %v694
    %v696 = vpop.f32.mrb[0].mxu0
    %697 = vmatprep.mubr.f32.mxu0 0.0
    %698 = vmatmul.mubr.f32.gmra.mrb[0].mxu0 %v334
    %v699 = vpop.f32.mrb[0].mxu0
    %v700 = vadd.f32 %v168, %v699
    %v701 = vpop.f32.mrb[0].mxu0
    %702 = vmatprep.mubr.f32.mxu0 0.0
    %703 = vmatmul.mubr.f32.gmra.mrb[0].mxu0 %v337
    %v704 = vpop.f32.mrb[0].mxu0
    %v705 = vadd.f32 %v168, %v704
    %v706 = vpop.f32.mrb[0].mxu0
    %707 = vmatprep.mubr.f32.mxu0 0.0
    %708 = vmatmul.mubr.f32.gmra.mrb[0].mxu0 %v340
    %v709 = vpop.f32.mrb[0].mxu0
    %v710 = vadd.f32 %v168, %v709
    %v711 = vpop.f32.mrb[0].mxu0
    %712 = vmatprep.mubr.f32.mxu0 0.0
    %713 = vmatmul.mubr.f32.gmra.mrb[0].mxu0 %v343
    %v714 = vpop.f32.mrb[0].mxu0
    %v715 = vadd.f32 %v168, %v714
    %v716 = vpop.f32.mrb[0].mxu0
    %717 = vmatprep.mubr.f32.mxu0 0.0
    %718 = vmatmul.mubr.f32.gmra.mrb[0].mxu0 %v346
    %v719 = vpop.f32.mrb[0].mxu0
    %v720 = vadd.f32 %v168, %v719
    %v721 = vpop.f32.mrb[0].mxu0
    %722 = vmatprep.mubr.f32.mxu0 0.0
    %723 = vmatmul.mubr.f32.gmra.mrb[0].mxu0 %v349
    %v724 = vpop.f32.mrb[0].mxu0
    %v725 = vadd.f32 %v168, %v724
    %v726 = vpop.f32.mrb[0].mxu0
    %727 = vmatprep.mubr.f32.mxu0 0.0
    %728 = vmatmul.mubr.f32.gmra.mrb[0].mxu0 %v352
    %v729 = vpop.f32.mrb[0].mxu0
    %v730 = vadd.f32 %v168, %v729
    %v731 = vpop.f32.mrb[0].mxu0
    %732 = vmatprep.mubr.f32.mxu0 0.0
    %733 = vmatmul.mubr.f32.gmra.mrb[0].mxu0 %v355
    %v734 = vpop.f32.mrb[0].mxu0
    %v735 = vadd.f32 %v168, %v734
    %v736 = vpop.f32.mrb[0].mxu0
    %737 = vmatprep.mubr.f32.mxu0 0.0
    %738 = vmatmul.mubr.f32.gmra.mrb[0].mxu0 %v358
    %v739 = vpop.f32.mrb[0].mxu0
    %v740 = vadd.f32 %v168, %v739
    %v741 = vpop.f32.mrb[0].mxu0
    %742 = vmatprep.mubr.f32.mxu0 0.0
    %743 = vmatmul.mubr.f32.gmra.mrb[0].mxu0 %v361
    %v744 = vpop.f32.mrb[0].mxu0
    %v745 = vadd.f32 %v168, %v744
    %v746 = vpop.f32.mrb[0].mxu0
    %747 = vdwg.mxu0
    %v748 = vld [vmem:[%s3] sm:$0xff]
    %v749 = vld [vmem:[%s3 + $0x8] sm:$0xff]
    %v750 = vld [vmem:[%s3 + $0x10] sm:$0xff]
    %v751 = vld [vmem:[%s3 + $0x18] sm:$0xff]
    %v752 = vld [vmem:[%s4] sm:$0x1]
    %v754 = vlaneseq
    %v755 = vshrl.u32 %v754, 7
    %v756 = vsub.s32 0, %v755
    %v757 = vrot.slane %v752, %v756
    %759 = vmatprep.subr.mxu0 0.0
    %760 = vmatpush1.msra.mxu0 %v748
    %761 = vmatprep.subr.mxu0 0.0
    %762 = vmatpush1.msra.mxu0 %v749
    %763 = vmatprep.subr.mxu0 0.0
    %764 = vmatpush1.msra.mxu0 %v750
    %765 = vmatprep.subr.mxu0 0.0
    %766 = vmatpush1.msra.mxu0 %v751
    %767 = vmatprep.subr.mxu0 0.0
    %768 = vmatpush1.msra.mxu0 0.0
    %769 = vmatprep.subr.mxu0 0.0
    %770 = vmatpush1.msra.mxu0 0.0
    %771 = vmatprep.subr.mxu0 0.0
    %772 = vmatpush1.msra.mxu0 0.0
    %773 = vmatprep.subr.mxu0 0.0
    %774 = vmatpush1.msra.mxu0 0.0
    %775 = vmatprep.subr.mxu0 0.0
    %776 = vmatpush1.msra.mxu0 0.0
    %777 = vmatprep.subr.mxu0 0.0
    %778 = vmatpush1.msra.mxu0 0.0
    %779 = vmatprep.subr.mxu0 0.0
    %780 = vmatpush1.msra.mxu0 0.0
    %781 = vmatprep.subr.mxu0 0.0
    %782 = vmatpush1.msra.mxu0 0.0
    %783 = vmatprep.subr.mxu0 0.0
    %784 = vmatpush1.msra.mxu0 0.0
    %785 = vmatprep.subr.mxu0 0.0
    %786 = vmatpush1.msra.mxu0 0.0
    %787 = vmatprep.subr.mxu0 0.0
    %788 = vmatpush1.msra.mxu0 0.0
    %789 = vmatprep.subr.mxu0 0.0
    %790 = vmatpush1.msra.mxu0 0.0
    %791 = vmatprep.subr.mxu0 0.0
    %792 = vmatpush1.msra.mxu0 0.0
    %793 = vmatprep.subr.mxu0 0.0
    %794 = vmatpush1.msra.mxu0 0.0
    %795 = vmatprep.subr.mxu0 0.0
    %796 = vmatpush1.msra.mxu0 0.0
    %797 = vmatprep.subr.mxu0 0.0
    %798 = vmatpush1.msra.mxu0 0.0
    %799 = vmatprep.subr.mxu0 0.0
    %800 = vmatpush1.msra.mxu0 0.0
    %801 = vmatprep.subr.mxu0 0.0
    %802 = vmatpush1.msra.mxu0 0.0
    %803 = vmatprep.subr.mxu0 0.0
    %804 = vmatpush1.msra.mxu0 0.0
    %805 = vmatprep.subr.mxu0 0.0
    %806 = vmatpush1.msra.mxu0 0.0
    %807 = vmatprep.subr.mxu0 0.0
    %808 = vmatpush1.msra.mxu0 0.0
    %809 = vmatprep.subr.mxu0 0.0
    %810 = vmatpush1.msra.mxu0 0.0
    %811 = vmatprep.subr.mxu0 0.0
    %812 = vmatpush1.msra.mxu0 0.0
    %813 = vmatprep.subr.mxu0 0.0
    %814 = vmatpush1.msra.mxu0 0.0
    %815 = vmatprep.subr.mxu0 0.0
    %816 = vmatpush1.msra.mxu0 0.0
    %817 = vmatprep.subr.mxu0 0.0
    %818 = vmatpush1.msra.mxu0 0.0
    %819 = vmatprep.subr.mxu0 0.0
    %820 = vmatpush1.msra.mxu0 0.0
    %821 = vmatprep.subr.mxu0 0.0
    %822 = vmatpush1.msra.mxu0 0.0
    %823 = vmatprep.mubr.f32.mxu0 0.0
    %824 = vmatmul.mubr.f32.gmra.mrb[0].mxu0 %v172
    %v825 = vpop.f32.mrb[0].mxu0
    %v826 = vadd.f32 %v757, %v825
    %v827 = vpop.f32.mrb[0].mxu0
    %828 = vmatprep.mubr.f32.mxu0 0.0
    %829 = vmatmul.mubr.f32.gmra.mrb[0].mxu0 %v175
    %v830 = vpop.f32.mrb[0].mxu0
    %v831 = vadd.f32 %v757, %v830
    %v832 = vpop.f32.mrb[0].mxu0
    %833 = vmatprep.mubr.f32.mxu0 0.0
    %834 = vmatmul.mubr.f32.gmra.mrb[0].mxu0 %v178
    %v835 = vpop.f32.mrb[0].mxu0
    %v836 = vadd.f32 %v757, %v835
    %v837 = vpop.f32.mrb[0].mxu0
    %838 = vmatprep.mubr.f32.mxu0 0.0
    %839 = vmatmul.mubr.f32.gmra.mrb[0].mxu0 %v181
    %v840 = vpop.f32.mrb[0].mxu0
    %v841 = vadd.f32 %v757, %v840
    %v842 = vpop.f32.mrb[0].mxu0
    %843 = vmatprep.mubr.f32.mxu0 0.0
    %844 = vmatmul.mubr.f32.gmra.mrb[0].mxu0 %v184
    %v845 = vpop.f32.mrb[0].mxu0
    %v846 = vadd.f32 %v757, %v845
    %v847 = vpop.f32.mrb[0].mxu0
    %848 = vmatprep.mubr.f32.mxu0 0.0
    %849 = vmatmul.mubr.f32.gmra.mrb[0].mxu0 %v187
    %v850 = vpop.f32.mrb[0].mxu0
    %v851 = vadd.f32 %v757, %v850
    %v852 = vpop.f32.mrb[0].mxu0
    %853 = vmatprep.mubr.f32.mxu0 0.0
    %854 = vmatmul.mubr.f32.gmra.mrb[0].mxu0 %v190
    %v855 = vpop.f32.mrb[0].mxu0
    %v856 = vadd.f32 %v757, %v855
    %v857 = vpop.f32.mrb[0].mxu0
    %858 = vmatprep.mubr.f32.mxu0 0.0
    %859 = vmatmul.mubr.f32.gmra.mrb[0].mxu0 %v193
    %v860 = vpop.f32.mrb[0].mxu0
    %v861 = vadd.f32 %v757, %v860
    %v862 = vpop.f32.mrb[0].mxu0
    %863 = vmatprep.mubr.f32.mxu0 0.0
    %864 = vmatmul.mubr.f32.gmra.mrb[0].mxu0 %v196
    %v865 = vpop.f32.mrb[0].mxu0
    %v866 = vadd.f32 %v757, %v865
    %v867 = vpop.f32.mrb[0].mxu0
    %868 = vmatprep.mubr.f32.mxu0 0.0
    %869 = vmatmul.mubr.f32.gmra.mrb[0].mxu0 %v199
    %v870 = vpop.f32.mrb[0].mxu0
    %v871 = vadd.f32 %v757, %v870
    %v872 = vpop.f32.mrb[0].mxu0
    %873 = vmatprep.mubr.f32.mxu0 0.0
    %874 = vmatmul.mubr.f32.gmra.mrb[0].mxu0 %v202
    %v875 = vpop.f32.mrb[0].mxu0
    %v876 = vadd.f32 %v757, %v875
    %v877 = vpop.f32.mrb[0].mxu0
    %878 = vmatprep.mubr.f32.mxu0 0.0
    %879 = vmatmul.mubr.f32.gmra.mrb[0].mxu0 %v205
    %v880 = vpop.f32.mrb[0].mxu0
    %v881 = vadd.f32 %v757, %v880
    %v882 = vpop.f32.mrb[0].mxu0
    %883 = vmatprep.mubr.f32.mxu0 0.0
    %884 = vmatmul.mubr.f32.gmra.mrb[0].mxu0 %v208
    %v885 = vpop.f32.mrb[0].mxu0
    %v886 = vadd.f32 %v757, %v885
    %v887 = vpop.f32.mrb[0].mxu0
    %888 = vmatprep.mubr.f32.mxu0 0.0
    %889 = vmatmul.mubr.f32.gmra.mrb[0].mxu0 %v211
    %v890 = vpop.f32.mrb[0].mxu0
    %v891 = vadd.f32 %v757, %v890
    %v892 = vpop.f32.mrb[0].mxu0
    %893 = vmatprep.mubr.f32.mxu0 0.0
    %894 = vmatmul.mubr.f32.gmra.mrb[0].mxu0 %v214
    %v895 = vpop.f32.mrb[0].mxu0
    %v896 = vadd.f32 %v757, %v895
    %v897 = vpop.f32.mrb[0].mxu0
    %898 = vmatprep.mubr.f32.mxu0 0.0
    %899 = vmatmul.mubr.f32.gmra.mrb[0].mxu0 %v217
    %v900 = vpop.f32.mrb[0].mxu0
    %v901 = vadd.f32 %v757, %v900
    %v902 = vpop.f32.mrb[0].mxu0
    %903 = vmatprep.mubr.f32.mxu0 0.0
    %904 = vmatmul.mubr.f32.gmra.mrb[0].mxu0 %v220
    %v905 = vpop.f32.mrb[0].mxu0
    %v906 = vadd.f32 %v757, %v905
    %v907 = vpop.f32.mrb[0].mxu0
    %908 = vmatprep.mubr.f32.mxu0 0.0
    %909 = vmatmul.mubr.f32.gmra.mrb[0].mxu0 %v223
    %v910 = vpop.f32.mrb[0].mxu0
    %v911 = vadd.f32 %v757, %v910
    %v912 = vpop.f32.mrb[0].mxu0
    %913 = vmatprep.mubr.f32.mxu0 0.0
    %914 = vmatmul.mubr.f32.gmra.mrb[0].mxu0 %v226
    %v915 = vpop.f32.mrb[0].mxu0
    %v916 = vadd.f32 %v757, %v915
    %v917 = vpop.f32.mrb[0].mxu0
    %918 = vmatprep.mubr.f32.mxu0 0.0
    %919 = vmatmul.mubr.f32.gmra.mrb[0].mxu0 %v229
    %v920 = vpop.f32.mrb[0].mxu0
    %v921 = vadd.f32 %v757, %v920
    %v922 = vpop.f32.mrb[0].mxu0
    %923 = vmatprep.mubr.f32.mxu0 0.0
    %924 = vmatmul.mubr.f32.gmra.mrb[0].mxu0 %v232
    %v925 = vpop.f32.mrb[0].mxu0
    %v926 = vadd.f32 %v757, %v925
    %v927 = vpop.f32.mrb[0].mxu0
    %928 = vmatprep.mubr.f32.mxu0 0.0
    %929 = vmatmul.mubr.f32.gmra.mrb[0].mxu0 %v235
    %v930 = vpop.f32.mrb[0].mxu0
    %v931 = vadd.f32 %v757, %v930
    %v932 = vpop.f32.mrb[0].mxu0
    %933 = vmatprep.mubr.f32.mxu0 0.0
    %934 = vmatmul.mubr.f32.gmra.mrb[0].mxu0 %v238
    %v935 = vpop.f32.mrb[0].mxu0
    %v936 = vadd.f32 %v757, %v935
    %v937 = vpop.f32.mrb[0].mxu0
    %938 = vmatprep.mubr.f32.mxu0 0.0
    %939 = vmatmul.mubr.f32.gmra.mrb[0].mxu0 %v241
    %v940 = vpop.f32.mrb[0].mxu0
    %v941 = vadd.f32 %v757, %v940
    %v942 = vpop.f32.mrb[0].mxu0
    %943 = vmatprep.mubr.f32.mxu0 0.0
    %944 = vmatmul.mubr.f32.gmra.mrb[0].mxu0 %v244
    %v945 = vpop.f32.mrb[0].mxu0
    %v946 = vadd.f32 %v757, %v945
    %v947 = vpop.f32.mrb[0].mxu0
    %948 = vmatprep.mubr.f32.mxu0 0.0
    %949 = vmatmul.mubr.f32.gmra.mrb[0].mxu0 %v247
    %v950 = vpop.f32.mrb[0].mxu0
    %v951 = vadd.f32 %v757, %v950
    %v952 = vpop.f32.mrb[0].mxu0
    %953 = vmatprep.mubr.f32.mxu0 0.0
    %954 = vmatmul.mubr.f32.gmra.mrb[0].mxu0 %v250
    %v955 = vpop.f32.mrb[0].mxu0
    %v956 = vadd.f32 %v757, %v955
    %v957 = vpop.f32.mrb[0].mxu0
    %958 = vmatprep.mubr.f32.mxu0 0.0
    %959 = vmatmul.mubr.f32.gmra.mrb[0].mxu0 %v253
    %v960 = vpop.f32.mrb[0].mxu0
    %v961 = vadd.f32 %v757, %v960
    %v962 = vpop.f32.mrb[0].mxu0
    %963 = vmatprep.mubr.f32.mxu0 0.0
    %964 = vmatmul.mubr.f32.gmra.mrb[0].mxu0 %v256
    %v965 = vpop.f32.mrb[0].mxu0
    %v966 = vadd.f32 %v757, %v965
    %v967 = vpop.f32.mrb[0].mxu0
    %968 = vmatprep.mubr.f32.mxu0 0.0
    %969 = vmatmul.mubr.f32.gmra.mrb[0].mxu0 %v259
    %v970 = vpop.f32.mrb[0].mxu0
    %v971 = vadd.f32 %v757, %v970
    %v972 = vpop.f32.mrb[0].mxu0
    %973 = vmatprep.mubr.f32.mxu0 0.0
    %974 = vmatmul.mubr.f32.gmra.mrb[0].mxu0 %v262
    %v975 = vpop.f32.mrb[0].mxu0
    %v976 = vadd.f32 %v757, %v975
    %v977 = vpop.f32.mrb[0].mxu0
    %978 = vmatprep.mubr.f32.mxu0 0.0
    %979 = vmatmul.mubr.f32.gmra.mrb[0].mxu0 %v265
    %v980 = vpop.f32.mrb[0].mxu0
    %v981 = vadd.f32 %v757, %v980
    %v982 = vpop.f32.mrb[0].mxu0
    %983 = vmatprep.mubr.f32.mxu0 0.0
    %984 = vmatmul.mubr.f32.gmra.mrb[0].mxu0 %v268
    %v985 = vpop.f32.mrb[0].mxu0
    %v986 = vadd.f32 %v757, %v985
    %v987 = vpop.f32.mrb[0].mxu0
    %988 = vmatprep.mubr.f32.mxu0 0.0
    %989 = vmatmul.mubr.f32.gmra.mrb[0].mxu0 %v271
    %v990 = vpop.f32.mrb[0].mxu0
    %v991 = vadd.f32 %v757, %v990
    %v992 = vpop.f32.mrb[0].mxu0
    %993 = vmatprep.mubr.f32.mxu0 0.0
    %994 = vmatmul.mubr.f32.gmra.mrb[0].mxu0 %v274
    %v995 = vpop.f32.mrb[0].mxu0
    %v996 = vadd.f32 %v757, %v995
    %v997 = vpop.f32.mrb[0].mxu0
    %998 = vmatprep.mubr.f32.mxu0 0.0
    %999 = vmatmul.mubr.f32.gmra.mrb[0].mxu0 %v277
    %v1000 = vpop.f32.mrb[0].mxu0
    %v1001 = vadd.f32 %v757, %v1000
    %v1002 = vpop.f32.mrb[0].mxu0
    %1003 = vmatprep.mubr.f32.mxu0 0.0
    %1004 = vmatmul.mubr.f32.gmra.mrb[0].mxu0 %v280
    %v1005 = vpop.f32.mrb[0].mxu0
    %v1006 = vadd.f32 %v757, %v1005
    %v1007 = vpop.f32.mrb[0].mxu0
    %1008 = vmatprep.mubr.f32.mxu0 0.0
    %1009 = vmatmul.mubr.f32.gmra.mrb[0].mxu0 %v283
    %v1010 = vpop.f32.mrb[0].mxu0
    %v1011 = vadd.f32 %v757, %v1010
    %v1012 = vpop.f32.mrb[0].mxu0
    %1013 = vmatprep.mubr.f32.mxu0 0.0
    %1014 = vmatmul.mubr.f32.gmra.mrb[0].mxu0 %v286
    %v1015 = vpop.f32.mrb[0].mxu0
    %v1016 = vadd.f32 %v757, %v1015
    %v1017 = vpop.f32.mrb[0].mxu0
    %1018 = vmatprep.mubr.f32.mxu0 0.0
    %1019 = vmatmul.mubr.f32.gmra.mrb[0].mxu0 %v289
    %v1020 = vpop.f32.mrb[0].mxu0
    %v1021 = vadd.f32 %v757, %v1020
    %v1022 = vpop.f32.mrb[0].mxu0
    %1023 = vmatprep.mubr.f32.mxu0 0.0
    %1024 = vmatmul.mubr.f32.gmra.mrb[0].mxu0 %v292
    %v1025 = vpop.f32.mrb[0].mxu0
    %v1026 = vadd.f32 %v757, %v1025
    %v1027 = vpop.f32.mrb[0].mxu0
    %1028 = vmatprep.mubr.f32.mxu0 0.0
    %1029 = vmatmul.mubr.f32.gmra.mrb[0].mxu0 %v295
    %v1030 = vpop.f32.mrb[0].mxu0
    %v1031 = vadd.f32 %v757, %v1030
    %v1032 = vpop.f32.mrb[0].mxu0
    %1033 = vmatprep.mubr.f32.mxu0 0.0
    %1034 = vmatmul.mubr.f32.gmra.mrb[0].mxu0 %v298
    %v1035 = vpop.f32.mrb[0].mxu0
    %v1036 = vadd.f32 %v757, %v1035
    %v1037 = vpop.f32.mrb[0].mxu0
    %1038 = vmatprep.mubr.f32.mxu0 0.0
    %1039 = vmatmul.mubr.f32.gmra.mrb[0].mxu0 %v301
    %v1040 = vpop.f32.mrb[0].mxu0
    %v1041 = vadd.f32 %v757, %v1040
    %v1042 = vpop.f32.mrb[0].mxu0
    %1043 = vmatprep.mubr.f32.mxu0 0.0
    %1044 = vmatmul.mubr.f32.gmra.mrb[0].mxu0 %v304
    %v1045 = vpop.f32.mrb[0].mxu0
    %v1046 = vadd.f32 %v757, %v1045
    %v1047 = vpop.f32.mrb[0].mxu0
    %1048 = vmatprep.mubr.f32.mxu0 0.0
    %1049 = vmatmul.mubr.f32.gmra.mrb[0].mxu0 %v307
    %v1050 = vpop.f32.mrb[0].mxu0
    %v1051 = vadd.f32 %v757, %v1050
    %v1052 = vpop.f32.mrb[0].mxu0
    %1053 = vmatprep.mubr.f32.mxu0 0.0
    %1054 = vmatmul.mubr.f32.gmra.mrb[0].mxu0 %v310
    %v1055 = vpop.f32.mrb[0].mxu0
    %v1056 = vadd.f32 %v757, %v1055
    %v1057 = vpop.f32.mrb[0].mxu0
    %1058 = vmatprep.mubr.f32.mxu0 0.0
    %1059 = vmatmul.mubr.f32.gmra.mrb[0].mxu0 %v313
    %v1060 = vpop.f32.mrb[0].mxu0
    %v1061 = vadd.f32 %v757, %v1060
    %v1062 = vpop.f32.mrb[0].mxu0
    %1063 = vmatprep.mubr.f32.mxu0 0.0
    %1064 = vmatmul.mubr.f32.gmra.mrb[0].mxu0 %v316
    %v1065 = vpop.f32.mrb[0].mxu0
    %v1066 = vadd.f32 %v757, %v1065
    %v1067 = vpop.f32.mrb[0].mxu0
    %1068 = vmatprep.mubr.f32.mxu0 0.0
    %1069 = vmatmul.mubr.f32.gmra.mrb[0].mxu0 %v319
    %v1070 = vpop.f32.mrb[0].mxu0
    %v1071 = vadd.f32 %v757, %v1070
    %v1072 = vpop.f32.mrb[0].mxu0
    %1073 = vmatprep.mubr.f32.mxu0 0.0
    %1074 = vmatmul.mubr.f32.gmra.mrb[0].mxu0 %v322
    %v1075 = vpop.f32.mrb[0].mxu0
    %v1076 = vadd.f32 %v757, %v1075
    %v1077 = vpop.f32.mrb[0].mxu0
    %1078 = vmatprep.mubr.f32.mxu0 0.0
    %1079 = vmatmul.mubr.f32.gmra.mrb[0].mxu0 %v325
    %v1080 = vpop.f32.mrb[0].mxu0
    %v1081 = vadd.f32 %v757, %v1080
    %v1082 = vpop.f32.mrb[0].mxu0
    %1083 = vmatprep.mubr.f32.mxu0 0.0
    %1084 = vmatmul.mubr.f32.gmra.mrb[0].mxu0 %v328
    %v1085 = vpop.f32.mrb[0].mxu0
    %v1086 = vadd.f32 %v757, %v1085
    %v1087 = vpop.f32.mrb[0].mxu0
    %1088 = vmatprep.mubr.f32.mxu0 0.0
    %1089 = vmatmul.mubr.f32.gmra.mrb[0].mxu0 %v331
    %v1090 = vpop.f32.mrb[0].mxu0
    %v1091 = vadd.f32 %v757, %v1090
    %v1092 = vpop.f32.mrb[0].mxu0
    %1093 = vmatprep.mubr.f32.mxu0 0.0
    %1094 = vmatmul.mubr.f32.gmra.mrb[0].mxu0 %v334
    %v1095 = vpop.f32.mrb[0].mxu0
    %v1096 = vadd.f32 %v757, %v1095
    %v1097 = vpop.f32.mrb[0].mxu0
    %1098 = vmatprep.mubr.f32.mxu0 0.0
    %1099 = vmatmul.mubr.f32.gmra.mrb[0].mxu0 %v337
    %v1100 = vpop.f32.mrb[0].mxu0
    %v1101 = vadd.f32 %v757, %v1100
    %v1102 = vpop.f32.mrb[0].mxu0
    %1103 = vmatprep.mubr.f32.mxu0 0.0
    %1104 = vmatmul.mubr.f32.gmra.mrb[0].mxu0 %v340
    %v1105 = vpop.f32.mrb[0].mxu0
    %v1106 = vadd.f32 %v757, %v1105
    %v1107 = vpop.f32.mrb[0].mxu0
    %1108 = vmatprep.mubr.f32.mxu0 0.0
    %1109 = vmatmul.mubr.f32.gmra.mrb[0].mxu0 %v343
    %v1110 = vpop.f32.mrb[0].mxu0
    %v1111 = vadd.f32 %v757, %v1110
    %v1112 = vpop.f32.mrb[0].mxu0
    %1113 = vmatprep.mubr.f32.mxu0 0.0
    %1114 = vmatmul.mubr.f32.gmra.mrb[0].mxu0 %v346
    %v1115 = vpop.f32.mrb[0].mxu0
    %v1116 = vadd.f32 %v757, %v1115
    %v1117 = vpop.f32.mrb[0].mxu0
    %1118 = vmatprep.mubr.f32.mxu0 0.0
    %1119 = vmatmul.mubr.f32.gmra.mrb[0].mxu0 %v349
    %v1120 = vpop.f32.mrb[0].mxu0
    %v1121 = vadd.f32 %v757, %v1120
    %v1122 = vpop.f32.mrb[0].mxu0
    %1123 = vmatprep.mubr.f32.mxu0 0.0
    %1124 = vmatmul.mubr.f32.gmra.mrb[0].mxu0 %v352
    %v1125 = vpop.f32.mrb[0].mxu0
    %v1126 = vadd.f32 %v757, %v1125
    %v1127 = vpop.f32.mrb[0].mxu0
    %1128 = vmatprep.mubr.f32.mxu0 0.0
    %1129 = vmatmul.mubr.f32.gmra.mrb[0].mxu0 %v355
    %v1130 = vpop.f32.mrb[0].mxu0
    %v1131 = vadd.f32 %v757, %v1130
    %v1132 = vpop.f32.mrb[0].mxu0
    %1133 = vmatprep.mubr.f32.mxu0 0.0
    %1134 = vmatmul.mubr.f32.gmra.mrb[0].mxu0 %v358
    %v1135 = vpop.f32.mrb[0].mxu0
    %v1136 = vadd.f32 %v757, %v1135
    %v1137 = vpop.f32.mrb[0].mxu0
    %1138 = vmatprep.mubr.f32.mxu0 0.0
    %1139 = vmatmul.mubr.f32.gmra.mrb[0].mxu0 %v361
    %v1140 = vpop.f32.mrb[0].mxu0
    %v1141 = vadd.f32 %v757, %v1140
    %v1142 = vpop.f32.mrb[0].mxu0
    %1143 = vdwg.mxu0
    %v1144 = vsub.f32 0.0, %v430
    %v1145 = vsub.f32 0.0, %v435
    %v1146 = vsub.f32 0.0, %v440
    %v1147 = vsub.f32 0.0, %v445
    %v1148 = vsub.f32 0.0, %v450
    %v1149 = vsub.f32 0.0, %v455
    %v1150 = vsub.f32 0.0, %v460
    %v1151 = vsub.f32 0.0, %v465
    %v1152 = vsub.f32 0.0, %v470
    %v1153 = vsub.f32 0.0, %v475
    %v1154 = vsub.f32 0.0, %v480
    %v1155 = vsub.f32 0.0, %v485
    %v1156 = vsub.f32 0.0, %v490
    %v1157 = vsub.f32 0.0, %v495
    %v1158 = vsub.f32 0.0, %v500
    %v1159 = vsub.f32 0.0, %v505
    %v1160 = vsub.f32 0.0, %v510
    %v1161 = vsub.f32 0.0, %v515
    %v1162 = vsub.f32 0.0, %v520
    %v1163 = vsub.f32 0.0, %v525
    %v1164 = vsub.f32 0.0, %v530
    %v1165 = vsub.f32 0.0, %v535
    %v1166 = vsub.f32 0.0, %v540
    %v1167 = vsub.f32 0.0, %v545
    %v1168 = vsub.f32 0.0, %v550
    %v1169 = vsub.f32 0.0, %v555
    %v1170 = vsub.f32 0.0, %v560
    %v1171 = vsub.f32 0.0, %v565
    %v1172 = vsub.f32 0.0, %v570
    %v1173 = vsub.f32 0.0, %v575
    %v1174 = vsub.f32 0.0, %v580
    %v1175 = vsub.f32 0.0, %v585
    %v1176 = vsub.f32 0.0, %v590
    %v1177 = vsub.f32 0.0, %v595
    %v1178 = vsub.f32 0.0, %v600
    %v1179 = vsub.f32 0.0, %v605
    %v1180 = vsub.f32 0.0, %v610
    %v1181 = vsub.f32 0.0, %v615
    %v1182 = vsub.f32 0.0, %v620
    %v1183 = vsub.f32 0.0, %v625
    %v1184 = vsub.f32 0.0, %v630
    %v1185 = vsub.f32 0.0, %v635
    %v1186 = vsub.f32 0.0, %v640
    %v1187 = vsub.f32 0.0, %v645
    %v1188 = vsub.f32 0.0, %v650
    %v1189 = vsub.f32 0.0, %v655
    %v1190 = vsub.f32 0.0, %v660
    %v1191 = vsub.f32 0.0, %v665
    %v1192 = vsub.f32 0.0, %v670
    %v1193 = vsub.f32 0.0, %v675
    %v1194 = vsub.f32 0.0, %v680
    %v1195 = vsub.f32 0.0, %v685
    %v1196 = vsub.f32 0.0, %v690
    %v1197 = vsub.f32 0.0, %v695
    %v1198 = vsub.f32 0.0, %v700
    %v1199 = vsub.f32 0.0, %v705
    %v1200 = vsub.f32 0.0, %v710
    %v1201 = vsub.f32 0.0, %v715
    %v1202 = vsub.f32 0.0, %v720
    %v1203 = vsub.f32 0.0, %v725
    %v1204 = vsub.f32 0.0, %v730
    %v1205 = vsub.f32 0.0, %v735
    %v1206 = vsub.f32 0.0, %v740
    %v1207 = vsub.f32 0.0, %v745
    %v1208 = vmul.f32 %v1144, 1.442695
    %v1209 = vpow.pop %v1208
    %v1210 = vmul.f32 %v1145, 1.442695
    %v1211 = vpow.pop %v1210
    %v1212 = vmul.f32 %v1146, 1.442695
    %v1213 = vpow.pop %v1212
    %v1214 = vmul.f32 %v1147, 1.442695
    %v1215 = vpow.pop %v1214
    %v1216 = vmul.f32 %v1148, 1.442695
    %v1217 = vpow.pop %v1216
    %v1218 = vmul.f32 %v1149, 1.442695
    %v1219 = vpow.pop %v1218
    %v1220 = vmul.f32 %v1150, 1.442695
    %v1221 = vpow.pop %v1220
    %v1222 = vmul.f32 %v1151, 1.442695
    %v1223 = vpow.pop %v1222
    %v1224 = vmul.f32 %v1152, 1.442695
    %v1225 = vpow.pop %v1224
    %v1226 = vmul.f32 %v1153, 1.442695
    %v1227 = vpow.pop %v1226
    %v1228 = vmul.f32 %v1154, 1.442695
    %v1229 = vpow.pop %v1228
    %v1230 = vmul.f32 %v1155, 1.442695
    %v1231 = vpow.pop %v1230
    %v1232 = vmul.f32 %v1156, 1.442695
    %v1233 = vpow.pop %v1232
    %v1234 = vmul.f32 %v1157, 1.442695
    %v1235 = vpow.pop %v1234
    %v1236 = vmul.f32 %v1158, 1.442695
    %v1237 = vpow.pop %v1236
    %v1238 = vmul.f32 %v1159, 1.442695
    %v1239 = vpow.pop %v1238
    %v1240 = vmul.f32 %v1160, 1.442695
    %v1241 = vpow.pop %v1240
    %v1242 = vmul.f32 %v1161, 1.442695
    %v1243 = vpow.pop %v1242
    %v1244 = vmul.f32 %v1162, 1.442695
    %v1245 = vpow.pop %v1244
    %v1246 = vmul.f32 %v1163, 1.442695
    %v1247 = vpow.pop %v1246
    %v1248 = vmul.f32 %v1164, 1.442695
    %v1249 = vpow.pop %v1248
    %v1250 = vmul.f32 %v1165, 1.442695
    %v1251 = vpow.pop %v1250
    %v1252 = vmul.f32 %v1166, 1.442695
    %v1253 = vpow.pop %v1252
    %v1254 = vmul.f32 %v1167, 1.442695
    %v1255 = vpow.pop %v1254
    %v1256 = vmul.f32 %v1168, 1.442695
    %v1257 = vpow.pop %v1256
    %v1258 = vmul.f32 %v1169, 1.442695
    %v1259 = vpow.pop %v1258
    %v1260 = vmul.f32 %v1170, 1.442695
    %v1261 = vpow.pop %v1260
    %v1262 = vmul.f32 %v1171, 1.442695
    %v1263 = vpow.pop %v1262
    %v1264 = vmul.f32 %v1172, 1.442695
    %v1265 = vpow.pop %v1264
    %v1266 = vmul.f32 %v1173, 1.442695
    %v1267 = vpow.pop %v1266
    %v1268 = vmul.f32 %v1174, 1.442695
    %v1269 = vpow.pop %v1268
    %v1270 = vmul.f32 %v1175, 1.442695
    %v1271 = vpow.pop %v1270
    %v1272 = vmul.f32 %v1176, 1.442695
    %v1273 = vpow.pop %v1272
    %v1274 = vmul.f32 %v1177, 1.442695
    %v1275 = vpow.pop %v1274
    %v1276 = vmul.f32 %v1178, 1.442695
    %v1277 = vpow.pop %v1276
    %v1278 = vmul.f32 %v1179, 1.442695
    %v1279 = vpow.pop %v1278
    %v1280 = vmul.f32 %v1180, 1.442695
    %v1281 = vpow.pop %v1280
    %v1282 = vmul.f32 %v1181, 1.442695
    %v1283 = vpow.pop %v1282
    %v1284 = vmul.f32 %v1182, 1.442695
    %v1285 = vpow.pop %v1284
    %v1286 = vmul.f32 %v1183, 1.442695
    %v1287 = vpow.pop %v1286
    %v1288 = vmul.f32 %v1184, 1.442695
    %v1289 = vpow.pop %v1288
    %v1290 = vmul.f32 %v1185, 1.442695
    %v1291 = vpow.pop %v1290
    %v1292 = vmul.f32 %v1186, 1.442695
    %v1293 = vpow.pop %v1292
    %v1294 = vmul.f32 %v1187, 1.442695
    %v1295 = vpow.pop %v1294
    %v1296 = vmul.f32 %v1188, 1.442695
    %v1297 = vpow.pop %v1296
    %v1298 = vmul.f32 %v1189, 1.442695
    %v1299 = vpow.pop %v1298
    %v1300 = vmul.f32 %v1190, 1.442695
    %v1301 = vpow.pop %v1300
    %v1302 = vmul.f32 %v1191, 1.442695
    %v1303 = vpow.pop %v1302
    %v1304 = vmul.f32 %v1192, 1.442695
    %v1305 = vpow.pop %v1304
    %v1306 = vmul.f32 %v1193, 1.442695
    %v1307 = vpow.pop %v1306
    %v1308 = vmul.f32 %v1194, 1.442695
    %v1309 = vpow.pop %v1308
    %v1310 = vmul.f32 %v1195, 1.442695
    %v1311 = vpow.pop %v1310
    %v1312 = vmul.f32 %v1196, 1.442695
    %v1313 = vpow.pop %v1312
    %v1314 = vmul.f32 %v1197, 1.442695
    %v1315 = vpow.pop %v1314
    %v1316 = vmul.f32 %v1198, 1.442695
    %v1317 = vpow.pop %v1316
    %v1318 = vmul.f32 %v1199, 1.442695
    %v1319 = vpow.pop %v1318
    %v1320 = vmul.f32 %v1200, 1.442695
    %v1321 = vpow.pop %v1320
    %v1322 = vmul.f32 %v1201, 1.442695
    %v1323 = vpow.pop %v1322
    %v1324 = vmul.f32 %v1202, 1.442695
    %v1325 = vpow.pop %v1324
    %v1326 = vmul.f32 %v1203, 1.442695
    %v1327 = vpow.pop %v1326
    %v1328 = vmul.f32 %v1204, 1.442695
    %v1329 = vpow.pop %v1328
    %v1330 = vmul.f32 %v1205, 1.442695
    %v1331 = vpow.pop %v1330
    %v1332 = vmul.f32 %v1206, 1.442695
    %v1333 = vpow.pop %v1332
    %v1334 = vmul.f32 %v1207, 1.442695
    %v1335 = vpow.pop %v1334
    %v1336 = vadd.f32 %v1209, 1.0
    %v1337 = vadd.f32 %v1211, 1.0
    %v1338 = vadd.f32 %v1213, 1.0
    %v1339 = vadd.f32 %v1215, 1.0
    %v1340 = vadd.f32 %v1217, 1.0
    %v1341 = vadd.f32 %v1219, 1.0
    %v1342 = vadd.f32 %v1221, 1.0
    %v1343 = vadd.f32 %v1223, 1.0
    %v1344 = vadd.f32 %v1225, 1.0
    %v1345 = vadd.f32 %v1227, 1.0
    %v1346 = vadd.f32 %v1229, 1.0
    %v1347 = vadd.f32 %v1231, 1.0
    %v1348 = vadd.f32 %v1233, 1.0
    %v1349 = vadd.f32 %v1235, 1.0
    %v1350 = vadd.f32 %v1237, 1.0
    %v1351 = vadd.f32 %v1239, 1.0
    %v1352 = vadd.f32 %v1241, 1.0
    %v1353 = vadd.f32 %v1243, 1.0
    %v1354 = vadd.f32 %v1245, 1.0
    %v1355 = vadd.f32 %v1247, 1.0
    %v1356 = vadd.f32 %v1249, 1.0
    %v1357 = vadd.f32 %v1251, 1.0
    %v1358 = vadd.f32 %v1253, 1.0
    %v1359 = vadd.f32 %v1255, 1.0
    %v1360 = vadd.f32 %v1257, 1.0
    %v1361 = vadd.f32 %v1259, 1.0
    %v1362 = vadd.f32 %v1261, 1.0
    %v1363 = vadd.f32 %v1263, 1.0
    %v1364 = vadd.f32 %v1265, 1.0
    %v1365 = vadd.f32 %v1267, 1.0
    %v1366 = vadd.f32 %v1269, 1.0
    %v1367 = vadd.f32 %v1271, 1.0
    %v1368 = vadd.f32 %v1273, 1.0
    %v1369 = vadd.f32 %v1275, 1.0
    %v1370 = vadd.f32 %v1277, 1.0
    %v1371 = vadd.f32 %v1279, 1.0
    %v1372 = vadd.f32 %v1281, 1.0
    %v1373 = vadd.f32 %v1283, 1.0
    %v1374 = vadd.f32 %v1285, 1.0
    %v1375 = vadd.f32 %v1287, 1.0
    %v1376 = vadd.f32 %v1289, 1.0
    %v1377 = vadd.f32 %v1291, 1.0
    %v1378 = vadd.f32 %v1293, 1.0
    %v1379 = vadd.f32 %v1295, 1.0
    %v1380 = vadd.f32 %v1297, 1.0
    %v1381 = vadd.f32 %v1299, 1.0
    %v1382 = vadd.f32 %v1301, 1.0
    %v1383 = vadd.f32 %v1303, 1.0
    %v1384 = vadd.f32 %v1305, 1.0
    %v1385 = vadd.f32 %v1307, 1.0
    %v1386 = vadd.f32 %v1309, 1.0
    %v1387 = vadd.f32 %v1311, 1.0
    %v1388 = vadd.f32 %v1313, 1.0
    %v1389 = vadd.f32 %v1315, 1.0
    %v1390 = vadd.f32 %v1317, 1.0
    %v1391 = vadd.f32 %v1319, 1.0
    %v1392 = vadd.f32 %v1321, 1.0
    %v1393 = vadd.f32 %v1323, 1.0
    %v1394 = vadd.f32 %v1325, 1.0
    %v1395 = vadd.f32 %v1327, 1.0
    %v1396 = vadd.f32 %v1329, 1.0
    %v1397 = vadd.f32 %v1331, 1.0
    %v1398 = vadd.f32 %v1333, 1.0
    %v1399 = vadd.f32 %v1335, 1.0
    %v1400 = vrcp.pop %v1336
    %v1401 = vmul.f32 1.0, %v1400
    %v1402 = vrcp.pop %v1337
    %v1403 = vmul.f32 1.0, %v1402
    %v1404 = vrcp.pop %v1338
    %v1405 = vmul.f32 1.0, %v1404
    %v1406 = vrcp.pop %v1339
    %v1407 = vmul.f32 1.0, %v1406
    %v1408 = vrcp.pop %v1340
    %v1409 = vmul.f32 1.0, %v1408
    %v1410 = vrcp.pop %v1341
    %v1411 = vmul.f32 1.0, %v1410
    %v1412 = vrcp.pop %v1342
    %v1413 = vmul.f32 1.0, %v1412
    %v1414 = vrcp.pop %v1343
    %v1415 = vmul.f32 1.0, %v1414
    %v1416 = vrcp.pop %v1344
    %v1417 = vmul.f32 1.0, %v1416
    %v1418 = vrcp.pop %v1345
    %v1419 = vmul.f32 1.0, %v1418
    %v1420 = vrcp.pop %v1346
    %v1421 = vmul.f32 1.0, %v1420
    %v1422 = vrcp.pop %v1347
    %v1423 = vmul.f32 1.0, %v1422
    %v1424 = vrcp.pop %v1348
    %v1425 = vmul.f32 1.0, %v1424
    %v1426 = vrcp.pop %v1349
    %v1427 = vmul.f32 1.0, %v1426
    %v1428 = vrcp.pop %v1350
    %v1429 = vmul.f32 1.0, %v1428
    %v1430 = vrcp.pop %v1351
    %v1431 = vmul.f32 1.0, %v1430
    %v1432 = vrcp.pop %v1352
    %v1433 = vmul.f32 1.0, %v1432
    %v1434 = vrcp.pop %v1353
    %v1435 = vmul.f32 1.0, %v1434
    %v1436 = vrcp.pop %v1354
    %v1437 = vmul.f32 1.0, %v1436
    %v1438 = vrcp.pop %v1355
    %v1439 = vmul.f32 1.0, %v1438
    %v1440 = vrcp.pop %v1356
    %v1441 = vmul.f32 1.0, %v1440
    %v1442 = vrcp.pop %v1357
    %v1443 = vmul.f32 1.0, %v1442
    %v1444 = vrcp.pop %v1358
    %v1445 = vmul.f32 1.0, %v1444
    %v1446 = vrcp.pop %v1359
    %v1447 = vmul.f32 1.0, %v1446
    %v1448 = vrcp.pop %v1360
    %v1449 = vmul.f32 1.0, %v1448
    %v1450 = vrcp.pop %v1361
    %v1451 = vmul.f32 1.0, %v1450
    %v1452 = vrcp.pop %v1362
    %v1453 = vmul.f32 1.0, %v1452
    %v1454 = vrcp.pop %v1363
    %v1455 = vmul.f32 1.0, %v1454
    %v1456 = vrcp.pop %v1364
    %v1457 = vmul.f32 1.0, %v1456
    %v1458 = vrcp.pop %v1365
    %v1459 = vmul.f32 1.0, %v1458
    %v1460 = vrcp.pop %v1366
    %v1461 = vmul.f32 1.0, %v1460
    %v1462 = vrcp.pop %v1367
    %v1463 = vmul.f32 1.0, %v1462
    %v1464 = vrcp.pop %v1368
    %v1465 = vmul.f32 1.0, %v1464
    %v1466 = vrcp.pop %v1369
    %v1467 = vmul.f32 1.0, %v1466
    %v1468 = vrcp.pop %v1370
    %v1469 = vmul.f32 1.0, %v1468
    %v1470 = vrcp.pop %v1371
    %v1471 = vmul.f32 1.0, %v1470
    %v1472 = vrcp.pop %v1372
    %v1473 = vmul.f32 1.0, %v1472
    %v1474 = vrcp.pop %v1373
    %v1475 = vmul.f32 1.0, %v1474
    %v1476 = vrcp.pop %v1374
    %v1477 = vmul.f32 1.0, %v1476
    %v1478 = vrcp.pop %v1375
    %v1479 = vmul.f32 1.0, %v1478
    %v1480 = vrcp.pop %v1376
    %v1481 = vmul.f32 1.0, %v1480
    %v1482 = vrcp.pop %v1377
    %v1483 = vmul.f32 1.0, %v1482
    %v1484 = vrcp.pop %v1378
    %v1485 = vmul.f32 1.0, %v1484
    %v1486 = vrcp.pop %v1379
    %v1487 = vmul.f32 1.0, %v1486
    %v1488 = vrcp.pop %v1380
    %v1489 = vmul.f32 1.0, %v1488
    %v1490 = vrcp.pop %v1381
    %v1491 = vmul.f32 1.0, %v1490
    %v1492 = vrcp.pop %v1382
    %v1493 = vmul.f32 1.0, %v1492
    %v1494 = vrcp.pop %v1383
    %v1495 = vmul.f32 1.0, %v1494
    %v1496 = vrcp.pop %v1384
    %v1497 = vmul.f32 1.0, %v1496
    %v1498 = vrcp.pop %v1385
    %v1499 = vmul.f32 1.0, %v1498
    %v1500 = vrcp.pop %v1386
    %v1501 = vmul.f32 1.0, %v1500
    %v1502 = vrcp.pop %v1387
    %v1503 = vmul.f32 1.0, %v1502
    %v1504 = vrcp.pop %v1388
    %v1505 = vmul.f32 1.0, %v1504
    %v1506 = vrcp.pop %v1389
    %v1507 = vmul.f32 1.0, %v1506
    %v1508 = vrcp.pop %v1390
    %v1509 = vmul.f32 1.0, %v1508
    %v1510 = vrcp.pop %v1391
    %v1511 = vmul.f32 1.0, %v1510
    %v1512 = vrcp.pop %v1392
    %v1513 = vmul.f32 1.0, %v1512
    %v1514 = vrcp.pop %v1393
    %v1515 = vmul.f32 1.0, %v1514
    %v1516 = vrcp.pop %v1394
    %v1517 = vmul.f32 1.0, %v1516
    %v1518 = vrcp.pop %v1395
    %v1519 = vmul.f32 1.0, %v1518
    %v1520 = vrcp.pop %v1396
    %v1521 = vmul.f32 1.0, %v1520
    %v1522 = vrcp.pop %v1397
    %v1523 = vmul.f32 1.0, %v1522
    %v1524 = vrcp.pop %v1398
    %v1525 = vmul.f32 1.0, %v1524
    %v1526 = vrcp.pop %v1399
    %v1527 = vmul.f32 1.0, %v1526
    %v1528 = vmul.f32 %v430, %v1401
    %v1529 = vmul.f32 %v435, %v1403
    %v1530 = vmul.f32 %v440, %v1405
    %v1531 = vmul.f32 %v445, %v1407
    %v1532 = vmul.f32 %v450, %v1409
    %v1533 = vmul.f32 %v455, %v1411
    %v1534 = vmul.f32 %v460, %v1413
    %v1535 = vmul.f32 %v465, %v1415
    %v1536 = vmul.f32 %v470, %v1417
    %v1537 = vmul.f32 %v475, %v1419
    %v1538 = vmul.f32 %v480, %v1421
    %v1539 = vmul.f32 %v485, %v1423
    %v1540 = vmul.f32 %v490, %v1425
    %v1541 = vmul.f32 %v495, %v1427
    %v1542 = vmul.f32 %v500, %v1429
    %v1543 = vmul.f32 %v505, %v1431
    %v1544 = vmul.f32 %v510, %v1433
    %v1545 = vmul.f32 %v515, %v1435
    %v1546 = vmul.f32 %v520, %v1437
    %v1547 = vmul.f32 %v525, %v1439
    %v1548 = vmul.f32 %v530, %v1441
    %v1549 = vmul.f32 %v535, %v1443
    %v1550 = vmul.f32 %v540, %v1445
    %v1551 = vmul.f32 %v545, %v1447
    %v1552 = vmul.f32 %v550, %v1449
    %v1553 = vmul.f32 %v555, %v1451
    %v1554 = vmul.f32 %v560, %v1453
    %v1555 = vmul.f32 %v565, %v1455
    %v1556 = vmul.f32 %v570, %v1457
    %v1557 = vmul.f32 %v575, %v1459
    %v1558 = vmul.f32 %v580, %v1461
    %v1559 = vmul.f32 %v585, %v1463
    %v1560 = vmul.f32 %v590, %v1465
    %v1561 = vmul.f32 %v595, %v1467
    %v1562 = vmul.f32 %v600, %v1469
    %v1563 = vmul.f32 %v605, %v1471
    %v1564 = vmul.f32 %v610, %v1473
    %v1565 = vmul.f32 %v615, %v1475
    %v1566 = vmul.f32 %v620, %v1477
    %v1567 = vmul.f32 %v625, %v1479
    %v1568 = vmul.f32 %v630, %v1481
    %v1569 = vmul.f32 %v635, %v1483
    %v1570 = vmul.f32 %v640, %v1485
    %v1571 = vmul.f32 %v645, %v1487
    %v1572 = vmul.f32 %v650, %v1489
    %v1573 = vmul.f32 %v655, %v1491
    %v1574 = vmul.f32 %v660, %v1493
    %v1575 = vmul.f32 %v665, %v1495
    %v1576 = vmul.f32 %v670, %v1497
    %v1577 = vmul.f32 %v675, %v1499
    %v1578 = vmul.f32 %v680, %v1501
    %v1579 = vmul.f32 %v685, %v1503
    %v1580 = vmul.f32 %v690, %v1505
    %v1581 = vmul.f32 %v695, %v1507
    %v1582 = vmul.f32 %v700, %v1509
    %v1583 = vmul.f32 %v705, %v1511
    %v1584 = vmul.f32 %v710, %v1513
    %v1585 = vmul.f32 %v715, %v1515
    %v1586 = vmul.f32 %v720, %v1517
    %v1587 = vmul.f32 %v725, %v1519
    %v1588 = vmul.f32 %v730, %v1521
    %v1589 = vmul.f32 %v735, %v1523
    %v1590 = vmul.f32 %v740, %v1525
    %v1591 = vmul.f32 %v745, %v1527
    %v1592 = vmul.f32 %v1528, %v826
    %v1593 = vmul.f32 %v1529, %v831
    %v1594 = vmul.f32 %v1530, %v836
    %v1595 = vmul.f32 %v1531, %v841
    %v1596 = vmul.f32 %v1532, %v846
    %v1597 = vmul.f32 %v1533, %v851
    %v1598 = vmul.f32 %v1534, %v856
    %v1599 = vmul.f32 %v1535, %v861
    %v1600 = vmul.f32 %v1536, %v866
    %v1601 = vmul.f32 %v1537, %v871
    %v1602 = vmul.f32 %v1538, %v876
    %v1603 = vmul.f32 %v1539, %v881
    %v1604 = vmul.f32 %v1540, %v886
    %v1605 = vmul.f32 %v1541, %v891
    %v1606 = vmul.f32 %v1542, %v896
    %v1607 = vmul.f32 %v1543, %v901
    %v1608 = vmul.f32 %v1544, %v906
    %v1609 = vmul.f32 %v1545, %v911
    %v1610 = vmul.f32 %v1546, %v916
    %v1611 = vmul.f32 %v1547, %v921
    %v1612 = vmul.f32 %v1548, %v926
    %v1613 = vmul.f32 %v1549, %v931
    %v1614 = vmul.f32 %v1550, %v936
    %v1615 = vmul.f32 %v1551, %v941
    %v1616 = vmul.f32 %v1552, %v946
    %v1617 = vmul.f32 %v1553, %v951
    %v1618 = vmul.f32 %v1554, %v956
    %v1619 = vmul.f32 %v1555, %v961
    %v1620 = vmul.f32 %v1556, %v966
    %v1621 = vmul.f32 %v1557, %v971
    %v1622 = vmul.f32 %v1558, %v976
    %v1623 = vmul.f32 %v1559, %v981
    %v1624 = vmul.f32 %v1560, %v986
    %v1625 = vmul.f32 %v1561, %v991
    %v1626 = vmul.f32 %v1562, %v996
    %v1627 = vmul.f32 %v1563, %v1001
    %v1628 = vmul.f32 %v1564, %v1006
    %v1629 = vmul.f32 %v1565, %v1011
    %v1630 = vmul.f32 %v1566, %v1016
    %v1631 = vmul.f32 %v1567, %v1021
    %v1632 = vmul.f32 %v1568, %v1026
    %v1633 = vmul.f32 %v1569, %v1031
    %v1634 = vmul.f32 %v1570, %v1036
    %v1635 = vmul.f32 %v1571, %v1041
    %v1636 = vmul.f32 %v1572, %v1046
    %v1637 = vmul.f32 %v1573, %v1051
    %v1638 = vmul.f32 %v1574, %v1056
    %v1639 = vmul.f32 %v1575, %v1061
    %v1640 = vmul.f32 %v1576, %v1066
    %v1641 = vmul.f32 %v1577, %v1071
    %v1642 = vmul.f32 %v1578, %v1076
    %v1643 = vmul.f32 %v1579, %v1081
    %v1644 = vmul.f32 %v1580, %v1086
    %v1645 = vmul.f32 %v1581, %v1091
    %v1646 = vmul.f32 %v1582, %v1096
    %v1647 = vmul.f32 %v1583, %v1101
    %v1648 = vmul.f32 %v1584, %v1106
    %v1649 = vmul.f32 %v1585, %v1111
    %v1650 = vmul.f32 %v1586, %v1116
    %v1651 = vmul.f32 %v1587, %v1121
    %v1652 = vmul.f32 %v1588, %v1126
    %v1653 = vmul.f32 %v1589, %v1131
    %v1654 = vmul.f32 %v1590, %v1136
    %v1655 = vmul.f32 %v1591, %v1141
    %v1656 = vld [vmem:[#allocation2] sm:$0xff]
    %v1657 = vld [vmem:[#allocation2 + $0x8] sm:$0xff]
    %v1658 = vld [vmem:[#allocation2 + $0x10] sm:$0xff]
    %v1659 = vld [vmem:[#allocation2 + $0x18] sm:$0xff]
    %v1660 = vld [vmem:[#allocation2 + $0x20] sm:$0xff]
    %v1661 = vld [vmem:[#allocation2 + $0x28] sm:$0xff]
    %v1662 = vld [vmem:[#allocation2 + $0x30] sm:$0xff]
    %v1663 = vld [vmem:[#allocation2 + $0x38] sm:$0xff]
    %v1664 = vld [vmem:[#allocation2 + $0x40] sm:$0xff]
    %v1665 = vld [vmem:[#allocation2 + $0x48] sm:$0xff]
    %v1666 = vld [vmem:[#allocation2 + $0x50] sm:$0xff]
    %v1667 = vld [vmem:[#allocation2 + $0x58] sm:$0xff]
    %v1668 = vld [vmem:[#allocation2 + $0x60] sm:$0xff]
    %v1669 = vld [vmem:[#allocation2 + $0x68] sm:$0xff]
    %v1670 = vld [vmem:[#allocation2 + $0x70] sm:$0xff]
    %v1671 = vld [vmem:[#allocation2 + $0x78] sm:$0xff]
    %v1672 = vld [vmem:[#allocation2 + $0x80] sm:$0xff]
    %v1673 = vld [vmem:[#allocation2 + $0x88] sm:$0xff]
    %v1674 = vld [vmem:[#allocation2 + $0x90] sm:$0xff]
    %v1675 = vld [vmem:[#allocation2 + $0x98] sm:$0xff]
    %v1676 = vld [vmem:[#allocation2 + $0xa0] sm:$0xff]
    %v1677 = vld [vmem:[#allocation2 + $0xa8] sm:$0xff]
    %v1678 = vld [vmem:[#allocation2 + $0xb0] sm:$0xff]
    %v1679 = vld [vmem:[#allocation2 + $0xb8] sm:$0xff]
    %v1680 = vld [vmem:[#allocation2 + $0xc0] sm:$0xff]
    %v1681 = vld [vmem:[#allocation2 + $0xc8] sm:$0xff]
    %v1682 = vld [vmem:[#allocation2 + $0xd0] sm:$0xff]
    %v1683 = vld [vmem:[#allocation2 + $0xd8] sm:$0xff]
    %v1684 = vld [vmem:[#allocation2 + $0xe0] sm:$0xff]
    %v1685 = vld [vmem:[#allocation2 + $0xe8] sm:$0xff]
    %v1686 = vld [vmem:[#allocation2 + $0xf0] sm:$0xff]
    %v1687 = vld [vmem:[#allocation2 + $0xf8] sm:$0xff]
    %v1688 = vld [vmem:[#allocation2 + $0x100] sm:$0xff]
    %v1689 = vld [vmem:[#allocation2 + $0x108] sm:$0xff]
    %v1690 = vld [vmem:[#allocation2 + $0x110] sm:$0xff]
    %v1691 = vld [vmem:[#allocation2 + $0x118] sm:$0xff]
    %v1692 = vld [vmem:[#allocation2 + $0x120] sm:$0xff]
    %v1693 = vld [vmem:[#allocation2 + $0x128] sm:$0xff]
    %v1694 = vld [vmem:[#allocation2 + $0x130] sm:$0xff]
    %v1695 = vld [vmem:[#allocation2 + $0x138] sm:$0xff]
    %v1696 = vld [vmem:[#allocation2 + $0x140] sm:$0xff]
    %v1697 = vld [vmem:[#allocation2 + $0x148] sm:$0xff]
    %v1698 = vld [vmem:[#allocation2 + $0x150] sm:$0xff]
    %v1699 = vld [vmem:[#allocation2 + $0x158] sm:$0xff]
    %v1700 = vld [vmem:[#allocation2 + $0x160] sm:$0xff]
    %v1701 = vld [vmem:[#allocation2 + $0x168] sm:$0xff]
    %v1702 = vld [vmem:[#allocation2 + $0x170] sm:$0xff]
    %v1703 = vld [vmem:[#allocation2 + $0x178] sm:$0xff]
    %v1704 = vld [vmem:[#allocation2 + $0x180] sm:$0xff]
    %v1705 = vld [vmem:[#allocation2 + $0x188] sm:$0xff]
    %v1706 = vld [vmem:[#allocation2 + $0x190] sm:$0xff]
    %v1707 = vld [vmem:[#allocation2 + $0x198] sm:$0xff]
    %v1708 = vld [vmem:[#allocation2 + $0x1a0] sm:$0xff]
    %v1709 = vld [vmem:[#allocation2 + $0x1a8] sm:$0xff]
    %v1710 = vld [vmem:[#allocation2 + $0x1b0] sm:$0xff]
    %v1711 = vld [vmem:[#allocation2 + $0x1b8] sm:$0xff]
    %v1712 = vld [vmem:[#allocation2 + $0x1c0] sm:$0xff]
    %v1713 = vld [vmem:[#allocation2 + $0x1c8] sm:$0xff]
    %v1714 = vld [vmem:[#allocation2 + $0x1d0] sm:$0xff]
    %v1715 = vld [vmem:[#allocation2 + $0x1d8] sm:$0xff]
    %v1716 = vld [vmem:[#allocation2 + $0x1e0] sm:$0xff]
    %v1717 = vld [vmem:[#allocation2 + $0x1e8] sm:$0xff]
    %v1718 = vld [vmem:[#allocation2 + $0x1f0] sm:$0xff]
    %v1719 = vld [vmem:[#allocation2 + $0x1f8] sm:$0xff]
    %v1720 = vld [vmem:[%s5] sm:$0xff]
    %v1721 = vld [vmem:[%s5 + $0x8] sm:$0xff]
    %v1722 = vld [vmem:[%s5 + $0x10] sm:$0xff]
    %v1723 = vld [vmem:[%s5 + $0x18] sm:$0xff]
    %v1724 = vld [vmem:[%s5 + $0x20] sm:$0xff]
    %v1725 = vld [vmem:[%s5 + $0x28] sm:$0xff]
    %v1726 = vld [vmem:[%s5 + $0x30] sm:$0xff]
    %v1727 = vld [vmem:[%s5 + $0x38] sm:$0xff]
    %vm1728 = vcmask 523264
    %v1730 = vsel %vm1728, %v1592, 0
    %v1733 = vsel %vm1728, %v1593, 0
    %v1736 = vsel %vm1728, %v1594, 0
    %v1739 = vsel %vm1728, %v1595, 0
    %v1742 = vsel %vm1728, %v1596, 0
    %v1745 = vsel %vm1728, %v1597, 0
    %v1748 = vsel %vm1728, %v1598, 0
    %v1751 = vsel %vm1728, %v1599, 0
    %v1754 = vsel %vm1728, %v1600, 0
    %v1757 = vsel %vm1728, %v1601, 0
    %v1760 = vsel %vm1728, %v1602, 0
    %v1763 = vsel %vm1728, %v1603, 0
    %v1766 = vsel %vm1728, %v1604, 0
    %v1769 = vsel %vm1728, %v1605, 0
    %v1772 = vsel %vm1728, %v1606, 0
    %v1775 = vsel %vm1728, %v1607, 0
    %v1778 = vsel %vm1728, %v1608, 0
    %v1781 = vsel %vm1728, %v1609, 0
    %v1784 = vsel %vm1728, %v1610, 0
    %v1787 = vsel %vm1728, %v1611, 0
    %v1790 = vsel %vm1728, %v1612, 0
    %v1793 = vsel %vm1728, %v1613, 0
    %v1796 = vsel %vm1728, %v1614, 0
    %v1799 = vsel %vm1728, %v1615, 0
    %v1802 = vsel %vm1728, %v1616, 0
    %v1805 = vsel %vm1728, %v1617, 0
    %v1808 = vsel %vm1728, %v1618, 0
    %v1811 = vsel %vm1728, %v1619, 0
    %v1814 = vsel %vm1728, %v1620, 0
    %v1817 = vsel %vm1728, %v1621, 0
    %v1820 = vsel %vm1728, %v1622, 0
    %v1823 = vsel %vm1728, %v1623, 0
    %v1826 = vsel %vm1728, %v1624, 0
    %v1829 = vsel %vm1728, %v1625, 0
    %v1832 = vsel %vm1728, %v1626, 0
    %v1835 = vsel %vm1728, %v1627, 0
    %v1838 = vsel %vm1728, %v1628, 0
    %v1841 = vsel %vm1728, %v1629, 0
    %v1844 = vsel %vm1728, %v1630, 0
    %v1847 = vsel %vm1728, %v1631, 0
    %v1850 = vsel %vm1728, %v1632, 0
    %v1853 = vsel %vm1728, %v1633, 0
    %v1856 = vsel %vm1728, %v1634, 0
    %v1859 = vsel %vm1728, %v1635, 0
    %v1862 = vsel %vm1728, %v1636, 0
    %v1865 = vsel %vm1728, %v1637, 0
    %v1868 = vsel %vm1728, %v1638, 0
    %v1871 = vsel %vm1728, %v1639, 0
    %v1874 = vsel %vm1728, %v1640, 0
    %v1877 = vsel %vm1728, %v1641, 0
    %v1880 = vsel %vm1728, %v1642, 0
    %v1883 = vsel %vm1728, %v1643, 0
    %v1886 = vsel %vm1728, %v1644, 0
    %v1889 = vsel %vm1728, %v1645, 0
    %v1892 = vsel %vm1728, %v1646, 0
    %v1895 = vsel %vm1728, %v1647, 0
    %v1898 = vsel %vm1728, %v1648, 0
    %v1901 = vsel %vm1728, %v1649, 0
    %v1904 = vsel %vm1728, %v1650, 0
    %v1907 = vsel %vm1728, %v1651, 0
    %v1910 = vsel %vm1728, %v1652, 0
    %v1913 = vsel %vm1728, %v1653, 0
    %v1916 = vsel %vm1728, %v1654, 0
    %v1919 = vsel %vm1728, %v1655, 0
    %1921 = vmatprep.subr.mxu0 0.0
    %1922 = vmatpush1.msra.mxu0 %v1720
    %1923 = vmatprep.subr.mxu0 0.0
    %1924 = vmatpush1.msra.mxu0 %v1721
    %1925 = vmatprep.subr.mxu0 0.0
    %1926 = vmatpush1.msra.mxu0 %v1722
    %1927 = vmatprep.subr.mxu0 0.0
    %1928 = vmatpush1.msra.mxu0 %v1723
    %1929 = vmatprep.subr.mxu0 0.0
    %1930 = vmatpush1.msra.mxu0 %v1724
    %1931 = vmatprep.subr.mxu0 0.0
    %1932 = vmatpush1.msra.mxu0 %v1725
    %1933 = vmatprep.subr.mxu0 0.0
    %1934 = vmatpush1.msra.mxu0 %v1726
    %1935 = vmatprep.subr.mxu0 0.0
    %1936 = vmatpush1.msra.mxu0 %v1727
    %1937 = vmatprep.subr.mxu0 0.0
    %1938 = vmatpush1.msra.mxu0 0.0
    %1939 = vmatprep.subr.mxu0 0.0
    %1940 = vmatpush1.msra.mxu0 0.0
    %1941 = vmatprep.subr.mxu0 0.0
    %1942 = vmatpush1.msra.mxu0 0.0
    %1943 = vmatprep.subr.mxu0 0.0
    %1944 = vmatpush1.msra.mxu0 0.0
    %1945 = vmatprep.subr.mxu0 0.0
    %1946 = vmatpush1.msra.mxu0 0.0
    %1947 = vmatprep.subr.mxu0 0.0
    %1948 = vmatpush1.msra.mxu0 0.0
    %1949 = vmatprep.subr.mxu0 0.0
    %1950 = vmatpush1.msra.mxu0 0.0
    %1951 = vmatprep.subr.mxu0 0.0
    %1952 = vmatpush1.msra.mxu0 0.0
    %1953 = vmatprep.subr.mxu0 0.0
    %1954 = vmatpush1.msra.mxu0 0.0
    %1955 = vmatprep.subr.mxu0 0.0
    %1956 = vmatpush1.msra.mxu0 0.0
    %1957 = vmatprep.subr.mxu0 0.0
    %1958 = vmatpush1.msra.mxu0 0.0
    %1959 = vmatprep.subr.mxu0 0.0
    %1960 = vmatpush1.msra.mxu0 0.0
    %1961 = vmatprep.subr.mxu0 0.0
    %1962 = vmatpush1.msra.mxu0 0.0
    %1963 = vmatprep.subr.mxu0 0.0
    %1964 = vmatpush1.msra.mxu0 0.0
    %1965 = vmatprep.subr.mxu0 0.0
    %1966 = vmatpush1.msra.mxu0 0.0
    %1967 = vmatprep.subr.mxu0 0.0
    %1968 = vmatpush1.msra.mxu0 0.0
    %1969 = vmatprep.subr.mxu0 0.0
    %1970 = vmatpush1.msra.mxu0 0.0
    %1971 = vmatprep.subr.mxu0 0.0
    %1972 = vmatpush1.msra.mxu0 0.0
    %1973 = vmatprep.subr.mxu0 0.0
    %1974 = vmatpush1.msra.mxu0 0.0
    %1975 = vmatprep.subr.mxu0 0.0
    %1976 = vmatpush1.msra.mxu0 0.0
    %1977 = vmatprep.subr.mxu0 0.0
    %1978 = vmatpush1.msra.mxu0 0.0
    %1979 = vmatprep.subr.mxu0 0.0
    %1980 = vmatpush1.msra.mxu0 0.0
    %1981 = vmatprep.subr.mxu0 0.0
    %1982 = vmatpush1.msra.mxu0 0.0
    %1983 = vmatprep.subr.mxu0 0.0
    %1984 = vmatpush1.msra.mxu0 0.0
    %1985 = vmatprep.mubr.f32.mxu0 0.0
    %1986 = vmatmul.mubr.f32.gmra.mrb[0].mxu0 %v1730
    %v1987 = vpop.f32.mrb[0].mxu0
    %v1988 = vadd.f32 0.0, %v1987
    %v1989 = vpop.f32.mrb[0].mxu0
    %1990 = vmatprep.mubr.f32.mxu0 0.0
    %1991 = vmatmul.mubr.f32.gmra.mrb[0].mxu0 %v1733
    %v1992 = vpop.f32.mrb[0].mxu0
    %v1993 = vadd.f32 0.0, %v1992
    %v1994 = vpop.f32.mrb[0].mxu0
    %1995 = vmatprep.mubr.f32.mxu0 0.0
    %1996 = vmatmul.mubr.f32.gmra.mrb[0].mxu0 %v1736
    %v1997 = vpop.f32.mrb[0].mxu0
    %v1998 = vadd.f32 0.0, %v1997
    %v1999 = vpop.f32.mrb[0].mxu0
    %2000 = vmatprep.mubr.f32.mxu0 0.0
    %2001 = vmatmul.mubr.f32.gmra.mrb[0].mxu0 %v1739
    %v2002 = vpop.f32.mrb[0].mxu0
    %v2003 = vadd.f32 0.0, %v2002
    %v2004 = vpop.f32.mrb[0].mxu0
    %2005 = vmatprep.mubr.f32.mxu0 0.0
    %2006 = vmatmul.mubr.f32.gmra.mrb[0].mxu0 %v1742
    %v2007 = vpop.f32.mrb[0].mxu0
    %v2008 = vadd.f32 0.0, %v2007
    %v2009 = vpop.f32.mrb[0].mxu0
    %2010 = vmatprep.mubr.f32.mxu0 0.0
    %2011 = vmatmul.mubr.f32.gmra.mrb[0].mxu0 %v1745
    %v2012 = vpop.f32.mrb[0].mxu0
    %v2013 = vadd.f32 0.0, %v2012
    %v2014 = vpop.f32.mrb[0].mxu0
    %2015 = vmatprep.mubr.f32.mxu0 0.0
    %2016 = vmatmul.mubr.f32.gmra.mrb[0].mxu0 %v1748
    %v2017 = vpop.f32.mrb[0].mxu0
    %v2018 = vadd.f32 0.0, %v2017
    %v2019 = vpop.f32.mrb[0].mxu0
    %2020 = vmatprep.mubr.f32.mxu0 0.0
    %2021 = vmatmul.mubr.f32.gmra.mrb[0].mxu0 %v1751
    %v2022 = vpop.f32.mrb[0].mxu0
    %v2023 = vadd.f32 0.0, %v2022
    %v2024 = vpop.f32.mrb[0].mxu0
    %2025 = vmatprep.mubr.f32.mxu0 0.0
    %2026 = vmatmul.mubr.f32.gmra.mrb[0].mxu0 %v1754
    %v2027 = vpop.f32.mrb[0].mxu0
    %v2028 = vadd.f32 0.0, %v2027
    %v2029 = vpop.f32.mrb[0].mxu0
    %2030 = vmatprep.mubr.f32.mxu0 0.0
    %2031 = vmatmul.mubr.f32.gmra.mrb[0].mxu0 %v1757
    %v2032 = vpop.f32.mrb[0].mxu0
    %v2033 = vadd.f32 0.0, %v2032
    %v2034 = vpop.f32.mrb[0].mxu0
    %2035 = vmatprep.mubr.f32.mxu0 0.0
    %2036 = vmatmul.mubr.f32.gmra.mrb[0].mxu0 %v1760
    %v2037 = vpop.f32.mrb[0].mxu0
    %v2038 = vadd.f32 0.0, %v2037
    %v2039 = vpop.f32.mrb[0].mxu0
    %2040 = vmatprep.mubr.f32.mxu0 0.0
    %2041 = vmatmul.mubr.f32.gmra.mrb[0].mxu0 %v1763
    %v2042 = vpop.f32.mrb[0].mxu0
    %v2043 = vadd.f32 0.0, %v2042
    %v2044 = vpop.f32.mrb[0].mxu0
    %2045 = vmatprep.mubr.f32.mxu0 0.0
    %2046 = vmatmul.mubr.f32.gmra.mrb[0].mxu0 %v1766
    %v2047 = vpop.f32.mrb[0].mxu0
    %v2048 = vadd.f32 0.0, %v2047
    %v2049 = vpop.f32.mrb[0].mxu0
    %2050 = vmatprep.mubr.f32.mxu0 0.0
    %2051 = vmatmul.mubr.f32.gmra.mrb[0].mxu0 %v1769
    %v2052 = vpop.f32.mrb[0].mxu0
    %v2053 = vadd.f32 0.0, %v2052
    %v2054 = vpop.f32.mrb[0].mxu0
    %2055 = vmatprep.mubr.f32.mxu0 0.0
    %2056 = vmatmul.mubr.f32.gmra.mrb[0].mxu0 %v1772
    %v2057 = vpop.f32.mrb[0].mxu0
    %v2058 = vadd.f32 0.0, %v2057
    %v2059 = vpop.f32.mrb[0].mxu0
    %2060 = vmatprep.mubr.f32.mxu0 0.0
    %2061 = vmatmul.mubr.f32.gmra.mrb[0].mxu0 %v1775
    %v2062 = vpop.f32.mrb[0].mxu0
    %v2063 = vadd.f32 0.0, %v2062
    %v2064 = vpop.f32.mrb[0].mxu0
    %2065 = vmatprep.mubr.f32.mxu0 0.0
    %2066 = vmatmul.mubr.f32.gmra.mrb[0].mxu0 %v1778
    %v2067 = vpop.f32.mrb[0].mxu0
    %v2068 = vadd.f32 0.0, %v2067
    %v2069 = vpop.f32.mrb[0].mxu0
    %2070 = vmatprep.mubr.f32.mxu0 0.0
    %2071 = vmatmul.mubr.f32.gmra.mrb[0].mxu0 %v1781
    %v2072 = vpop.f32.mrb[0].mxu0
    %v2073 = vadd.f32 0.0, %v2072
    %v2074 = vpop.f32.mrb[0].mxu0
    %2075 = vmatprep.mubr.f32.mxu0 0.0
    %2076 = vmatmul.mubr.f32.gmra.mrb[0].mxu0 %v1784
    %v2077 = vpop.f32.mrb[0].mxu0
    %v2078 = vadd.f32 0.0, %v2077
    %v2079 = vpop.f32.mrb[0].mxu0
    %2080 = vmatprep.mubr.f32.mxu0 0.0
    %2081 = vmatmul.mubr.f32.gmra.mrb[0].mxu0 %v1787
    %v2082 = vpop.f32.mrb[0].mxu0
    %v2083 = vadd.f32 0.0, %v2082
    %v2084 = vpop.f32.mrb[0].mxu0
    %2085 = vmatprep.mubr.f32.mxu0 0.0
    %2086 = vmatmul.mubr.f32.gmra.mrb[0].mxu0 %v1790
    %v2087 = vpop.f32.mrb[0].mxu0
    %v2088 = vadd.f32 0.0, %v2087
    %v2089 = vpop.f32.mrb[0].mxu0
    %2090 = vmatprep.mubr.f32.mxu0 0.0
    %2091 = vmatmul.mubr.f32.gmra.mrb[0].mxu0 %v1793
    %v2092 = vpop.f32.mrb[0].mxu0
    %v2093 = vadd.f32 0.0, %v2092
    %v2094 = vpop.f32.mrb[0].mxu0
    %2095 = vmatprep.mubr.f32.mxu0 0.0
    %2096 = vmatmul.mubr.f32.gmra.mrb[0].mxu0 %v1796
    %v2097 = vpop.f32.mrb[0].mxu0
    %v2098 = vadd.f32 0.0, %v2097
    %v2099 = vpop.f32.mrb[0].mxu0
    %2100 = vmatprep.mubr.f32.mxu0 0.0
    %2101 = vmatmul.mubr.f32.gmra.mrb[0].mxu0 %v1799
    %v2102 = vpop.f32.mrb[0].mxu0
    %v2103 = vadd.f32 0.0, %v2102
    %v2104 = vpop.f32.mrb[0].mxu0
    %2105 = vmatprep.mubr.f32.mxu0 0.0
    %2106 = vmatmul.mubr.f32.gmra.mrb[0].mxu0 %v1802
    %v2107 = vpop.f32.mrb[0].mxu0
    %v2108 = vadd.f32 0.0, %v2107
    %v2109 = vpop.f32.mrb[0].mxu0
    %2110 = vmatprep.mubr.f32.mxu0 0.0
    %2111 = vmatmul.mubr.f32.gmra.mrb[0].mxu0 %v1805
    %v2112 = vpop.f32.mrb[0].mxu0
    %v2113 = vadd.f32 0.0, %v2112
    %v2114 = vpop.f32.mrb[0].mxu0
    %2115 = vmatprep.mubr.f32.mxu0 0.0
    %2116 = vmatmul.mubr.f32.gmra.mrb[0].mxu0 %v1808
    %v2117 = vpop.f32.mrb[0].mxu0
    %v2118 = vadd.f32 0.0, %v2117
    %v2119 = vpop.f32.mrb[0].mxu0
    %2120 = vmatprep.mubr.f32.mxu0 0.0
    %2121 = vmatmul.mubr.f32.gmra.mrb[0].mxu0 %v1811
    %v2122 = vpop.f32.mrb[0].mxu0
    %v2123 = vadd.f32 0.0, %v2122
    %v2124 = vpop.f32.mrb[0].mxu0
    %2125 = vmatprep.mubr.f32.mxu0 0.0
    %2126 = vmatmul.mubr.f32.gmra.mrb[0].mxu0 %v1814
    %v2127 = vpop.f32.mrb[0].mxu0
    %v2128 = vadd.f32 0.0, %v2127
    %v2129 = vpop.f32.mrb[0].mxu0
    %2130 = vmatprep.mubr.f32.mxu0 0.0
    %2131 = vmatmul.mubr.f32.gmra.mrb[0].mxu0 %v1817
    %v2132 = vpop.f32.mrb[0].mxu0
    %v2133 = vadd.f32 0.0, %v2132
    %v2134 = vpop.f32.mrb[0].mxu0
    %2135 = vmatprep.mubr.f32.mxu0 0.0
    %2136 = vmatmul.mubr.f32.gmra.mrb[0].mxu0 %v1820
    %v2137 = vpop.f32.mrb[0].mxu0
    %v2138 = vadd.f32 0.0, %v2137
    %v2139 = vpop.f32.mrb[0].mxu0
    %2140 = vmatprep.mubr.f32.mxu0 0.0
    %2141 = vmatmul.mubr.f32.gmra.mrb[0].mxu0 %v1823
    %v2142 = vpop.f32.mrb[0].mxu0
    %v2143 = vadd.f32 0.0, %v2142
    %v2144 = vpop.f32.mrb[0].mxu0
    %2145 = vmatprep.mubr.f32.mxu0 0.0
    %2146 = vmatmul.mubr.f32.gmra.mrb[0].mxu0 %v1826
    %v2147 = vpop.f32.mrb[0].mxu0
    %v2148 = vadd.f32 0.0, %v2147
    %v2149 = vpop.f32.mrb[0].mxu0
    %2150 = vmatprep.mubr.f32.mxu0 0.0
    %2151 = vmatmul.mubr.f32.gmra.mrb[0].mxu0 %v1829
    %v2152 = vpop.f32.mrb[0].mxu0
    %v2153 = vadd.f32 0.0, %v2152
    %v2154 = vpop.f32.mrb[0].mxu0
    %2155 = vmatprep.mubr.f32.mxu0 0.0
    %2156 = vmatmul.mubr.f32.gmra.mrb[0].mxu0 %v1832
    %v2157 = vpop.f32.mrb[0].mxu0
    %v2158 = vadd.f32 0.0, %v2157
    %v2159 = vpop.f32.mrb[0].mxu0
    %2160 = vmatprep.mubr.f32.mxu0 0.0
    %2161 = vmatmul.mubr.f32.gmra.mrb[0].mxu0 %v1835
    %v2162 = vpop.f32.mrb[0].mxu0
    %v2163 = vadd.f32 0.0, %v2162
    %v2164 = vpop.f32.mrb[0].mxu0
    %2165 = vmatprep.mubr.f32.mxu0 0.0
    %2166 = vmatmul.mubr.f32.gmra.mrb[0].mxu0 %v1838
    %v2167 = vpop.f32.mrb[0].mxu0
    %v2168 = vadd.f32 0.0, %v2167
    %v2169 = vpop.f32.mrb[0].mxu0
    %2170 = vmatprep.mubr.f32.mxu0 0.0
    %2171 = vmatmul.mubr.f32.gmra.mrb[0].mxu0 %v1841
    %v2172 = vpop.f32.mrb[0].mxu0
    %v2173 = vadd.f32 0.0, %v2172
    %v2174 = vpop.f32.mrb[0].mxu0
    %2175 = vmatprep.mubr.f32.mxu0 0.0
    %2176 = vmatmul.mubr.f32.gmra.mrb[0].mxu0 %v1844
    %v2177 = vpop.f32.mrb[0].mxu0
    %v2178 = vadd.f32 0.0, %v2177
    %v2179 = vpop.f32.mrb[0].mxu0
    %2180 = vmatprep.mubr.f32.mxu0 0.0
    %2181 = vmatmul.mubr.f32.gmra.mrb[0].mxu0 %v1847
    %v2182 = vpop.f32.mrb[0].mxu0
    %v2183 = vadd.f32 0.0, %v2182
    %v2184 = vpop.f32.mrb[0].mxu0
    %2185 = vmatprep.mubr.f32.mxu0 0.0
    %2186 = vmatmul.mubr.f32.gmra.mrb[0].mxu0 %v1850
    %v2187 = vpop.f32.mrb[0].mxu0
    %v2188 = vadd.f32 0.0, %v2187
    %v2189 = vpop.f32.mrb[0].mxu0
    %2190 = vmatprep.mubr.f32.mxu0 0.0
    %2191 = vmatmul.mubr.f32.gmra.mrb[0].mxu0 %v1853
    %v2192 = vpop.f32.mrb[0].mxu0
    %v2193 = vadd.f32 0.0, %v2192
    %v2194 = vpop.f32.mrb[0].mxu0
    %2195 = vmatprep.mubr.f32.mxu0 0.0
    %2196 = vmatmul.mubr.f32.gmra.mrb[0].mxu0 %v1856
    %v2197 = vpop.f32.mrb[0].mxu0
    %v2198 = vadd.f32 0.0, %v2197
    %v2199 = vpop.f32.mrb[0].mxu0
    %2200 = vmatprep.mubr.f32.mxu0 0.0
    %2201 = vmatmul.mubr.f32.gmra.mrb[0].mxu0 %v1859
    %v2202 = vpop.f32.mrb[0].mxu0
    %v2203 = vadd.f32 0.0, %v2202
    %v2204 = vpop.f32.mrb[0].mxu0
    %2205 = vmatprep.mubr.f32.mxu0 0.0
    %2206 = vmatmul.mubr.f32.gmra.mrb[0].mxu0 %v1862
    %v2207 = vpop.f32.mrb[0].mxu0
    %v2208 = vadd.f32 0.0, %v2207
    %v2209 = vpop.f32.mrb[0].mxu0
    %2210 = vmatprep.mubr.f32.mxu0 0.0
    %2211 = vmatmul.mubr.f32.gmra.mrb[0].mxu0 %v1865
    %v2212 = vpop.f32.mrb[0].mxu0
    %v2213 = vadd.f32 0.0, %v2212
    %v2214 = vpop.f32.mrb[0].mxu0
    %2215 = vmatprep.mubr.f32.mxu0 0.0
    %2216 = vmatmul.mubr.f32.gmra.mrb[0].mxu0 %v1868
    %v2217 = vpop.f32.mrb[0].mxu0
    %v2218 = vadd.f32 0.0, %v2217
    %v2219 = vpop.f32.mrb[0].mxu0
    %2220 = vmatprep.mubr.f32.mxu0 0.0
    %2221 = vmatmul.mubr.f32.gmra.mrb[0].mxu0 %v1871
    %v2222 = vpop.f32.mrb[0].mxu0
    %v2223 = vadd.f32 0.0, %v2222
    %v2224 = vpop.f32.mrb[0].mxu0
    %2225 = vmatprep.mubr.f32.mxu0 0.0
    %2226 = vmatmul.mubr.f32.gmra.mrb[0].mxu0 %v1874
    %v2227 = vpop.f32.mrb[0].mxu0
    %v2228 = vadd.f32 0.0, %v2227
    %v2229 = vpop.f32.mrb[0].mxu0
    %2230 = vmatprep.mubr.f32.mxu0 0.0
    %2231 = vmatmul.mubr.f32.gmra.mrb[0].mxu0 %v1877
    %v2232 = vpop.f32.mrb[0].mxu0
    %v2233 = vadd.f32 0.0, %v2232
    %v2234 = vpop.f32.mrb[0].mxu0
    %2235 = vmatprep.mubr.f32.mxu0 0.0
    %2236 = vmatmul.mubr.f32.gmra.mrb[0].mxu0 %v1880
    %v2237 = vpop.f32.mrb[0].mxu0
    %v2238 = vadd.f32 0.0, %v2237
    %v2239 = vpop.f32.mrb[0].mxu0
    %2240 = vmatprep.mubr.f32.mxu0 0.0
    %2241 = vmatmul.mubr.f32.gmra.mrb[0].mxu0 %v1883
    %v2242 = vpop.f32.mrb[0].mxu0
    %v2243 = vadd.f32 0.0, %v2242
    %v2244 = vpop.f32.mrb[0].mxu0
    %2245 = vmatprep.mubr.f32.mxu0 0.0
    %2246 = vmatmul.mubr.f32.gmra.mrb[0].mxu0 %v1886
    %v2247 = vpop.f32.mrb[0].mxu0
    %v2248 = vadd.f32 0.0, %v2247
    %v2249 = vpop.f32.mrb[0].mxu0
    %2250 = vmatprep.mubr.f32.mxu0 0.0
    %2251 = vmatmul.mubr.f32.gmra.mrb[0].mxu0 %v1889
    %v2252 = vpop.f32.mrb[0].mxu0
    %v2253 = vadd.f32 0.0, %v2252
    %v2254 = vpop.f32.mrb[0].mxu0
    %2255 = vmatprep.mubr.f32.mxu0 0.0
    %2256 = vmatmul.mubr.f32.gmra.mrb[0].mxu0 %v1892
    %v2257 = vpop.f32.mrb[0].mxu0
    %v2258 = vadd.f32 0.0, %v2257
    %v2259 = vpop.f32.mrb[0].mxu0
    %2260 = vmatprep.mubr.f32.mxu0 0.0
    %2261 = vmatmul.mubr.f32.gmra.mrb[0].mxu0 %v1895
    %v2262 = vpop.f32.mrb[0].mxu0
    %v2263 = vadd.f32 0.0, %v2262
    %v2264 = vpop.f32.mrb[0].mxu0
    %2265 = vmatprep.mubr.f32.mxu0 0.0
    %2266 = vmatmul.mubr.f32.gmra.mrb[0].mxu0 %v1898
    %v2267 = vpop.f32.mrb[0].mxu0
    %v2268 = vadd.f32 0.0, %v2267
    %v2269 = vpop.f32.mrb[0].mxu0
    %2270 = vmatprep.mubr.f32.mxu0 0.0
    %2271 = vmatmul.mubr.f32.gmra.mrb[0].mxu0 %v1901
    %v2272 = vpop.f32.mrb[0].mxu0
    %v2273 = vadd.f32 0.0, %v2272
    %v2274 = vpop.f32.mrb[0].mxu0
    %2275 = vmatprep.mubr.f32.mxu0 0.0
    %2276 = vmatmul.mubr.f32.gmra.mrb[0].mxu0 %v1904
    %v2277 = vpop.f32.mrb[0].mxu0
    %v2278 = vadd.f32 0.0, %v2277
    %v2279 = vpop.f32.mrb[0].mxu0
    %2280 = vmatprep.mubr.f32.mxu0 0.0
    %2281 = vmatmul.mubr.f32.gmra.mrb[0].mxu0 %v1907
    %v2282 = vpop.f32.mrb[0].mxu0
    %v2283 = vadd.f32 0.0, %v2282
    %v2284 = vpop.f32.mrb[0].mxu0
    %2285 = vmatprep.mubr.f32.mxu0 0.0
    %2286 = vmatmul.mubr.f32.gmra.mrb[0].mxu0 %v1910
    %v2287 = vpop.f32.mrb[0].mxu0
    %v2288 = vadd.f32 0.0, %v2287
    %v2289 = vpop.f32.mrb[0].mxu0
    %2290 = vmatprep.mubr.f32.mxu0 0.0
    %2291 = vmatmul.mubr.f32.gmra.mrb[0].mxu0 %v1913
    %v2292 = vpop.f32.mrb[0].mxu0
    %v2293 = vadd.f32 0.0, %v2292
    %v2294 = vpop.f32.mrb[0].mxu0
    %2295 = vmatprep.mubr.f32.mxu0 0.0
    %2296 = vmatmul.mubr.f32.gmra.mrb[0].mxu0 %v1916
    %v2297 = vpop.f32.mrb[0].mxu0
    %v2298 = vadd.f32 0.0, %v2297
    %v2299 = vpop.f32.mrb[0].mxu0
    %2300 = vmatprep.mubr.f32.mxu0 0.0
    %2301 = vmatmul.mubr.f32.gmra.mrb[0].mxu0 %v1919
    %v2302 = vpop.f32.mrb[0].mxu0
    %v2303 = vadd.f32 0.0, %v2302
    %v2304 = vpop.f32.mrb[0].mxu0
    %2305 = vdwg.mxu0
    %v2306 = vadd.f32 %v1656, %v1988
    %v2307 = vadd.f32 %v1657, %v1993
    %v2308 = vadd.f32 %v1658, %v1998
    %v2309 = vadd.f32 %v1659, %v2003
    %v2310 = vadd.f32 %v1660, %v2008
    %v2311 = vadd.f32 %v1661, %v2013
    %v2312 = vadd.f32 %v1662, %v2018
    %v2313 = vadd.f32 %v1663, %v2023
    %v2314 = vadd.f32 %v1664, %v2028
    %v2315 = vadd.f32 %v1665, %v2033
    %v2316 = vadd.f32 %v1666, %v2038
    %v2317 = vadd.f32 %v1667, %v2043
    %v2318 = vadd.f32 %v1668, %v2048
    %v2319 = vadd.f32 %v1669, %v2053
    %v2320 = vadd.f32 %v1670, %v2058
    %v2321 = vadd.f32 %v1671, %v2063
    %v2322 = vadd.f32 %v1672, %v2068
    %v2323 = vadd.f32 %v1673, %v2073
    %v2324 = vadd.f32 %v1674, %v2078
    %v2325 = vadd.f32 %v1675, %v2083
    %v2326 = vadd.f32 %v1676, %v2088
    %v2327 = vadd.f32 %v1677, %v2093
    %v2328 = vadd.f32 %v1678, %v2098
    %v2329 = vadd.f32 %v1679, %v2103
    %v2330 = vadd.f32 %v1680, %v2108
    %v2331 = vadd.f32 %v1681, %v2113
    %v2332 = vadd.f32 %v1682, %v2118
    %v2333 = vadd.f32 %v1683, %v2123
    %v2334 = vadd.f32 %v1684, %v2128
    %v2335 = vadd.f32 %v1685, %v2133
    %v2336 = vadd.f32 %v1686, %v2138
    %v2337 = vadd.f32 %v1687, %v2143
    %v2338 = vadd.f32 %v1688, %v2148
    %v2339 = vadd.f32 %v1689, %v2153
    %v2340 = vadd.f32 %v1690, %v2158
    %v2341 = vadd.f32 %v1691, %v2163
    %v2342 = vadd.f32 %v1692, %v2168
    %v2343 = vadd.f32 %v1693, %v2173
    %v2344 = vadd.f32 %v1694, %v2178
    %v2345 = vadd.f32 %v1695, %v2183
    %v2346 = vadd.f32 %v1696, %v2188
    %v2347 = vadd.f32 %v1697, %v2193
    %v2348 = vadd.f32 %v1698, %v2198
    %v2349 = vadd.f32 %v1699, %v2203
    %v2350 = vadd.f32 %v1700, %v2208
    %v2351 = vadd.f32 %v1701, %v2213
    %v2352 = vadd.f32 %v1702, %v2218
    %v2353 = vadd.f32 %v1703, %v2223
    %v2354 = vadd.f32 %v1704, %v2228
    %v2355 = vadd.f32 %v1705, %v2233
    %v2356 = vadd.f32 %v1706, %v2238
    %v2357 = vadd.f32 %v1707, %v2243
    %v2358 = vadd.f32 %v1708, %v2248
    %v2359 = vadd.f32 %v1709, %v2253
    %v2360 = vadd.f32 %v1710, %v2258
    %v2361 = vadd.f32 %v1711, %v2263
    %v2362 = vadd.f32 %v1712, %v2268
    %v2363 = vadd.f32 %v1713, %v2273
    %v2364 = vadd.f32 %v1714, %v2278
    %v2365 = vadd.f32 %v1715, %v2283
    %v2366 = vadd.f32 %v1716, %v2288
    %v2367 = vadd.f32 %v1717, %v2293
    %v2368 = vadd.f32 %v1718, %v2298
    %v2369 = vadd.f32 %v1719, %v2303
    %2370 = vst [vmem:[#allocation2] sm:$0xff] %v2306
    %2371 = vst [vmem:[#allocation2 + $0x8] sm:$0xff] %v2307
    %2372 = vst [vmem:[#allocation2 + $0x10] sm:$0xff] %v2308
    %2373 = vst [vmem:[#allocation2 + $0x18] sm:$0xff] %v2309
    %2374 = vst [vmem:[#allocation2 + $0x20] sm:$0xff] %v2310
    %2375 = vst [vmem:[#allocation2 + $0x28] sm:$0xff] %v2311
    %2376 = vst [vmem:[#allocation2 + $0x30] sm:$0xff] %v2312
    %2377 = vst [vmem:[#allocation2 + $0x38] sm:$0xff] %v2313
    %2378 = vst [vmem:[#allocation2 + $0x40] sm:$0xff] %v2314
    %2379 = vst [vmem:[#allocation2 + $0x48] sm:$0xff] %v2315
    %2380 = vst [vmem:[#allocation2 + $0x50] sm:$0xff] %v2316
    %2381 = vst [vmem:[#allocation2 + $0x58] sm:$0xff] %v2317
    %2382 = vst [vmem:[#allocation2 + $0x60] sm:$0xff] %v2318
    %2383 = vst [vmem:[#allocation2 + $0x68] sm:$0xff] %v2319
    %2384 = vst [vmem:[#allocation2 + $0x70] sm:$0xff] %v2320
    %2385 = vst [vmem:[#allocation2 + $0x78] sm:$0xff] %v2321
    %2386 = vst [vmem:[#allocation2 + $0x80] sm:$0xff] %v2322
    %2387 = vst [vmem:[#allocation2 + $0x88] sm:$0xff] %v2323
    %2388 = vst [vmem:[#allocation2 + $0x90] sm:$0xff] %v2324
    %2389 = vst [vmem:[#allocation2 + $0x98] sm:$0xff] %v2325
    %2390 = vst [vmem:[#allocation2 + $0xa0] sm:$0xff] %v2326
    %2391 = vst [vmem:[#allocation2 + $0xa8] sm:$0xff] %v2327
    %2392 = vst [vmem:[#allocation2 + $0xb0] sm:$0xff] %v2328
    %2393 = vst [vmem:[#allocation2 + $0xb8] sm:$0xff] %v2329
    %2394 = vst [vmem:[#allocation2 + $0xc0] sm:$0xff] %v2330
    %2395 = vst [vmem:[#allocation2 + $0xc8] sm:$0xff] %v2331
    %2396 = vst [vmem:[#allocation2 + $0xd0] sm:$0xff] %v2332
    %2397 = vst [vmem:[#allocation2 + $0xd8] sm:$0xff] %v2333
    %2398 = vst [vmem:[#allocation2 + $0xe0] sm:$0xff] %v2334
    %2399 = vst [vmem:[#allocation2 + $0xe8] sm:$0xff] %v2335
    %2400 = vst [vmem:[#allocation2 + $0xf0] sm:$0xff] %v2336
    %2401 = vst [vmem:[#allocation2 + $0xf8] sm:$0xff] %v2337
    %2402 = vst [vmem:[#allocation2 + $0x100] sm:$0xff] %v2338
    %2403 = vst [vmem:[#allocation2 + $0x108] sm:$0xff] %v2339
    %2404 = vst [vmem:[#allocation2 + $0x110] sm:$0xff] %v2340
    %2405 = vst [vmem:[#allocation2 + $0x118] sm:$0xff] %v2341
    %2406 = vst [vmem:[#allocation2 + $0x120] sm:$0xff] %v2342
    %2407 = vst [vmem:[#allocation2 + $0x128] sm:$0xff] %v2343
    %2408 = vst [vmem:[#allocation2 + $0x130] sm:$0xff] %v2344
    %2409 = vst [vmem:[#allocation2 + $0x138] sm:$0xff] %v2345
    %2410 = vst [vmem:[#allocation2 + $0x140] sm:$0xff] %v2346
    %2411 = vst [vmem:[#allocation2 + $0x148] sm:$0xff] %v2347
    %2412 = vst [vmem:[#allocation2 + $0x150] sm:$0xff] %v2348
    %2413 = vst [vmem:[#allocation2 + $0x158] sm:$0xff] %v2349
    %2414 = vst [vmem:[#allocation2 + $0x160] sm:$0xff] %v2350
    %2415 = vst [vmem:[#allocation2 + $0x168] sm:$0xff] %v2351
    %2416 = vst [vmem:[#allocation2 + $0x170] sm:$0xff] %v2352
    %2417 = vst [vmem:[#allocation2 + $0x178] sm:$0xff] %v2353
    %2418 = vst [vmem:[#allocation2 + $0x180] sm:$0xff] %v2354
    %2419 = vst [vmem:[#allocation2 + $0x188] sm:$0xff] %v2355
    %2420 = vst [vmem:[#allocation2 + $0x190] sm:$0xff] %v2356
    %2421 = vst [vmem:[#allocation2 + $0x198] sm:$0xff] %v2357
    %2422 = vst [vmem:[#allocation2 + $0x1a0] sm:$0xff] %v2358
    %2423 = vst [vmem:[#allocation2 + $0x1a8] sm:$0xff] %v2359
    %2424 = vst [vmem:[#allocation2 + $0x1b0] sm:$0xff] %v2360
    %2425 = vst [vmem:[#allocation2 + $0x1b8] sm:$0xff] %v2361
    %2426 = vst [vmem:[#allocation2 + $0x1c0] sm:$0xff] %v2362
    %2427 = vst [vmem:[#allocation2 + $0x1c8] sm:$0xff] %v2363
    %2428 = vst [vmem:[#allocation2 + $0x1d0] sm:$0xff] %v2364
    %2429 = vst [vmem:[#allocation2 + $0x1d8] sm:$0xff] %v2365
    %2430 = vst [vmem:[#allocation2 + $0x1e0] sm:$0xff] %v2366
    %2431 = vst [vmem:[#allocation2 + $0x1e8] sm:$0xff] %v2367
    %2432 = vst [vmem:[#allocation2 + $0x1f0] sm:$0xff] %v2368
    %2433 = vst [vmem:[#allocation2 + $0x1f8] sm:$0xff] %v2369
    // Predicated region
    $region34: #{tpu_custom_call.1} parent=1 // pred_check
      %p2434 = pneg %p27
    $region35: #{tpu_custom_call.1} parent=1 // pred_check_branch
      %2436 = sbr.rel (%p2434) target = $region37
    $region36: #{tpu_custom_call.1} parent=1 // pred_region
      %v2437 = vld [vmem:[#allocation2] sm:$0xff]
      %v2438 = vld [vmem:[#allocation2 + $0x8] sm:$0xff]
      %v2439 = vld [vmem:[#allocation2 + $0x10] sm:$0xff]
      %v2440 = vld [vmem:[#allocation2 + $0x18] sm:$0xff]
      %v2441 = vld [vmem:[#allocation2 + $0x20] sm:$0xff]
      %v2442 = vld [vmem:[#allocation2 + $0x28] sm:$0xff]
      %v2443 = vld [vmem:[#allocation2 + $0x30] sm:$0xff]
      %v2444 = vld [vmem:[#allocation2 + $0x38] sm:$0xff]
      %v2445 = vld [vmem:[#allocation2 + $0x40] sm:$0xff]
      %v2446 = vld [vmem:[#allocation2 + $0x48] sm:$0xff]
      %v2447 = vld [vmem:[#allocation2 + $0x50] sm:$0xff]
      %v2448 = vld [vmem:[#allocation2 + $0x58] sm:$0xff]
      %v2449 = vld [vmem:[#allocation2 + $0x60] sm:$0xff]
      %v2450 = vld [vmem:[#allocation2 + $0x68] sm:$0xff]
      %v2451 = vld [vmem:[#allocation2 + $0x70] sm:$0xff]
      %v2452 = vld [vmem:[#allocation2 + $0x78] sm:$0xff]
      %v2453 = vld [vmem:[#allocation2 + $0x80] sm:$0xff]
      %v2454 = vld [vmem:[#allocation2 + $0x88] sm:$0xff]
      %v2455 = vld [vmem:[#allocation2 + $0x90] sm:$0xff]
      %v2456 = vld [vmem:[#allocation2 + $0x98] sm:$0xff]
      %v2457 = vld [vmem:[#allocation2 + $0xa0] sm:$0xff]
      %v2458 = vld [vmem:[#allocation2 + $0xa8] sm:$0xff]
      %v2459 = vld [vmem:[#allocation2 + $0xb0] sm:$0xff]
      %v2460 = vld [vmem:[#allocation2 + $0xb8] sm:$0xff]
      %v2461 = vld [vmem:[#allocation2 + $0xc0] sm:$0xff]
      %v2462 = vld [vmem:[#allocation2 + $0xc8] sm:$0xff]
      %v2463 = vld [vmem:[#allocation2 + $0xd0] sm:$0xff]
      %v2464 = vld [vmem:[#allocation2 + $0xd8] sm:$0xff]
      %v2465 = vld [vmem:[#allocation2 + $0xe0] sm:$0xff]
      %v2466 = vld [vmem:[#allocation2 + $0xe8] sm:$0xff]
      %v2467 = vld [vmem:[#allocation2 + $0xf0] sm:$0xff]
      %v2468 = vld [vmem:[#allocation2 + $0xf8] sm:$0xff]
      %v2469 = vld [vmem:[#allocation2 + $0x100] sm:$0xff]
      %v2470 = vld [vmem:[#allocation2 + $0x108] sm:$0xff]
      %v2471 = vld [vmem:[#allocation2 + $0x110] sm:$0xff]
      %v2472 = vld [vmem:[#allocation2 + $0x118] sm:$0xff]
      %v2473 = vld [vmem:[#allocation2 + $0x120] sm:$0xff]
      %v2474 = vld [vmem:[#allocation2 + $0x128] sm:$0xff]
      %v2475 = vld [vmem:[#allocation2 + $0x130] sm:$0xff]
      %v2476 = vld [vmem:[#allocation2 + $0x138] sm:$0xff]
      %v2477 = vld [vmem:[#allocation2 + $0x140] sm:$0xff]
      %v2478 = vld [vmem:[#allocation2 + $0x148] sm:$0xff]
      %v2479 = vld [vmem:[#allocation2 + $0x150] sm:$0xff]
      %v2480 = vld [vmem:[#allocation2 + $0x158] sm:$0xff]
      %v2481 = vld [vmem:[#allocation2 + $0x160] sm:$0xff]
      %v2482 = vld [vmem:[#allocation2 + $0x168] sm:$0xff]
      %v2483 = vld [vmem:[#allocation2 + $0x170] sm:$0xff]
      %v2484 = vld [vmem:[#allocation2 + $0x178] sm:$0xff]
      %v2485 = vld [vmem:[#allocation2 + $0x180] sm:$0xff]
      %v2486 = vld [vmem:[#allocation2 + $0x188] sm:$0xff]
      %v2487 = vld [vmem:[#allocation2 + $0x190] sm:$0xff]
      %v2488 = vld [vmem:[#allocation2 + $0x198] sm:$0xff]
      %v2489 = vld [vmem:[#allocation2 + $0x1a0] sm:$0xff]
      %v2490 = vld [vmem:[#allocation2 + $0x1a8] sm:$0xff]
      %v2491 = vld [vmem:[#allocation2 + $0x1b0] sm:$0xff]
      %v2492 = vld [vmem:[#allocation2 + $0x1b8] sm:$0xff]
      %v2493 = vld [vmem:[#allocation2 + $0x1c0] sm:$0xff]
      %v2494 = vld [vmem:[#allocation2 + $0x1c8] sm:$0xff]
      %v2495 = vld [vmem:[#allocation2 + $0x1d0] sm:$0xff]
      %v2496 = vld [vmem:[#allocation2 + $0x1d8] sm:$0xff]
      %v2497 = vld [vmem:[#allocation2 + $0x1e0] sm:$0xff]
      %v2498 = vld [vmem:[#allocation2 + $0x1e8] sm:$0xff]
      %v2499 = vld [vmem:[#allocation2 + $0x1f0] sm:$0xff]
      %v2500 = vld [vmem:[#allocation2 + $0x1f8] sm:$0xff]
      %v2501 = vld [vmem:[%s6] sm:$0x1]
      %v2503 = vlaneseq
      %v2504 = vshrl.u32 %v2503, 7
      %v2505 = vsub.s32 0, %v2504
      %v2506 = vrot.slane %v2501, %v2505
      %v2508 = vadd.f32 %v2437, %v2506
      %v2509 = vadd.f32 %v2438, %v2506
      %v2510 = vadd.f32 %v2439, %v2506
      %v2511 = vadd.f32 %v2440, %v2506
      %v2512 = vadd.f32 %v2441, %v2506
      %v2513 = vadd.f32 %v2442, %v2506
      %v2514 = vadd.f32 %v2443, %v2506
      %v2515 = vadd.f32 %v2444, %v2506
      %v2516 = vadd.f32 %v2445, %v2506
      %v2517 = vadd.f32 %v2446, %v2506
      %v2518 = vadd.f32 %v2447, %v2506
      %v2519 = vadd.f32 %v2448, %v2506
      %v2520 = vadd.f32 %v2449, %v2506
      %v2521 = vadd.f32 %v2450, %v2506
      %v2522 = vadd.f32 %v2451, %v2506
      %v2523 = vadd.f32 %v2452, %v2506
      %v2524 = vadd.f32 %v2453, %v2506
      %v2525 = vadd.f32 %v2454, %v2506
      %v2526 = vadd.f32 %v2455, %v2506
      %v2527 = vadd.f32 %v2456, %v2506
      %v2528 = vadd.f32 %v2457, %v2506
      %v2529 = vadd.f32 %v2458, %v2506
      %v2530 = vadd.f32 %v2459, %v2506
      %v2531 = vadd.f32 %v2460, %v2506
      %v2532 = vadd.f32 %v2461, %v2506
      %v2533 = vadd.f32 %v2462, %v2506
      %v2534 = vadd.f32 %v2463, %v2506
      %v2535 = vadd.f32 %v2464, %v2506
      %v2536 = vadd.f32 %v2465, %v2506
      %v2537 = vadd.f32 %v2466, %v2506
      %v2538 = vadd.f32 %v2467, %v2506
      %v2539 = vadd.f32 %v2468, %v2506
      %v2540 = vadd.f32 %v2469, %v2506
      %v2541 = vadd.f32 %v2470, %v2506
      %v2542 = vadd.f32 %v2471, %v2506
      %v2543 = vadd.f32 %v2472, %v2506
      %v2544 = vadd.f32 %v2473, %v2506
      %v2545 = vadd.f32 %v2474, %v2506
      %v2546 = vadd.f32 %v2475, %v2506
      %v2547 = vadd.f32 %v2476, %v2506
      %v2548 = vadd.f32 %v2477, %v2506
      %v2549 = vadd.f32 %v2478, %v2506
      %v2550 = vadd.f32 %v2479, %v2506
      %v2551 = vadd.f32 %v2480, %v2506
      %v2552 = vadd.f32 %v2481, %v2506
      %v2553 = vadd.f32 %v2482, %v2506
      %v2554 = vadd.f32 %v2483, %v2506
      %v2555 = vadd.f32 %v2484, %v2506
      %v2556 = vadd.f32 %v2485, %v2506
      %v2557 = vadd.f32 %v2486, %v2506
      %v2558 = vadd.f32 %v2487, %v2506
      %v2559 = vadd.f32 %v2488, %v2506
      %v2560 = vadd.f32 %v2489, %v2506
      %v2561 = vadd.f32 %v2490, %v2506
      %v2562 = vadd.f32 %v2491, %v2506
      %v2563 = vadd.f32 %v2492, %v2506
      %v2564 = vadd.f32 %v2493, %v2506
      %v2565 = vadd.f32 %v2494, %v2506
      %v2566 = vadd.f32 %v2495, %v2506
      %v2567 = vadd.f32 %v2496, %v2506
      %v2568 = vadd.f32 %v2497, %v2506
      %v2569 = vadd.f32 %v2498, %v2506
      %v2570 = vadd.f32 %v2499, %v2506
      %v2571 = vadd.f32 %v2500, %v2506
      %2572 = vst [vmem:[#allocation3] sm:$0xff] %v2508
      %2573 = vst [vmem:[#allocation3 + $0x8] sm:$0xff] %v2509
      %2574 = vst [vmem:[#allocation3 + $0x10] sm:$0xff] %v2510
      %2575 = vst [vmem:[#allocation3 + $0x18] sm:$0xff] %v2511
      %2576 = vst [vmem:[#allocation3 + $0x20] sm:$0xff] %v2512
      %2577 = vst [vmem:[#allocation3 + $0x28] sm:$0xff] %v2513
      %2578 = vst [vmem:[#allocation3 + $0x30] sm:$0xff] %v2514
      %2579 = vst [vmem:[#allocation3 + $0x38] sm:$0xff] %v2515
      %2580 = vst [vmem:[#allocation3 + $0x40] sm:$0xff] %v2516
      %2581 = vst [vmem:[#allocation3 + $0x48] sm:$0xff] %v2517
      %2582 = vst [vmem:[#allocation3 + $0x50] sm:$0xff] %v2518
      %2583 = vst [vmem:[#allocation3 + $0x58] sm:$0xff] %v2519
      %2584 = vst [vmem:[#allocation3 + $0x60] sm:$0xff] %v2520
      %2585 = vst [vmem:[#allocation3 + $0x68] sm:$0xff] %v2521
      %2586 = vst [vmem:[#allocation3 + $0x70] sm:$0xff] %v2522
      %2587 = vst [vmem:[#allocation3 + $0x78] sm:$0xff] %v2523
      %2588 = vst [vmem:[#allocation3 + $0x80] sm:$0xff] %v2524
      %2589 = vst [vmem:[#allocation3 + $0x88] sm:$0xff] %v2525
      %2590 = vst [vmem:[#allocation3 + $0x90] sm:$0xff] %v2526
      %2591 = vst [vmem:[#allocation3 + $0x98] sm:$0xff] %v2527
      %2592 = vst [vmem:[#allocation3 + $0xa0] sm:$0xff] %v2528
      %2593 = vst [vmem:[#allocation3 + $0xa8] sm:$0xff] %v2529
      %2594 = vst [vmem:[#allocation3 + $0xb0] sm:$0xff] %v2530
      %2595 = vst [vmem:[#allocation3 + $0xb8] sm:$0xff] %v2531
      %2596 = vst [vmem:[#allocation3 + $0xc0] sm:$0xff] %v2532
      %2597 = vst [vmem:[#allocation3 + $0xc8] sm:$0xff] %v2533
      %2598 = vst [vmem:[#allocation3 + $0xd0] sm:$0xff] %v2534
      %2599 = vst [vmem:[#allocation3 + $0xd8] sm:$0xff] %v2535
      %2600 = vst [vmem:[#allocation3 + $0xe0] sm:$0xff] %v2536
      %2601 = vst [vmem:[#allocation3 + $0xe8] sm:$0xff] %v2537
      %2602 = vst [vmem:[#allocation3 + $0xf0] sm:$0xff] %v2538
      %2603 = vst [vmem:[#allocation3 + $0xf8] sm:$0xff] %v2539
      %2604 = vst [vmem:[#allocation3 + $0x100] sm:$0xff] %v2540
      %2605 = vst [vmem:[#allocation3 + $0x108] sm:$0xff] %v2541
      %2606 = vst [vmem:[#allocation3 + $0x110] sm:$0xff] %v2542
      %2607 = vst [vmem:[#allocation3 + $0x118] sm:$0xff] %v2543
      %2608 = vst [vmem:[#allocation3 + $0x120] sm:$0xff] %v2544
      %2609 = vst [vmem:[#allocation3 + $0x128] sm:$0xff] %v2545
      %2610 = vst [vmem:[#allocation3 + $0x130] sm:$0xff] %v2546
      %2611 = vst [vmem:[#allocation3 + $0x138] sm:$0xff] %v2547
      %2612 = vst [vmem:[#allocation3 + $0x140] sm:$0xff] %v2548
      %2613 = vst [vmem:[#allocation3 + $0x148] sm:$0xff] %v2549
      %2614 = vst [vmem:[#allocation3 + $0x150] sm:$0xff] %v2550
      %2615 = vst [vmem:[#allocation3 + $0x158] sm:$0xff] %v2551
      %2616 = vst [vmem:[#allocation3 + $0x160] sm:$0xff] %v2552
      %2617 = vst [vmem:[#allocation3 + $0x168] sm:$0xff] %v2553
      %2618 = vst [vmem:[#allocation3 + $0x170] sm:$0xff] %v2554
      %2619 = vst [vmem:[#allocation3 + $0x178] sm:$0xff] %v2555
      %2620 = vst [vmem:[#allocation3 + $0x180] sm:$0xff] %v2556
      %2621 = vst [vmem:[#allocation3 + $0x188] sm:$0xff] %v2557
      %2622 = vst [vmem:[#allocation3 + $0x190] sm:$0xff] %v2558
      %2623 = vst [vmem:[#allocation3 + $0x198] sm:$0xff] %v2559
      %2624 = vst [vmem:[#allocation3 + $0x1a0] sm:$0xff] %v2560
      %2625 = vst [vmem:[#allocation3 + $0x1a8] sm:$0xff] %v2561
      %2626 = vst [vmem:[#allocation3 + $0x1b0] sm:$0xff] %v2562
      %2627 = vst [vmem:[#allocation3 + $0x1b8] sm:$0xff] %v2563
      %2628 = vst [vmem:[#allocation3 + $0x1c0] sm:$0xff] %v2564
      %2629 = vst [vmem:[#allocation3 + $0x1c8] sm:$0xff] %v2565
      %2630 = vst [vmem:[#allocation3 + $0x1d0] sm:$0xff] %v2566
      %2631 = vst [vmem:[#allocation3 + $0x1d8] sm:$0xff] %v2567
      %2632 = vst [vmem:[#allocation3 + $0x1e0] sm:$0xff] %v2568
      %2633 = vst [vmem:[#allocation3 + $0x1e8] sm:$0xff] %v2569
      %2634 = vst [vmem:[#allocation3 + $0x1f0] sm:$0xff] %v2570
      %2635 = vst [vmem:[#allocation3 + $0x1f8] sm:$0xff] %v2571
    $region37: #{tpu_custom_call.1} parent=1 // pred_fallthru
      _
    // Predicated region
    $region38: #{tpu_custom_call.1} parent=1 // pred_check
      _
    $region39: #{tpu_custom_call.1} parent=1 // pred_check_branch
      %2637 = sbr.rel (0) target = $region41
    $region40: #{tpu_custom_call.1} parent=1 // pred_region
      %s2639 = ssub.s32 8192, 8064
      %2640 = vsyncadd [#allocation4], %s2639
      %s2641 = sshll.u32 [#allocation3], 4
      %s2642 = int_to_ptr.vmem [resolvable:$true] %s2641
      %2647 = dma.vmem_to_hbm [thread:$0]  %s2642, 8064, %s7, [#allocation4], 128, 128, 8
    $region41: #{tpu_custom_call.1} parent=1 // pred_fallthru
      _
    // Predicated region
    $region42: #{tpu_custom_call.1} parent=1 // pred_check
      _
    $region43: #{tpu_custom_call.1} parent=1 // pred_check_branch
      %2649 = sbr.rel (0) target = $region45
    $region44: #{tpu_custom_call.1} parent=1 // pred_region
      %2650 = dma.done [#allocation4], 8192
    $region45: #{tpu_custom_call.1} parent=1 // pred_fallthru
      _
    %2651 = vsyncpa [#allocation4], 1

</llo_original>
